<compile_context>
chip_gen: v6e
topology: v6e:2x2x1
jax: 0.10.0
libtpu: 0.0.40
codegen_flags: <defaults>
</compile_context>

<pallas_src>
import functools

import jax
import jax.numpy as jnp
from jax.experimental import pallas as pl
from jax.experimental.pallas import tpu as pltpu

LN_EPS = 1e-5          # PyTorch nn.LayerNorm default eps
NEG_BIG = -1e30        # finite "masked" score (avoids NaN on fully-masked rows)
MXU_DTYPE = jnp.float32  # set to jnp.bfloat16 on v6e/v7x for larger shapes


# ----------------------------------------------------------------------------- kernel

def _encoder_layer_kernel(
    # activations / masks
    enc_ref, tgt_ref, npm1_ref, npm2_ref, slf_mask_ref, cross_mask_ref,
    # self-attention params (fused QKV)
    s_wqkv_ref, s_bqkv_ref, s_wo_ref, s_bo_ref, s_lng_ref, s_lnb_ref,
    # cross-attention params (separate Q, fused KV)
    c_wq_ref, c_bq_ref, c_wkv_ref, c_bkv_ref, c_wo_ref, c_bo_ref, c_lng_ref, c_lnb_ref,
    # position-wise FFN params
    f_w1_ref, f_b1_ref, f_w2_ref, f_b2_ref, f_lng_ref, f_lnb_ref,
    # outputs
    out_ref, slf_attn_ref, tgt_attn_ref,
    *, n_head, d_k, d_v):

    B, Ls, D = enc_ref.shape
    Lt = tgt_ref.shape[1]
    H = n_head
    hk, hv = H * d_k, H * d_v
    inv_temp = 1.0 / (float(d_k) ** 0.5)

    def matmul(a, w):
        return jnp.dot(a.astype(MXU_DTYPE), w.astype(MXU_DTYPE),
                       preferred_element_type=jnp.float32)

    def layer_norm(y, g, b):
        mean = jnp.mean(y, axis=-1, keepdims=True)
        var = jnp.mean((y - mean) ** 2, axis=-1, keepdims=True)
        return (y - mean) * jax.lax.rsqrt(var + LN_EPS) * g + b

    def attention_core(q3, k3, v3, mask, attn_out_ref):
        # q3: (B, Lq, H*d_k), k3: (B, Lk, H*d_k), v3: (B, Lk, H*d_v)
        attn_parts, ctx_parts = [], []
        for h in range(H):                      # static unroll; matmuls batched over B
            q_h = q3[:, :, h * d_k:(h + 1) * d_k]
            k_h = k3[:, :, h * d_k:(h + 1) * d_k]
            v_h = v3[:, :, h * d_v:(h + 1) * d_v]
            s = jnp.einsum('bqd,bkd->bqk',
                           q_h.astype(MXU_DTYPE), k_h.astype(MXU_DTYPE),
                           preferred_element_type=jnp.float32) * inv_temp
            s = jnp.where(mask > 0.0, NEG_BIG, s)
            e = jnp.exp(s - jnp.max(s, axis=-1, keepdims=True))
            p = e * pl.reciprocal(jnp.sum(e, axis=-1, keepdims=True), approx=True)
            attn_parts.append(p)
            ctx_parts.append(jnp.einsum('bqk,bkd->bqd',
                                        p.astype(MXU_DTYPE), v_h.astype(MXU_DTYPE),
                                        preferred_element_type=jnp.float32))
        # single lane-dense store: (B, Lq, H*Lk)
        attn_out_ref[...] = jnp.concatenate(attn_parts, axis=-1)
        return jnp.concatenate(ctx_parts, axis=-1)          # (B, Lq, H*d_v)

    # ---------------- stage 1: self-attention on enc_input -------------------
    enc2 = enc_ref[...].reshape(B * Ls, D)
    qkv = matmul(enc2, s_wqkv_ref[...]) + s_bqkv_ref[...]            # (B*Ls, 2hk+hv)
    q3 = qkv[:, :hk].reshape(B, Ls, hk)
    k3 = qkv[:, hk:2 * hk].reshape(B, Ls, hk)
    v3 = qkv[:, 2 * hk:2 * hk + hv].reshape(B, Ls, hv)
    ctx = attention_core(q3, k3, v3, slf_mask_ref[...], slf_attn_ref)
    proj = matmul(ctx.reshape(B * Ls, hv), s_wo_ref[...]) + s_bo_ref[...]
    y = layer_norm(proj.reshape(B, Ls, D) + enc_ref[...], s_lng_ref[...], s_lnb_ref[...])
    enc_out1 = y * npm1_ref[...]                                     # fused mask_mul

    # ---------------- stage 2: cross-attention (queries from tgt_output) -----
    tgt2 = tgt_ref[...].reshape(B * Lt, D)
    q = matmul(tgt2, c_wq_ref[...]) + c_bq_ref[...]                  # (B*Lt, hk)
    kv = matmul(enc_out1.reshape(B * Ls, D), c_wkv_ref[...]) + c_bkv_ref[...]
    q3 = q.reshape(B, Lt, hk)
    k3 = kv[:, :hk].reshape(B, Ls, hk)
    v3 = kv[:, hk:hk + hv].reshape(B, Ls, hv)
    ctx = attention_core(q3, k3, v3, cross_mask_ref[...], tgt_attn_ref)
    proj = matmul(ctx.reshape(B * Lt, hv), c_wo_ref[...]) + c_bo_ref[...]
    y = layer_norm(proj.reshape(B, Lt, D) + tgt_ref[...], c_lng_ref[...], c_lnb_ref[...])
    enc_out2 = y * npm2_ref[...]                                     # fused mask_mul

    # ---------------- stage 3: position-wise FFN (1x1 conv == matmul over D) -
    x2 = enc_out2.reshape(B * Lt, D)
    h1 = jnp.maximum(matmul(x2, f_w1_ref[...]) + f_b1_ref[...], 0.0)
    y2 = matmul(h1, f_w2_ref[...]) + f_b2_ref[...]
    y = layer_norm((y2 + x2).reshape(B, Lt, D), f_lng_ref[...], f_lnb_ref[...])
    out_ref[...] = y * npm2_ref[...]                                 # fused mask_mul


# ----------------------------------------------------------------------------- wrapper

def encoder_layer_b(enc_input, tgt_output, non_pad_mask1, non_pad_mask2,
                    slf_attn_mask, dec_enc_attn_mask, params, *, n_head, d_k, d_v):
    B, Ls, D = enc_input.shape
    Lt = tgt_output.shape[1]
    slf, enc, ffn = params["slf"], params["enc"], params["ffn"]

    kernel = functools.partial(_encoder_layer_kernel, n_head=n_head, d_k=d_k, d_v=d_v)
    vmem = pl.BlockSpec(memory_space=pltpu.MemorySpace.VMEM)   # whole array in VMEM

    args = (enc_input, tgt_output, non_pad_mask1, non_pad_mask2,
            slf_attn_mask, dec_enc_attn_mask,
            slf["w_qkv"], slf["b_qkv"], slf["wo"], slf["bo"], slf["ln_g"], slf["ln_b"],
            enc["wq"], enc["bq"], enc["w_kv"], enc["b_kv"],
            enc["wo"], enc["bo"], enc["ln_g"], enc["ln_b"],
            ffn["w1"], ffn["b1"], ffn["w2"], ffn["b2"], ffn["ln_g"], ffn["ln_b"])

    out, slf_attn_p, tgt_attn_p = pl.pallas_call(
        kernel,
        out_shape=(jax.ShapeDtypeStruct((B, Lt, D), jnp.float32),
                   jax.ShapeDtypeStruct((B, Ls, n_head * Ls), jnp.float32),
                   jax.ShapeDtypeStruct((B, Lt, n_head * Ls), jnp.float32)),
        in_specs=[vmem] * len(args),
        out_specs=(vmem, vmem, vmem),
    )(*args)

    # head-major flattening, matching PyTorch's (n_head*B, Lq, Lk) convention
    slf_attn = slf_attn_p.reshape(B, Ls, n_head, Ls).transpose(2, 0, 1, 3)
    slf_attn = slf_attn.reshape(n_head * B, Ls, Ls)
    tgt_attn = tgt_attn_p.reshape(B, Lt, n_head, Ls).transpose(2, 0, 1, 3)
    tgt_attn = tgt_attn.reshape(n_head * B, Lt, Ls)
    return out, slf_attn, tgt_attn


# ----------------------------------------------------------------------------- params

def init_self_mha_params(key, d_model, n_head, d_k, d_v):
    hk, hv = n_head * d_k, n_head * d_v
    ks = jax.random.split(key, 4)
    s_in = 1.0 / jnp.sqrt(jnp.float32(d_model))
    return dict(
        w_qkv=jax.random.normal(ks[0], (d_model, 2 * hk + hv), jnp.float32) * s_in,
        b_qkv=jax.random.normal(ks[1], (1, 2 * hk + hv), jnp.float32) * 0.1,
        wo=jax.random.normal(ks[2], (hv, d_model), jnp.float32) / jnp.sqrt(jnp.float32(hv)),
        bo=jax.random.normal(ks[3], (1, d_model), jnp.float32) * 0.1,
        ln_g=jnp.ones((1, d_model), jnp.float32),
        ln_b=jnp.zeros((1, d_model), jnp.float32),
    )


def init_cross_mha_params(key, d_model, n_head, d_k, d_v):
    hk, hv = n_head * d_k, n_head * d_v
    ks = jax.random.split(key, 6)
    s_in = 1.0 / jnp.sqrt(jnp.float32(d_model))
    return dict(
        wq=jax.random.normal(ks[0], (d_model, hk), jnp.float32) * s_in,
        bq=jax.random.normal(ks[1], (1, hk), jnp.float32) * 0.1,
        w_kv=jax.random.normal(ks[2], (d_model, hk + hv), jnp.float32) * s_in,
        b_kv=jax.random.normal(ks[3], (1, hk + hv), jnp.float32) * 0.1,
        wo=jax.random.normal(ks[4], (hv, d_model), jnp.float32) / jnp.sqrt(jnp.float32(hv)),
        bo=jax.random.normal(ks[5], (1, d_model), jnp.float32) * 0.1,
        ln_g=jnp.ones((1, d_model), jnp.float32),
        ln_b=jnp.zeros((1, d_model), jnp.float32),
    )


def init_ffn_params(key, d_model, d_inner):
    ks = jax.random.split(key, 4)
    return dict(
        w1=jax.random.normal(ks[0], (d_model, d_inner), jnp.float32) / jnp.sqrt(jnp.float32(d_model)),
        b1=jax.random.normal(ks[1], (1, d_inner), jnp.float32) * 0.1,
        w2=jax.random.normal(ks[2], (d_inner, d_model), jnp.float32) / jnp.sqrt(jnp.float32(d_inner)),
        b2=jax.random.normal(ks[3], (1, d_model), jnp.float32) * 0.1,
        ln_g=jnp.ones((1, d_model), jnp.float32),
        ln_b=jnp.zeros((1, d_model), jnp.float32),
    )


# ----------------------------------------------------------------------------- pure-JAX reference

def _ref_layernorm(y, g, b):
    mean = jnp.mean(y, axis=-1, keepdims=True)
    var = jnp.mean((y - mean) ** 2, axis=-1, keepdims=True)
    return (y - mean) * jax.lax.rsqrt(var + LN_EPS) * g + b


def _ref_attention(q_in, kv_in, wq, bq, wk, bk, wv, bv, wo, bo, g, b, mask, H, d_k, d_v):
    B, Lq, D = q_in.shape
    Lk = kv_in.shape[1]
    q = (q_in.reshape(B * Lq, D) @ wq + bq).reshape(B, Lq, H, d_k)
    k = (kv_in.reshape(B * Lk, D) @ wk + bk).reshape(B, Lk, H, d_k)
    v = (kv_in.reshape(B * Lk, D) @ wv + bv).reshape(B, Lk, H, d_v)
    scores = jnp.einsum("bqhd,bkhd->bhqk", q, k) / jnp.sqrt(jnp.float32(d_k))
    scores = jnp.where(mask[:, None] > 0.0, NEG_BIG, scores)
    attn = jax.nn.softmax(scores, axis=-1)                            # (B, H, Lq, Lk)
    ctx = jnp.einsum("bhqk,bkhd->bqhd", attn, v).reshape(B * Lq, H * d_v)
    out = _ref_layernorm((ctx @ wo + bo).reshape(B, Lq, D) + q_in, g, b)
    attn_hm = jnp.transpose(attn, (1, 0, 2, 3)).reshape(H * B, Lq, Lk)
    return out, attn_hm


def _ref_ffn(x, p):
    B, L, D = x.shape
    h = jnp.maximum(x.reshape(B * L, D) @ p["w1"] + p["b1"], 0.0)
    y = (h @ p["w2"] + p["b2"]).reshape(B, L, D)
    return _ref_layernorm(y + x, p["ln_g"], p["ln_b"])


def _ref_encoder_layer_b(enc_input, tgt_output, m1, m2, slf_mask, cross_mask,
                         params, n_head, d_k, d_v):
    hk, hv = n_head * d_k, n_head * d_v
    slf, enc, ffn = params["slf"], params["enc"], params["ffn"]

    s_wq, s_wk, s_wv = (slf["w_qkv"][:, :hk], slf["w_qkv"][:, hk:2 * hk],
                        slf["w_qkv"][:, 2 * hk:2 * hk + hv])
    s_bq, s_bk, s_bv = (slf["b_qkv"][:, :hk], slf["b_qkv"][:, hk:2 * hk],
                        slf["b_qkv"][:, 2 * hk:2 * hk + hv])
    o, a1 = _ref_attention(enc_input, enc_input, s_wq, s_bq, s_wk, s_bk, s_wv, s_bv,
                           slf["wo"], slf["bo"], slf["ln_g"], slf["ln_b"],
                           slf_mask, n_head, d_k, d_v)
    o = o * m1

    c_wk, c_wv = enc["w_kv"][:, :hk], enc["w_kv"][:, hk:hk + hv]
    c_bk, c_bv = enc["b_kv"][:, :hk], enc["b_kv"][:, hk:hk + hv]
    o, a2 = _ref_attention(tgt_output, o, enc["wq"], enc["bq"], c_wk, c_bk, c_wv, c_bv,
                           enc["wo"], enc["bo"], enc["ln_g"], enc["ln_b"],
                           cross_mask, n_head, d_k, d_v)
    o = o * m2

    o = _ref_ffn(o, ffn)
    o = o * m2
    return o, a1, a2


# ----------------------------------------------------------------------------- main

if __name__ == "__main__":
    B, L_src, L_tgt = 2, 8, 8
    d_model, d_inner, n_head, d_k, d_v = 32, 64, 4, 8, 8

    key = jax.random.PRNGKey(0)
    k_in1, k_in2, k_p1, k_p2, k_p3 = jax.random.split(key, 5)

    enc_input = jax.random.normal(k_in1, (B, L_src, d_model), jnp.float32)
    tgt_output = jax.random.normal(k_in2, (B, L_tgt, d_model), jnp.float32)

    # non-pad masks (1 = keep, 0 = pad); attention masks (>0 = mask out key)
    non_pad_mask1 = jnp.ones((B, L_src, 1), jnp.float32).at[:, -2:, :].set(0.0)
    non_pad_mask2 = jnp.ones((B, L_tgt, 1), jnp.float32).at[:, -1:, :].set(0.0)
    slf_attn_mask = jnp.zeros((B, L_src, L_src), jnp.float32).at[:, :, -2:].set(1.0)
    dec_enc_attn_mask = jnp.zeros((B, L_tgt, L_src), jnp.float32).at[:, :, -2:].set(1.0)

    params = dict(
        slf=init_self_mha_params(k_p1, d_model, n_head, d_k, d_v),
        enc=init_cross_mha_params(k_p2, d_model, n_head, d_k, d_v),
        ffn=init_ffn_params(k_p3, d_model, d_inner),
    )

    out, attn_slf, attn_tgt = encoder_layer_b(
        enc_input, tgt_output, non_pad_mask1, non_pad_mask2,
        slf_attn_mask, dec_enc_attn_mask, params,
        n_head=n_head, d_k=d_k, d_v=d_v)
    jax.block_until_ready((out, attn_slf, attn_tgt))

    ref_out, ref_a1, ref_a2 = _ref_encoder_layer_b(
        enc_input, tgt_output, non_pad_mask1, non_pad_mask2,
        slf_attn_mask, dec_enc_attn_mask, params, n_head, d_k, d_v)

    assert out.shape == (B, L_tgt, d_model)
    assert attn_slf.shape == (n_head * B, L_src, L_src)
    assert attn_tgt.shape == (n_head * B, L_tgt, L_src)
    assert jnp.allclose(out, ref_out, rtol=2e-2, atol=2e-2)
    assert jnp.allclose(attn_slf, ref_a1, rtol=2e-2, atol=2e-2)
    assert jnp.allclose(attn_tgt, ref_a2, rtol=2e-2, atol=2e-2)

    print("KERNEL_OK")
</pallas_src>

<mosaic_0001>
module attributes {stable_mosaic.version = 11 : i64} {
  func.func @_encoder_layer_kernel(%arg0: memref<2x8x32xf32, #tpu.memory_space<vmem>>, %arg1: memref<2x8x32xf32, #tpu.memory_space<vmem>>, %arg2: memref<2x8x1xf32, #tpu.memory_space<vmem>>, %arg3: memref<2x8x1xf32, #tpu.memory_space<vmem>>, %arg4: memref<2x8x8xf32, #tpu.memory_space<vmem>>, %arg5: memref<2x8x8xf32, #tpu.memory_space<vmem>>, %arg6: memref<32x96xf32, #tpu.memory_space<vmem>>, %arg7: memref<1x96xf32, #tpu.memory_space<vmem>>, %arg8: memref<32x32xf32, #tpu.memory_space<vmem>>, %arg9: memref<1x32xf32, #tpu.memory_space<vmem>>, %arg10: memref<1x32xf32, #tpu.memory_space<vmem>>, %arg11: memref<1x32xf32, #tpu.memory_space<vmem>>, %arg12: memref<32x32xf32, #tpu.memory_space<vmem>>, %arg13: memref<1x32xf32, #tpu.memory_space<vmem>>, %arg14: memref<32x64xf32, #tpu.memory_space<vmem>>, %arg15: memref<1x64xf32, #tpu.memory_space<vmem>>, %arg16: memref<32x32xf32, #tpu.memory_space<vmem>>, %arg17: memref<1x32xf32, #tpu.memory_space<vmem>>, %arg18: memref<1x32xf32, #tpu.memory_space<vmem>>, %arg19: memref<1x32xf32, #tpu.memory_space<vmem>>, %arg20: memref<32x64xf32, #tpu.memory_space<vmem>>, %arg21: memref<1x64xf32, #tpu.memory_space<vmem>>, %arg22: memref<64x32xf32, #tpu.memory_space<vmem>>, %arg23: memref<1x32xf32, #tpu.memory_space<vmem>>, %arg24: memref<1x32xf32, #tpu.memory_space<vmem>>, %arg25: memref<1x32xf32, #tpu.memory_space<vmem>>, %arg26: memref<2x8x32xf32, #tpu.memory_space<vmem>>, %arg27: memref<2x8x32xf32, #tpu.memory_space<vmem>>, %arg28: memref<2x8x32xf32, #tpu.memory_space<vmem>>) attributes {dimension_semantics = [], scalar_prefetch = 0 : i64, scratch_operands = 0 : i64, tpu.core_type = #tpu.core_type<tc>} {
    %c0 = arith.constant 0 : index
    %c0_0 = arith.constant 0 : index
    %c0_1 = arith.constant 0 : index
    %0 = vector.load %arg0[%c0, %c0_0, %c0_1] : memref<2x8x32xf32, #tpu.memory_space<vmem>>, vector<2x8x32xf32>
    %1 = vector.shape_cast %0 : vector<2x8x32xf32> to vector<16x32xf32>
    %c0_2 = arith.constant 0 : index
    %c0_3 = arith.constant 0 : index
    %2 = vector.load %arg6[%c0_2, %c0_3] : memref<32x96xf32, #tpu.memory_space<vmem>>, vector<32x96xf32>
    %cst = arith.constant dense<0.000000e+00> : vector<16x96xf32>
    %3 = tpu.matmul %1, %2, %cst {dimension_numbers = #tpu.dot_dimension_numbers<[1], [0], [0], [1], [0, 0, 1, 1], [], []>} : vector<16x32xf32>, vector<32x96xf32>, vector<16x96xf32> -> vector<16x96xf32>
    %c0_4 = arith.constant 0 : index
    %c0_5 = arith.constant 0 : index
    %4 = vector.load %arg7[%c0_4, %c0_5] : memref<1x96xf32, #tpu.memory_space<vmem>>, vector<1x96xf32>
    %5 = vector.broadcast %4 : vector<1x96xf32> to vector<16x96xf32>
    %6 = arith.addf %3, %5 : vector<16x96xf32>
    %7 = vector.extract_strided_slice %6 {offsets = [0, 0], sizes = [16, 32], strides = [1, 1]} : vector<16x96xf32> to vector<16x32xf32>
    %8 = vector.shape_cast %7 : vector<16x32xf32> to vector<2x8x32xf32>
    %9 = vector.extract_strided_slice %6 {offsets = [0, 32], sizes = [16, 32], strides = [1, 1]} : vector<16x96xf32> to vector<16x32xf32>
    %10 = vector.shape_cast %9 : vector<16x32xf32> to vector<2x8x32xf32>
    %11 = vector.extract_strided_slice %6 {offsets = [0, 64], sizes = [16, 32], strides = [1, 1]} : vector<16x96xf32> to vector<16x32xf32>
    %12 = vector.shape_cast %11 : vector<16x32xf32> to vector<2x8x32xf32>
    %c0_6 = arith.constant 0 : index
    %c0_7 = arith.constant 0 : index
    %c0_8 = arith.constant 0 : index
    %13 = vector.load %arg4[%c0_6, %c0_7, %c0_8] : memref<2x8x8xf32, #tpu.memory_space<vmem>>, vector<2x8x8xf32>
    %14 = vector.extract_strided_slice %8 {offsets = [0, 0, 0], sizes = [2, 8, 8], strides = [1, 1, 1]} : vector<2x8x32xf32> to vector<2x8x8xf32>
    %15 = vector.extract_strided_slice %10 {offsets = [0, 0, 0], sizes = [2, 8, 8], strides = [1, 1, 1]} : vector<2x8x32xf32> to vector<2x8x8xf32>
    %16 = vector.extract_strided_slice %12 {offsets = [0, 0, 0], sizes = [2, 8, 8], strides = [1, 1, 1]} : vector<2x8x32xf32> to vector<2x8x8xf32>
    "tpu.trace_start"() <{level = 10 : i32, message = "bqd,bkd->bqk"}> : () -> ()
    %cst_9 = arith.constant dense<0.000000e+00> : vector<2x8x8xf32>
    %17 = tpu.matmul %14, %15, %cst_9 {dimension_numbers = #tpu.dot_dimension_numbers<[2], [2], [1], [1], [0, 0, 0, 1, 1, 1], [0], [0]>} : vector<2x8x8xf32>, vector<2x8x8xf32>, vector<2x8x8xf32> -> vector<2x8x8xf32>
    "tpu.trace_stop"() : () -> ()
    %cst_10 = arith.constant 0.353553385 : f32
    %18 = vector.broadcast %cst_10 : f32 to vector<2x8x8xf32>
    %19 = arith.mulf %17, %18 : vector<2x8x8xf32>
    %cst_11 = arith.constant 0.000000e+00 : f32
    %20 = vector.broadcast %cst_11 : f32 to vector<2x8x8xf32>
    %21 = arith.cmpf ogt, %13, %20 : vector<2x8x8xf32>
    %cst_12 = arith.constant -1.000000e+30 : f32
    %22 = vector.broadcast %cst_12 : f32 to vector<2x8x8xf32>
    %23 = arith.select %21, %22, %19 : vector<2x8x8xi1>, vector<2x8x8xf32>
    %cst_13 = arith.constant dense<0xFF800000> : vector<2x8xf32>
    %24 = vector.multi_reduction <maximumf>, %23, %cst_13 [2] : vector<2x8x8xf32> to vector<2x8xf32>
    %25 = vector.shape_cast %24 : vector<2x8xf32> to vector<2x8x1xf32>
    %26 = vector.broadcast %25 : vector<2x8x1xf32> to vector<2x8x8xf32>
    %27 = arith.subf %23, %26 : vector<2x8x8xf32>
    %28 = math.exp %27 : vector<2x8x8xf32>
    %cst_14 = arith.constant dense<0.000000e+00> : vector<2x8xf32>
    %29 = vector.multi_reduction <add>, %28, %cst_14 [2] : vector<2x8x8xf32> to vector<2x8xf32>
    %30 = vector.shape_cast %29 : vector<2x8xf32> to vector<2x8x1xf32>
    %31 = tpu.reciprocal %30 {approx = true} : vector<2x8x1xf32> -> vector<2x8x1xf32>
    %32 = vector.broadcast %31 : vector<2x8x1xf32> to vector<2x8x8xf32>
    %33 = arith.mulf %28, %32 : vector<2x8x8xf32>
    "tpu.trace_start"() <{level = 10 : i32, message = "bqk,bkd->bqd"}> : () -> ()
    %cst_15 = arith.constant dense<0.000000e+00> : vector<2x8x8xf32>
    %34 = tpu.matmul %33, %16, %cst_15 {dimension_numbers = #tpu.dot_dimension_numbers<[2], [1], [1], [2], [0, 0, 0, 1, 1, 2], [0], [0]>} : vector<2x8x8xf32>, vector<2x8x8xf32>, vector<2x8x8xf32> -> vector<2x8x8xf32>
    "tpu.trace_stop"() : () -> ()
    %35 = vector.extract_strided_slice %8 {offsets = [0, 0, 8], sizes = [2, 8, 8], strides = [1, 1, 1]} : vector<2x8x32xf32> to vector<2x8x8xf32>
    %36 = vector.extract_strided_slice %10 {offsets = [0, 0, 8], sizes = [2, 8, 8], strides = [1, 1, 1]} : vector<2x8x32xf32> to vector<2x8x8xf32>
    %37 = vector.extract_strided_slice %12 {offsets = [0, 0, 8], sizes = [2, 8, 8], strides = [1, 1, 1]} : vector<2x8x32xf32> to vector<2x8x8xf32>
    "tpu.trace_start"() <{level = 10 : i32, message = "bqd,bkd->bqk"}> : () -> ()
    %cst_16 = arith.constant dense<0.000000e+00> : vector<2x8x8xf32>
    %38 = tpu.matmul %35, %36, %cst_16 {dimension_numbers = #tpu.dot_dimension_numbers<[2], [2], [1], [1], [0, 0, 0, 1, 1, 1], [0], [0]>} : vector<2x8x8xf32>, vector<2x8x8xf32>, vector<2x8x8xf32> -> vector<2x8x8xf32>
    "tpu.trace_stop"() : () -> ()
    %cst_17 = arith.constant 0.353553385 : f32
    %39 = vector.broadcast %cst_17 : f32 to vector<2x8x8xf32>
    %40 = arith.mulf %38, %39 : vector<2x8x8xf32>
    %cst_18 = arith.constant 0.000000e+00 : f32
    %41 = vector.broadcast %cst_18 : f32 to vector<2x8x8xf32>
    %42 = arith.cmpf ogt, %13, %41 : vector<2x8x8xf32>
    %cst_19 = arith.constant -1.000000e+30 : f32
    %43 = vector.broadcast %cst_19 : f32 to vector<2x8x8xf32>
    %44 = arith.select %42, %43, %40 : vector<2x8x8xi1>, vector<2x8x8xf32>
    %cst_20 = arith.constant dense<0xFF800000> : vector<2x8xf32>
    %45 = vector.multi_reduction <maximumf>, %44, %cst_20 [2] : vector<2x8x8xf32> to vector<2x8xf32>
    %46 = vector.shape_cast %45 : vector<2x8xf32> to vector<2x8x1xf32>
    %47 = vector.broadcast %46 : vector<2x8x1xf32> to vector<2x8x8xf32>
    %48 = arith.subf %44, %47 : vector<2x8x8xf32>
    %49 = math.exp %48 : vector<2x8x8xf32>
    %cst_21 = arith.constant dense<0.000000e+00> : vector<2x8xf32>
    %50 = vector.multi_reduction <add>, %49, %cst_21 [2] : vector<2x8x8xf32> to vector<2x8xf32>
    %51 = vector.shape_cast %50 : vector<2x8xf32> to vector<2x8x1xf32>
    %52 = tpu.reciprocal %51 {approx = true} : vector<2x8x1xf32> -> vector<2x8x1xf32>
    %53 = vector.broadcast %52 : vector<2x8x1xf32> to vector<2x8x8xf32>
    %54 = arith.mulf %49, %53 : vector<2x8x8xf32>
    "tpu.trace_start"() <{level = 10 : i32, message = "bqk,bkd->bqd"}> : () -> ()
    %cst_22 = arith.constant dense<0.000000e+00> : vector<2x8x8xf32>
    %55 = tpu.matmul %54, %37, %cst_22 {dimension_numbers = #tpu.dot_dimension_numbers<[2], [1], [1], [2], [0, 0, 0, 1, 1, 2], [0], [0]>} : vector<2x8x8xf32>, vector<2x8x8xf32>, vector<2x8x8xf32> -> vector<2x8x8xf32>
    "tpu.trace_stop"() : () -> ()
    %56 = vector.extract_strided_slice %8 {offsets = [0, 0, 16], sizes = [2, 8, 8], strides = [1, 1, 1]} : vector<2x8x32xf32> to vector<2x8x8xf32>
    %57 = vector.extract_strided_slice %10 {offsets = [0, 0, 16], sizes = [2, 8, 8], strides = [1, 1, 1]} : vector<2x8x32xf32> to vector<2x8x8xf32>
    %58 = vector.extract_strided_slice %12 {offsets = [0, 0, 16], sizes = [2, 8, 8], strides = [1, 1, 1]} : vector<2x8x32xf32> to vector<2x8x8xf32>
    "tpu.trace_start"() <{level = 10 : i32, message = "bqd,bkd->bqk"}> : () -> ()
    %cst_23 = arith.constant dense<0.000000e+00> : vector<2x8x8xf32>
    %59 = tpu.matmul %56, %57, %cst_23 {dimension_numbers = #tpu.dot_dimension_numbers<[2], [2], [1], [1], [0, 0, 0, 1, 1, 1], [0], [0]>} : vector<2x8x8xf32>, vector<2x8x8xf32>, vector<2x8x8xf32> -> vector<2x8x8xf32>
    "tpu.trace_stop"() : () -> ()
    %cst_24 = arith.constant 0.353553385 : f32
    %60 = vector.broadcast %cst_24 : f32 to vector<2x8x8xf32>
    %61 = arith.mulf %59, %60 : vector<2x8x8xf32>
    %cst_25 = arith.constant 0.000000e+00 : f32
    %62 = vector.broadcast %cst_25 : f32 to vector<2x8x8xf32>
    %63 = arith.cmpf ogt, %13, %62 : vector<2x8x8xf32>
    %cst_26 = arith.constant -1.000000e+30 : f32
    %64 = vector.broadcast %cst_26 : f32 to vector<2x8x8xf32>
    %65 = arith.select %63, %64, %61 : vector<2x8x8xi1>, vector<2x8x8xf32>
    %cst_27 = arith.constant dense<0xFF800000> : vector<2x8xf32>
    %66 = vector.multi_reduction <maximumf>, %65, %cst_27 [2] : vector<2x8x8xf32> to vector<2x8xf32>
    %67 = vector.shape_cast %66 : vector<2x8xf32> to vector<2x8x1xf32>
    %68 = vector.broadcast %67 : vector<2x8x1xf32> to vector<2x8x8xf32>
    %69 = arith.subf %65, %68 : vector<2x8x8xf32>
    %70 = math.exp %69 : vector<2x8x8xf32>
    %cst_28 = arith.constant dense<0.000000e+00> : vector<2x8xf32>
    %71 = vector.multi_reduction <add>, %70, %cst_28 [2] : vector<2x8x8xf32> to vector<2x8xf32>
    %72 = vector.shape_cast %71 : vector<2x8xf32> to vector<2x8x1xf32>
    %73 = tpu.reciprocal %72 {approx = true} : vector<2x8x1xf32> -> vector<2x8x1xf32>
    %74 = vector.broadcast %73 : vector<2x8x1xf32> to vector<2x8x8xf32>
    %75 = arith.mulf %70, %74 : vector<2x8x8xf32>
    "tpu.trace_start"() <{level = 10 : i32, message = "bqk,bkd->bqd"}> : () -> ()
    %cst_29 = arith.constant dense<0.000000e+00> : vector<2x8x8xf32>
    %76 = tpu.matmul %75, %58, %cst_29 {dimension_numbers = #tpu.dot_dimension_numbers<[2], [1], [1], [2], [0, 0, 0, 1, 1, 2], [0], [0]>} : vector<2x8x8xf32>, vector<2x8x8xf32>, vector<2x8x8xf32> -> vector<2x8x8xf32>
    "tpu.trace_stop"() : () -> ()
    %77 = vector.extract_strided_slice %8 {offsets = [0, 0, 24], sizes = [2, 8, 8], strides = [1, 1, 1]} : vector<2x8x32xf32> to vector<2x8x8xf32>
    %78 = vector.extract_strided_slice %10 {offsets = [0, 0, 24], sizes = [2, 8, 8], strides = [1, 1, 1]} : vector<2x8x32xf32> to vector<2x8x8xf32>
    %79 = vector.extract_strided_slice %12 {offsets = [0, 0, 24], sizes = [2, 8, 8], strides = [1, 1, 1]} : vector<2x8x32xf32> to vector<2x8x8xf32>
    "tpu.trace_start"() <{level = 10 : i32, message = "bqd,bkd->bqk"}> : () -> ()
    %cst_30 = arith.constant dense<0.000000e+00> : vector<2x8x8xf32>
    %80 = tpu.matmul %77, %78, %cst_30 {dimension_numbers = #tpu.dot_dimension_numbers<[2], [2], [1], [1], [0, 0, 0, 1, 1, 1], [0], [0]>} : vector<2x8x8xf32>, vector<2x8x8xf32>, vector<2x8x8xf32> -> vector<2x8x8xf32>
    "tpu.trace_stop"() : () -> ()
    %cst_31 = arith.constant 0.353553385 : f32
    %81 = vector.broadcast %cst_31 : f32 to vector<2x8x8xf32>
    %82 = arith.mulf %80, %81 : vector<2x8x8xf32>
    %cst_32 = arith.constant 0.000000e+00 : f32
    %83 = vector.broadcast %cst_32 : f32 to vector<2x8x8xf32>
    %84 = arith.cmpf ogt, %13, %83 : vector<2x8x8xf32>
    %cst_33 = arith.constant -1.000000e+30 : f32
    %85 = vector.broadcast %cst_33 : f32 to vector<2x8x8xf32>
    %86 = arith.select %84, %85, %82 : vector<2x8x8xi1>, vector<2x8x8xf32>
    %cst_34 = arith.constant dense<0xFF800000> : vector<2x8xf32>
    %87 = vector.multi_reduction <maximumf>, %86, %cst_34 [2] : vector<2x8x8xf32> to vector<2x8xf32>
    %88 = vector.shape_cast %87 : vector<2x8xf32> to vector<2x8x1xf32>
    %89 = vector.broadcast %88 : vector<2x8x1xf32> to vector<2x8x8xf32>
    %90 = arith.subf %86, %89 : vector<2x8x8xf32>
    %91 = math.exp %90 : vector<2x8x8xf32>
    %cst_35 = arith.constant dense<0.000000e+00> : vector<2x8xf32>
    %92 = vector.multi_reduction <add>, %91, %cst_35 [2] : vector<2x8x8xf32> to vector<2x8xf32>
    %93 = vector.shape_cast %92 : vector<2x8xf32> to vector<2x8x1xf32>
    %94 = tpu.reciprocal %93 {approx = true} : vector<2x8x1xf32> -> vector<2x8x1xf32>
    %95 = vector.broadcast %94 : vector<2x8x1xf32> to vector<2x8x8xf32>
    %96 = arith.mulf %91, %95 : vector<2x8x8xf32>
    "tpu.trace_start"() <{level = 10 : i32, message = "bqk,bkd->bqd"}> : () -> ()
    %cst_36 = arith.constant dense<0.000000e+00> : vector<2x8x8xf32>
    %97 = tpu.matmul %96, %79, %cst_36 {dimension_numbers = #tpu.dot_dimension_numbers<[2], [1], [1], [2], [0, 0, 0, 1, 1, 2], [0], [0]>} : vector<2x8x8xf32>, vector<2x8x8xf32>, vector<2x8x8xf32> -> vector<2x8x8xf32>
    "tpu.trace_stop"() : () -> ()
    %98 = tpu.concatenate %33, %54, %75, %96 in 2 : vector<2x8x8xf32>, vector<2x8x8xf32>, vector<2x8x8xf32>, vector<2x8x8xf32> -> vector<2x8x32xf32>
    %c0_37 = arith.constant 0 : index
    %c0_38 = arith.constant 0 : index
    %c0_39 = arith.constant 0 : index
    %99 = vector.load %arg27[%c0_37, %c0_38, %c0_39] : memref<2x8x32xf32, #tpu.memory_space<vmem>>, vector<2x8x32xf32>
    tpu.vector_store %arg27[%c0_37, %c0_38, %c0_39], %98 {strides = array<i32>} : memref<2x8x32xf32, #tpu.memory_space<vmem>>, vector<2x8x32xf32>,
    %100 = tpu.concatenate %34, %55, %76, %97 in 2 : vector<2x8x8xf32>, vector<2x8x8xf32>, vector<2x8x8xf32>, vector<2x8x8xf32> -> vector<2x8x32xf32>
    %101 = vector.shape_cast %100 : vector<2x8x32xf32> to vector<16x32xf32>
    %c0_40 = arith.constant 0 : index
    %c0_41 = arith.constant 0 : index
    %102 = vector.load %arg8[%c0_40, %c0_41] : memref<32x32xf32, #tpu.memory_space<vmem>>, vector<32x32xf32>
    %cst_42 = arith.constant dense<0.000000e+00> : vector<16x32xf32>
    %103 = tpu.matmul %101, %102, %cst_42 {dimension_numbers = #tpu.dot_dimension_numbers<[1], [0], [0], [1], [0, 0, 1, 1], [], []>} : vector<16x32xf32>, vector<32x32xf32>, vector<16x32xf32> -> vector<16x32xf32>
    %c0_43 = arith.constant 0 : index
    %c0_44 = arith.constant 0 : index
    %104 = vector.load %arg9[%c0_43, %c0_44] : memref<1x32xf32, #tpu.memory_space<vmem>>, vector<1x32xf32>
    %105 = vector.broadcast %104 : vector<1x32xf32> to vector<16x32xf32>
    %106 = arith.addf %103, %105 : vector<16x32xf32>
    %107 = vector.shape_cast %106 : vector<16x32xf32> to vector<2x8x32xf32>
    %c0_45 = arith.constant 0 : index
    %c0_46 = arith.constant 0 : index
    %c0_47 = arith.constant 0 : index
    %108 = vector.load %arg0[%c0_45, %c0_46, %c0_47] : memref<2x8x32xf32, #tpu.memory_space<vmem>>, vector<2x8x32xf32>
    %109 = arith.addf %107, %108 : vector<2x8x32xf32>
    %c0_48 = arith.constant 0 : index
    %c0_49 = arith.constant 0 : index
    %110 = vector.load %arg10[%c0_48, %c0_49] : memref<1x32xf32, #tpu.memory_space<vmem>>, vector<1x32xf32>
    %c0_50 = arith.constant 0 : index
    %c0_51 = arith.constant 0 : index
    %111 = vector.load %arg11[%c0_50, %c0_51] : memref<1x32xf32, #tpu.memory_space<vmem>>, vector<1x32xf32>
    %cst_52 = arith.constant dense<0.000000e+00> : vector<2x8xf32>
    %112 = vector.multi_reduction <add>, %109, %cst_52 [2] : vector<2x8x32xf32> to vector<2x8xf32>
    %113 = vector.shape_cast %112 : vector<2x8xf32> to vector<2x8x1xf32>
    %cst_53 = arith.constant 3.200000e+01 : f32
    %114 = vector.broadcast %cst_53 : f32 to vector<2x8x1xf32>
    %115 = arith.divf %113, %114 : vector<2x8x1xf32>
    %116 = vector.broadcast %115 : vector<2x8x1xf32> to vector<2x8x32xf32>
    %117 = arith.subf %109, %116 : vector<2x8x32xf32>
    %118 = arith.mulf %117, %117 : vector<2x8x32xf32>
    %cst_54 = arith.constant dense<0.000000e+00> : vector<2x8xf32>
    %119 = vector.multi_reduction <add>, %118, %cst_54 [2] : vector<2x8x32xf32> to vector<2x8xf32>
    %120 = vector.shape_cast %119 : vector<2x8xf32> to vector<2x8x1xf32>
    %cst_55 = arith.constant 3.200000e+01 : f32
    %121 = vector.broadcast %cst_55 : f32 to vector<2x8x1xf32>
    %122 = arith.divf %120, %121 : vector<2x8x1xf32>
    %123 = vector.broadcast %115 : vector<2x8x1xf32> to vector<2x8x32xf32>
    %124 = arith.subf %109, %123 : vector<2x8x32xf32>
    %cst_56 = arith.constant 9.99999974E-6 : f32
    %125 = vector.broadcast %cst_56 : f32 to vector<2x8x1xf32>
    %126 = arith.addf %122, %125 : vector<2x8x1xf32>
    %127 = math.rsqrt %126 : vector<2x8x1xf32>
    %128 = vector.broadcast %127 : vector<2x8x1xf32> to vector<2x8x32xf32>
    %129 = arith.mulf %124, %128 : vector<2x8x32xf32>
    %130 = vector.shape_cast %110 : vector<1x32xf32> to vector<1x1x32xf32>
    %131 = vector.broadcast %130 : vector<1x1x32xf32> to vector<2x8x32xf32>
    %132 = arith.mulf %129, %131 : vector<2x8x32xf32>
    %133 = vector.shape_cast %111 : vector<1x32xf32> to vector<1x1x32xf32>
    %134 = vector.broadcast %133 : vector<1x1x32xf32> to vector<2x8x32xf32>
    %135 = arith.addf %132, %134 : vector<2x8x32xf32>
    %c0_57 = arith.constant 0 : index
    %c0_58 = arith.constant 0 : index
    %c0_59 = arith.constant 0 : index
    %136 = vector.load %arg2[%c0_57, %c0_58, %c0_59] : memref<2x8x1xf32, #tpu.memory_space<vmem>>, vector<2x8x1xf32>
    %137 = vector.broadcast %136 : vector<2x8x1xf32> to vector<2x8x32xf32>
    %138 = arith.mulf %135, %137 : vector<2x8x32xf32>
    %c0_60 = arith.constant 0 : index
    %c0_61 = arith.constant 0 : index
    %c0_62 = arith.constant 0 : index
    %139 = vector.load %arg1[%c0_60, %c0_61, %c0_62] : memref<2x8x32xf32, #tpu.memory_space<vmem>>, vector<2x8x32xf32>
    %140 = vector.shape_cast %139 : vector<2x8x32xf32> to vector<16x32xf32>
    %c0_63 = arith.constant 0 : index
    %c0_64 = arith.constant 0 : index
    %141 = vector.load %arg12[%c0_63, %c0_64] : memref<32x32xf32, #tpu.memory_space<vmem>>, vector<32x32xf32>
    %cst_65 = arith.constant dense<0.000000e+00> : vector<16x32xf32>
    %142 = tpu.matmul %140, %141, %cst_65 {dimension_numbers = #tpu.dot_dimension_numbers<[1], [0], [0], [1], [0, 0, 1, 1], [], []>} : vector<16x32xf32>, vector<32x32xf32>, vector<16x32xf32> -> vector<16x32xf32>
    %c0_66 = arith.constant 0 : index
    %c0_67 = arith.constant 0 : index
    %143 = vector.load %arg13[%c0_66, %c0_67] : memref<1x32xf32, #tpu.memory_space<vmem>>, vector<1x32xf32>
    %144 = vector.broadcast %143 : vector<1x32xf32> to vector<16x32xf32>
    %145 = arith.addf %142, %144 : vector<16x32xf32>
    %146 = vector.shape_cast %138 : vector<2x8x32xf32> to vector<16x32xf32>
    %c0_68 = arith.constant 0 : index
    %c0_69 = arith.constant 0 : index
    %147 = vector.load %arg14[%c0_68, %c0_69] : memref<32x64xf32, #tpu.memory_space<vmem>>, vector<32x64xf32>
    %cst_70 = arith.constant dense<0.000000e+00> : vector<16x64xf32>
    %148 = tpu.matmul %146, %147, %cst_70 {dimension_numbers = #tpu.dot_dimension_numbers<[1], [0], [0], [1], [0, 0, 1, 1], [], []>} : vector<16x32xf32>, vector<32x64xf32>, vector<16x64xf32> -> vector<16x64xf32>
    %c0_71 = arith.constant 0 : index
    %c0_72 = arith.constant 0 : index
    %149 = vector.load %arg15[%c0_71, %c0_72] : memref<1x64xf32, #tpu.memory_space<vmem>>, vector<1x64xf32>
    %150 = vector.broadcast %149 : vector<1x64xf32> to vector<16x64xf32>
    %151 = arith.addf %148, %150 : vector<16x64xf32>
    %152 = vector.shape_cast %145 : vector<16x32xf32> to vector<2x8x32xf32>
    %153 = vector.extract_strided_slice %151 {offsets = [0, 0], sizes = [16, 32], strides = [1, 1]} : vector<16x64xf32> to vector<16x32xf32>
    %154 = vector.shape_cast %153 : vector<16x32xf32> to vector<2x8x32xf32>
    %155 = vector.extract_strided_slice %151 {offsets = [0, 32], sizes = [16, 32], strides = [1, 1]} : vector<16x64xf32> to vector<16x32xf32>
    %156 = vector.shape_cast %155 : vector<16x32xf32> to vector<2x8x32xf32>
    %c0_73 = arith.constant 0 : index
    %c0_74 = arith.constant 0 : index
    %c0_75 = arith.constant 0 : index
    %157 = vector.load %arg5[%c0_73, %c0_74, %c0_75] : memref<2x8x8xf32, #tpu.memory_space<vmem>>, vector<2x8x8xf32>
    %158 = vector.extract_strided_slice %152 {offsets = [0, 0, 0], sizes = [2, 8, 8], strides = [1, 1, 1]} : vector<2x8x32xf32> to vector<2x8x8xf32>
    %159 = vector.extract_strided_slice %154 {offsets = [0, 0, 0], sizes = [2, 8, 8], strides = [1, 1, 1]} : vector<2x8x32xf32> to vector<2x8x8xf32>
    %160 = vector.extract_strided_slice %156 {offsets = [0, 0, 0], sizes = [2, 8, 8], strides = [1, 1, 1]} : vector<2x8x32xf32> to vector<2x8x8xf32>
    "tpu.trace_start"() <{level = 10 : i32, message = "bqd,bkd->bqk"}> : () -> ()
    %cst_76 = arith.constant dense<0.000000e+00> : vector<2x8x8xf32>
    %161 = tpu.matmul %158, %159, %cst_76 {dimension_numbers = #tpu.dot_dimension_numbers<[2], [2], [1], [1], [0, 0, 0, 1, 1, 1], [0], [0]>} : vector<2x8x8xf32>, vector<2x8x8xf32>, vector<2x8x8xf32> -> vector<2x8x8xf32>
    "tpu.trace_stop"() : () -> ()
    %cst_77 = arith.constant 0.353553385 : f32
    %162 = vector.broadcast %cst_77 : f32 to vector<2x8x8xf32>
    %163 = arith.mulf %161, %162 : vector<2x8x8xf32>
    %cst_78 = arith.constant 0.000000e+00 : f32
    %164 = vector.broadcast %cst_78 : f32 to vector<2x8x8xf32>
    %165 = arith.cmpf ogt, %157, %164 : vector<2x8x8xf32>
    %cst_79 = arith.constant -1.000000e+30 : f32
    %166 = vector.broadcast %cst_79 : f32 to vector<2x8x8xf32>
    %167 = arith.select %165, %166, %163 : vector<2x8x8xi1>, vector<2x8x8xf32>
    %cst_80 = arith.constant dense<0xFF800000> : vector<2x8xf32>
    %168 = vector.multi_reduction <maximumf>, %167, %cst_80 [2] : vector<2x8x8xf32> to vector<2x8xf32>
    %169 = vector.shape_cast %168 : vector<2x8xf32> to vector<2x8x1xf32>
    %170 = vector.broadcast %169 : vector<2x8x1xf32> to vector<2x8x8xf32>
    %171 = arith.subf %167, %170 : vector<2x8x8xf32>
    %172 = math.exp %171 : vector<2x8x8xf32>
    %cst_81 = arith.constant dense<0.000000e+00> : vector<2x8xf32>
    %173 = vector.multi_reduction <add>, %172, %cst_81 [2] : vector<2x8x8xf32> to vector<2x8xf32>
    %174 = vector.shape_cast %173 : vector<2x8xf32> to vector<2x8x1xf32>
    %175 = tpu.reciprocal %174 {approx = true} : vector<2x8x1xf32> -> vector<2x8x1xf32>
    %176 = vector.broadcast %175 : vector<2x8x1xf32> to vector<2x8x8xf32>
    %177 = arith.mulf %172, %176 : vector<2x8x8xf32>
    "tpu.trace_start"() <{level = 10 : i32, message = "bqk,bkd->bqd"}> : () -> ()
    %cst_82 = arith.constant dense<0.000000e+00> : vector<2x8x8xf32>
    %178 = tpu.matmul %177, %160, %cst_82 {dimension_numbers = #tpu.dot_dimension_numbers<[2], [1], [1], [2], [0, 0, 0, 1, 1, 2], [0], [0]>} : vector<2x8x8xf32>, vector<2x8x8xf32>, vector<2x8x8xf32> -> vector<2x8x8xf32>
    "tpu.trace_stop"() : () -> ()
    %179 = vector.extract_strided_slice %152 {offsets = [0, 0, 8], sizes = [2, 8, 8], strides = [1, 1, 1]} : vector<2x8x32xf32> to vector<2x8x8xf32>
    %180 = vector.extract_strided_slice %154 {offsets = [0, 0, 8], sizes = [2, 8, 8], strides = [1, 1, 1]} : vector<2x8x32xf32> to vector<2x8x8xf32>
    %181 = vector.extract_strided_slice %156 {offsets = [0, 0, 8], sizes = [2, 8, 8], strides = [1, 1, 1]} : vector<2x8x32xf32> to vector<2x8x8xf32>
    "tpu.trace_start"() <{level = 10 : i32, message = "bqd,bkd->bqk"}> : () -> ()
    %cst_83 = arith.constant dense<0.000000e+00> : vector<2x8x8xf32>
    %182 = tpu.matmul %179, %180, %cst_83 {dimension_numbers = #tpu.dot_dimension_numbers<[2], [2], [1], [1], [0, 0, 0, 1, 1, 1], [0], [0]>} : vector<2x8x8xf32>, vector<2x8x8xf32>, vector<2x8x8xf32> -> vector<2x8x8xf32>
    "tpu.trace_stop"() : () -> ()
    %cst_84 = arith.constant 0.353553385 : f32
    %183 = vector.broadcast %cst_84 : f32 to vector<2x8x8xf32>
    %184 = arith.mulf %182, %183 : vector<2x8x8xf32>
    %cst_85 = arith.constant 0.000000e+00 : f32
    %185 = vector.broadcast %cst_85 : f32 to vector<2x8x8xf32>
    %186 = arith.cmpf ogt, %157, %185 : vector<2x8x8xf32>
    %cst_86 = arith.constant -1.000000e+30 : f32
    %187 = vector.broadcast %cst_86 : f32 to vector<2x8x8xf32>
    %188 = arith.select %186, %187, %184 : vector<2x8x8xi1>, vector<2x8x8xf32>
    %cst_87 = arith.constant dense<0xFF800000> : vector<2x8xf32>
    %189 = vector.multi_reduction <maximumf>, %188, %cst_87 [2] : vector<2x8x8xf32> to vector<2x8xf32>
    %190 = vector.shape_cast %189 : vector<2x8xf32> to vector<2x8x1xf32>
    %191 = vector.broadcast %190 : vector<2x8x1xf32> to vector<2x8x8xf32>
    %192 = arith.subf %188, %191 : vector<2x8x8xf32>
    %193 = math.exp %192 : vector<2x8x8xf32>
    %cst_88 = arith.constant dense<0.000000e+00> : vector<2x8xf32>
    %194 = vector.multi_reduction <add>, %193, %cst_88 [2] : vector<2x8x8xf32> to vector<2x8xf32>
    %195 = vector.shape_cast %194 : vector<2x8xf32> to vector<2x8x1xf32>
    %196 = tpu.reciprocal %195 {approx = true} : vector<2x8x1xf32> -> vector<2x8x1xf32>
    %197 = vector.broadcast %196 : vector<2x8x1xf32> to vector<2x8x8xf32>
    %198 = arith.mulf %193, %197 : vector<2x8x8xf32>
    "tpu.trace_start"() <{level = 10 : i32, message = "bqk,bkd->bqd"}> : () -> ()
    %cst_89 = arith.constant dense<0.000000e+00> : vector<2x8x8xf32>
    %199 = tpu.matmul %198, %181, %cst_89 {dimension_numbers = #tpu.dot_dimension_numbers<[2], [1], [1], [2], [0, 0, 0, 1, 1, 2], [0], [0]>} : vector<2x8x8xf32>, vector<2x8x8xf32>, vector<2x8x8xf32> -> vector<2x8x8xf32>
    "tpu.trace_stop"() : () -> ()
    %200 = vector.extract_strided_slice %152 {offsets = [0, 0, 16], sizes = [2, 8, 8], strides = [1, 1, 1]} : vector<2x8x32xf32> to vector<2x8x8xf32>
    %201 = vector.extract_strided_slice %154 {offsets = [0, 0, 16], sizes = [2, 8, 8], strides = [1, 1, 1]} : vector<2x8x32xf32> to vector<2x8x8xf32>
    %202 = vector.extract_strided_slice %156 {offsets = [0, 0, 16], sizes = [2, 8, 8], strides = [1, 1, 1]} : vector<2x8x32xf32> to vector<2x8x8xf32>
    "tpu.trace_start"() <{level = 10 : i32, message = "bqd,bkd->bqk"}> : () -> ()
    %cst_90 = arith.constant dense<0.000000e+00> : vector<2x8x8xf32>
    %203 = tpu.matmul %200, %201, %cst_90 {dimension_numbers = #tpu.dot_dimension_numbers<[2], [2], [1], [1], [0, 0, 0, 1, 1, 1], [0], [0]>} : vector<2x8x8xf32>, vector<2x8x8xf32>, vector<2x8x8xf32> -> vector<2x8x8xf32>
    "tpu.trace_stop"() : () -> ()
    %cst_91 = arith.constant 0.353553385 : f32
    %204 = vector.broadcast %cst_91 : f32 to vector<2x8x8xf32>
    %205 = arith.mulf %203, %204 : vector<2x8x8xf32>
    %cst_92 = arith.constant 0.000000e+00 : f32
    %206 = vector.broadcast %cst_92 : f32 to vector<2x8x8xf32>
    %207 = arith.cmpf ogt, %157, %206 : vector<2x8x8xf32>
    %cst_93 = arith.constant -1.000000e+30 : f32
    %208 = vector.broadcast %cst_93 : f32 to vector<2x8x8xf32>
    %209 = arith.select %207, %208, %205 : vector<2x8x8xi1>, vector<2x8x8xf32>
    %cst_94 = arith.constant dense<0xFF800000> : vector<2x8xf32>
    %210 = vector.multi_reduction <maximumf>, %209, %cst_94 [2] : vector<2x8x8xf32> to vector<2x8xf32>
    %211 = vector.shape_cast %210 : vector<2x8xf32> to vector<2x8x1xf32>
    %212 = vector.broadcast %211 : vector<2x8x1xf32> to vector<2x8x8xf32>
    %213 = arith.subf %209, %212 : vector<2x8x8xf32>
    %214 = math.exp %213 : vector<2x8x8xf32>
    %cst_95 = arith.constant dense<0.000000e+00> : vector<2x8xf32>
    %215 = vector.multi_reduction <add>, %214, %cst_95 [2] : vector<2x8x8xf32> to vector<2x8xf32>
    %216 = vector.shape_cast %215 : vector<2x8xf32> to vector<2x8x1xf32>
    %217 = tpu.reciprocal %216 {approx = true} : vector<2x8x1xf32> -> vector<2x8x1xf32>
    %218 = vector.broadcast %217 : vector<2x8x1xf32> to vector<2x8x8xf32>
    %219 = arith.mulf %214, %218 : vector<2x8x8xf32>
    "tpu.trace_start"() <{level = 10 : i32, message = "bqk,bkd->bqd"}> : () -> ()
    %cst_96 = arith.constant dense<0.000000e+00> : vector<2x8x8xf32>
    %220 = tpu.matmul %219, %202, %cst_96 {dimension_numbers = #tpu.dot_dimension_numbers<[2], [1], [1], [2], [0, 0, 0, 1, 1, 2], [0], [0]>} : vector<2x8x8xf32>, vector<2x8x8xf32>, vector<2x8x8xf32> -> vector<2x8x8xf32>
    "tpu.trace_stop"() : () -> ()
    %221 = vector.extract_strided_slice %152 {offsets = [0, 0, 24], sizes = [2, 8, 8], strides = [1, 1, 1]} : vector<2x8x32xf32> to vector<2x8x8xf32>
    %222 = vector.extract_strided_slice %154 {offsets = [0, 0, 24], sizes = [2, 8, 8], strides = [1, 1, 1]} : vector<2x8x32xf32> to vector<2x8x8xf32>
    %223 = vector.extract_strided_slice %156 {offsets = [0, 0, 24], sizes = [2, 8, 8], strides = [1, 1, 1]} : vector<2x8x32xf32> to vector<2x8x8xf32>
    "tpu.trace_start"() <{level = 10 : i32, message = "bqd,bkd->bqk"}> : () -> ()
    %cst_97 = arith.constant dense<0.000000e+00> : vector<2x8x8xf32>
    %224 = tpu.matmul %221, %222, %cst_97 {dimension_numbers = #tpu.dot_dimension_numbers<[2], [2], [1], [1], [0, 0, 0, 1, 1, 1], [0], [0]>} : vector<2x8x8xf32>, vector<2x8x8xf32>, vector<2x8x8xf32> -> vector<2x8x8xf32>
    "tpu.trace_stop"() : () -> ()
    %cst_98 = arith.constant 0.353553385 : f32
    %225 = vector.broadcast %cst_98 : f32 to vector<2x8x8xf32>
    %226 = arith.mulf %224, %225 : vector<2x8x8xf32>
    %cst_99 = arith.constant 0.000000e+00 : f32
    %227 = vector.broadcast %cst_99 : f32 to vector<2x8x8xf32>
    %228 = arith.cmpf ogt, %157, %227 : vector<2x8x8xf32>
    %cst_100 = arith.constant -1.000000e+30 : f32
    %229 = vector.broadcast %cst_100 : f32 to vector<2x8x8xf32>
    %230 = arith.select %228, %229, %226 : vector<2x8x8xi1>, vector<2x8x8xf32>
    %cst_101 = arith.constant dense<0xFF800000> : vector<2x8xf32>
    %231 = vector.multi_reduction <maximumf>, %230, %cst_101 [2] : vector<2x8x8xf32> to vector<2x8xf32>
    %232 = vector.shape_cast %231 : vector<2x8xf32> to vector<2x8x1xf32>
    %233 = vector.broadcast %232 : vector<2x8x1xf32> to vector<2x8x8xf32>
    %234 = arith.subf %230, %233 : vector<2x8x8xf32>
    %235 = math.exp %234 : vector<2x8x8xf32>
    %cst_102 = arith.constant dense<0.000000e+00> : vector<2x8xf32>
    %236 = vector.multi_reduction <add>, %235, %cst_102 [2] : vector<2x8x8xf32> to vector<2x8xf32>
    %237 = vector.shape_cast %236 : vector<2x8xf32> to vector<2x8x1xf32>
    %238 = tpu.reciprocal %237 {approx = true} : vector<2x8x1xf32> -> vector<2x8x1xf32>
    %239 = vector.broadcast %238 : vector<2x8x1xf32> to vector<2x8x8xf32>
    %240 = arith.mulf %235, %239 : vector<2x8x8xf32>
    "tpu.trace_start"() <{level = 10 : i32, message = "bqk,bkd->bqd"}> : () -> ()
    %cst_103 = arith.constant dense<0.000000e+00> : vector<2x8x8xf32>
    %241 = tpu.matmul %240, %223, %cst_103 {dimension_numbers = #tpu.dot_dimension_numbers<[2], [1], [1], [2], [0, 0, 0, 1, 1, 2], [0], [0]>} : vector<2x8x8xf32>, vector<2x8x8xf32>, vector<2x8x8xf32> -> vector<2x8x8xf32>
    "tpu.trace_stop"() : () -> ()
    %242 = tpu.concatenate %177, %198, %219, %240 in 2 : vector<2x8x8xf32>, vector<2x8x8xf32>, vector<2x8x8xf32>, vector<2x8x8xf32> -> vector<2x8x32xf32>
    %c0_104 = arith.constant 0 : index
    %c0_105 = arith.constant 0 : index
    %c0_106 = arith.constant 0 : index
    %243 = vector.load %arg28[%c0_104, %c0_105, %c0_106] : memref<2x8x32xf32, #tpu.memory_space<vmem>>, vector<2x8x32xf32>
    tpu.vector_store %arg28[%c0_104, %c0_105, %c0_106], %242 {strides = array<i32>} : memref<2x8x32xf32, #tpu.memory_space<vmem>>, vector<2x8x32xf32>,
    %244 = tpu.concatenate %178, %199, %220, %241 in 2 : vector<2x8x8xf32>, vector<2x8x8xf32>, vector<2x8x8xf32>, vector<2x8x8xf32> -> vector<2x8x32xf32>
    %245 = vector.shape_cast %244 : vector<2x8x32xf32> to vector<16x32xf32>
    %c0_107 = arith.constant 0 : index
    %c0_108 = arith.constant 0 : index
    %246 = vector.load %arg16[%c0_107, %c0_108] : memref<32x32xf32, #tpu.memory_space<vmem>>, vector<32x32xf32>
    %cst_109 = arith.constant dense<0.000000e+00> : vector<16x32xf32>
    %247 = tpu.matmul %245, %246, %cst_109 {dimension_numbers = #tpu.dot_dimension_numbers<[1], [0], [0], [1], [0, 0, 1, 1], [], []>} : vector<16x32xf32>, vector<32x32xf32>, vector<16x32xf32> -> vector<16x32xf32>
    %c0_110 = arith.constant 0 : index
    %c0_111 = arith.constant 0 : index
    %248 = vector.load %arg17[%c0_110, %c0_111] : memref<1x32xf32, #tpu.memory_space<vmem>>, vector<1x32xf32>
    %249 = vector.broadcast %248 : vector<1x32xf32> to vector<16x32xf32>
    %250 = arith.addf %247, %249 : vector<16x32xf32>
    %251 = vector.shape_cast %250 : vector<16x32xf32> to vector<2x8x32xf32>
    %c0_112 = arith.constant 0 : index
    %c0_113 = arith.constant 0 : index
    %c0_114 = arith.constant 0 : index
    %252 = vector.load %arg1[%c0_112, %c0_113, %c0_114] : memref<2x8x32xf32, #tpu.memory_space<vmem>>, vector<2x8x32xf32>
    %253 = arith.addf %251, %252 : vector<2x8x32xf32>
    %c0_115 = arith.constant 0 : index
    %c0_116 = arith.constant 0 : index
    %254 = vector.load %arg18[%c0_115, %c0_116] : memref<1x32xf32, #tpu.memory_space<vmem>>, vector<1x32xf32>
    %c0_117 = arith.constant 0 : index
    %c0_118 = arith.constant 0 : index
    %255 = vector.load %arg19[%c0_117, %c0_118] : memref<1x32xf32, #tpu.memory_space<vmem>>, vector<1x32xf32>
    %cst_119 = arith.constant dense<0.000000e+00> : vector<2x8xf32>
    %256 = vector.multi_reduction <add>, %253, %cst_119 [2] : vector<2x8x32xf32> to vector<2x8xf32>
    %257 = vector.shape_cast %256 : vector<2x8xf32> to vector<2x8x1xf32>
    %cst_120 = arith.constant 3.200000e+01 : f32
    %258 = vector.broadcast %cst_120 : f32 to vector<2x8x1xf32>
    %259 = arith.divf %257, %258 : vector<2x8x1xf32>
    %260 = vector.broadcast %259 : vector<2x8x1xf32> to vector<2x8x32xf32>
    %261 = arith.subf %253, %260 : vector<2x8x32xf32>
    %262 = arith.mulf %261, %261 : vector<2x8x32xf32>
    %cst_121 = arith.constant dense<0.000000e+00> : vector<2x8xf32>
    %263 = vector.multi_reduction <add>, %262, %cst_121 [2] : vector<2x8x32xf32> to vector<2x8xf32>
    %264 = vector.shape_cast %263 : vector<2x8xf32> to vector<2x8x1xf32>
    %cst_122 = arith.constant 3.200000e+01 : f32
    %265 = vector.broadcast %cst_122 : f32 to vector<2x8x1xf32>
    %266 = arith.divf %264, %265 : vector<2x8x1xf32>
    %267 = vector.broadcast %259 : vector<2x8x1xf32> to vector<2x8x32xf32>
    %268 = arith.subf %253, %267 : vector<2x8x32xf32>
    %cst_123 = arith.constant 9.99999974E-6 : f32
    %269 = vector.broadcast %cst_123 : f32 to vector<2x8x1xf32>
    %270 = arith.addf %266, %269 : vector<2x8x1xf32>
    %271 = math.rsqrt %270 : vector<2x8x1xf32>
    %272 = vector.broadcast %271 : vector<2x8x1xf32> to vector<2x8x32xf32>
    %273 = arith.mulf %268, %272 : vector<2x8x32xf32>
    %274 = vector.shape_cast %254 : vector<1x32xf32> to vector<1x1x32xf32>
    %275 = vector.broadcast %274 : vector<1x1x32xf32> to vector<2x8x32xf32>
    %276 = arith.mulf %273, %275 : vector<2x8x32xf32>
    %277 = vector.shape_cast %255 : vector<1x32xf32> to vector<1x1x32xf32>
    %278 = vector.broadcast %277 : vector<1x1x32xf32> to vector<2x8x32xf32>
    %279 = arith.addf %276, %278 : vector<2x8x32xf32>
    %c0_124 = arith.constant 0 : index
    %c0_125 = arith.constant 0 : index
    %c0_126 = arith.constant 0 : index
    %280 = vector.load %arg3[%c0_124, %c0_125, %c0_126] : memref<2x8x1xf32, #tpu.memory_space<vmem>>, vector<2x8x1xf32>
    %281 = vector.broadcast %280 : vector<2x8x1xf32> to vector<2x8x32xf32>
    %282 = arith.mulf %279, %281 : vector<2x8x32xf32>
    %283 = vector.shape_cast %282 : vector<2x8x32xf32> to vector<16x32xf32>
    %c0_127 = arith.constant 0 : index
    %c0_128 = arith.constant 0 : index
    %284 = vector.load %arg20[%c0_127, %c0_128] : memref<32x64xf32, #tpu.memory_space<vmem>>, vector<32x64xf32>
    %cst_129 = arith.constant dense<0.000000e+00> : vector<16x64xf32>
    %285 = tpu.matmul %283, %284, %cst_129 {dimension_numbers = #tpu.dot_dimension_numbers<[1], [0], [0], [1], [0, 0, 1, 1], [], []>} : vector<16x32xf32>, vector<32x64xf32>, vector<16x64xf32> -> vector<16x64xf32>
    %c0_130 = arith.constant 0 : index
    %c0_131 = arith.constant 0 : index
    %286 = vector.load %arg21[%c0_130, %c0_131] : memref<1x64xf32, #tpu.memory_space<vmem>>, vector<1x64xf32>
    %287 = vector.broadcast %286 : vector<1x64xf32> to vector<16x64xf32>
    %288 = arith.addf %285, %287 : vector<16x64xf32>
    %cst_132 = arith.constant 0.000000e+00 : f32
    %289 = vector.broadcast %cst_132 : f32 to vector<16x64xf32>
    %290 = arith.maximumf %288, %289 : vector<16x64xf32>
    %c0_133 = arith.constant 0 : index
    %c0_134 = arith.constant 0 : index
    %291 = vector.load %arg22[%c0_133, %c0_134] : memref<64x32xf32, #tpu.memory_space<vmem>>, vector<64x32xf32>
    %cst_135 = arith.constant dense<0.000000e+00> : vector<16x32xf32>
    %292 = tpu.matmul %290, %291, %cst_135 {dimension_numbers = #tpu.dot_dimension_numbers<[1], [0], [0], [1], [0, 0, 1, 1], [], []>} : vector<16x64xf32>, vector<64x32xf32>, vector<16x32xf32> -> vector<16x32xf32>
    %c0_136 = arith.constant 0 : index
    %c0_137 = arith.constant 0 : index
    %293 = vector.load %arg23[%c0_136, %c0_137] : memref<1x32xf32, #tpu.memory_space<vmem>>, vector<1x32xf32>
    %294 = vector.broadcast %293 : vector<1x32xf32> to vector<16x32xf32>
    %295 = arith.addf %292, %294 : vector<16x32xf32>
    %296 = arith.addf %295, %283 : vector<16x32xf32>
    %297 = vector.shape_cast %296 : vector<16x32xf32> to vector<2x8x32xf32>
    %c0_138 = arith.constant 0 : index
    %c0_139 = arith.constant 0 : index
    %298 = vector.load %arg24[%c0_138, %c0_139] : memref<1x32xf32, #tpu.memory_space<vmem>>, vector<1x32xf32>
    %c0_140 = arith.constant 0 : index
    %c0_141 = arith.constant 0 : index
    %299 = vector.load %arg25[%c0_140, %c0_141] : memref<1x32xf32, #tpu.memory_space<vmem>>, vector<1x32xf32>
    %cst_142 = arith.constant dense<0.000000e+00> : vector<2x8xf32>
    %300 = vector.multi_reduction <add>, %297, %cst_142 [2] : vector<2x8x32xf32> to vector<2x8xf32>
    %301 = vector.shape_cast %300 : vector<2x8xf32> to vector<2x8x1xf32>
    %cst_143 = arith.constant 3.200000e+01 : f32
    %302 = vector.broadcast %cst_143 : f32 to vector<2x8x1xf32>
    %303 = arith.divf %301, %302 : vector<2x8x1xf32>
    %304 = vector.broadcast %303 : vector<2x8x1xf32> to vector<2x8x32xf32>
    %305 = arith.subf %297, %304 : vector<2x8x32xf32>
    %306 = arith.mulf %305, %305 : vector<2x8x32xf32>
    %cst_144 = arith.constant dense<0.000000e+00> : vector<2x8xf32>
    %307 = vector.multi_reduction <add>, %306, %cst_144 [2] : vector<2x8x32xf32> to vector<2x8xf32>
    %308 = vector.shape_cast %307 : vector<2x8xf32> to vector<2x8x1xf32>
    %cst_145 = arith.constant 3.200000e+01 : f32
    %309 = vector.broadcast %cst_145 : f32 to vector<2x8x1xf32>
    %310 = arith.divf %308, %309 : vector<2x8x1xf32>
    %311 = vector.broadcast %303 : vector<2x8x1xf32> to vector<2x8x32xf32>
    %312 = arith.subf %297, %311 : vector<2x8x32xf32>
    %cst_146 = arith.constant 9.99999974E-6 : f32
    %313 = vector.broadcast %cst_146 : f32 to vector<2x8x1xf32>
    %314 = arith.addf %310, %313 : vector<2x8x1xf32>
    %315 = math.rsqrt %314 : vector<2x8x1xf32>
    %316 = vector.broadcast %315 : vector<2x8x1xf32> to vector<2x8x32xf32>
    %317 = arith.mulf %312, %316 : vector<2x8x32xf32>
    %318 = vector.shape_cast %298 : vector<1x32xf32> to vector<1x1x32xf32>
    %319 = vector.broadcast %318 : vector<1x1x32xf32> to vector<2x8x32xf32>
    %320 = arith.mulf %317, %319 : vector<2x8x32xf32>
    %321 = vector.shape_cast %299 : vector<1x32xf32> to vector<1x1x32xf32>
    %322 = vector.broadcast %321 : vector<1x1x32xf32> to vector<2x8x32xf32>
    %323 = arith.addf %320, %322 : vector<2x8x32xf32>
    %c0_147 = arith.constant 0 : index
    %c0_148 = arith.constant 0 : index
    %c0_149 = arith.constant 0 : index
    %324 = vector.load %arg3[%c0_147, %c0_148, %c0_149] : memref<2x8x1xf32, #tpu.memory_space<vmem>>, vector<2x8x1xf32>
    %325 = vector.broadcast %324 : vector<2x8x1xf32> to vector<2x8x32xf32>
    %326 = arith.mulf %323, %325 : vector<2x8x32xf32>
    %c0_150 = arith.constant 0 : index
    %c0_151 = arith.constant 0 : index
    %c0_152 = arith.constant 0 : index
    %327 = vector.load %arg26[%c0_150, %c0_151, %c0_152] : memref<2x8x32xf32, #tpu.memory_space<vmem>>, vector<2x8x32xf32>
    tpu.vector_store %arg26[%c0_150, %c0_151, %c0_152], %326 {strides = array<i32>} : memref<2x8x32xf32, #tpu.memory_space<vmem>>, vector<2x8x32xf32>,
    return
  }
}

</mosaic_0001>

<llo_original>
// kernel: tpu_custom_call.1
$region0: #{tpu_custom_call.1}
  #allocation0 [shape = 'u32[]', space=smem, size = 0x4, offset = 0x4, fixed_abs, tag = 'smem constant byte address 0x4 - core index']
  #allocation1 [shape = 'u32[144,128]{1,0:T(1,128)}', space=vmem, size = 0x12000, scoped, tag = 'internal scratch']
  %s0 = inlined_call_operand.hbm [shape: f32[2,8,32], index: 0, kind: input, shape index: {}]
  %s1 = inlined_call_operand.hbm [shape: f32[2,8,32], index: 1, kind: input, shape index: {}]
  %s2 = inlined_call_operand.vmem [shape: f32[2,8,1], index: 2, kind: input, shape index: {}]
  %s3 = inlined_call_operand.vmem [shape: f32[2,8,1], index: 3, kind: input, shape index: {}]
  %s4 = inlined_call_operand.hbm [shape: f32[2,8,8], index: 4, kind: input, shape index: {}]
  %s5 = inlined_call_operand.hbm [shape: f32[2,8,8], index: 5, kind: input, shape index: {}]
  %s6 = inlined_call_operand.vmem [shape: f32[32,96], index: 6, kind: input, shape index: {}]
  %s7 = inlined_call_operand.vmem [shape: f32[1,96], index: 7, kind: input, shape index: {}]
  %s8 = inlined_call_operand.vmem [shape: f32[32,32], index: 8, kind: input, shape index: {}]
  %s9 = inlined_call_operand.hbm [shape: f32[1,32], index: 9, kind: input, shape index: {}]
  %s10 = inlined_call_operand.hbm [shape: f32[1,32], index: 10, kind: input, shape index: {}]
  %s11 = inlined_call_operand.hbm [shape: f32[1,32], index: 11, kind: input, shape index: {}]
  %s12 = inlined_call_operand.vmem [shape: f32[32,32], index: 12, kind: input, shape index: {}]
  %s13 = inlined_call_operand.hbm [shape: f32[1,32], index: 13, kind: input, shape index: {}]
  %s14 = inlined_call_operand.vmem [shape: f32[32,64], index: 14, kind: input, shape index: {}]
  %s15 = inlined_call_operand.hbm [shape: f32[1,64], index: 15, kind: input, shape index: {}]
  %s16 = inlined_call_operand.vmem [shape: f32[32,32], index: 16, kind: input, shape index: {}]
  %s17 = inlined_call_operand.vmem [shape: f32[1,32], index: 17, kind: input, shape index: {}]
  %s18 = inlined_call_operand.vmem [shape: f32[1,32], index: 18, kind: input, shape index: {}]
  %s19 = inlined_call_operand.vmem [shape: f32[1,32], index: 19, kind: input, shape index: {}]
  %s20 = inlined_call_operand.hbm [shape: f32[32,64], index: 20, kind: input, shape index: {}]
  %s21 = inlined_call_operand.vmem [shape: f32[1,64], index: 21, kind: input, shape index: {}]
  %s22 = inlined_call_operand.vmem [shape: f32[64,32], index: 22, kind: input, shape index: {}]
  %s23 = inlined_call_operand.vmem [shape: f32[1,32], index: 23, kind: input, shape index: {}]
  %s24 = inlined_call_operand.vmem [shape: f32[1,32], index: 24, kind: input, shape index: {}]
  %s25 = inlined_call_operand.vmem [shape: f32[1,32], index: 25, kind: input, shape index: {}]
  %s26 = inlined_call_operand.hbm [shape: f32[2,8,32], index: 26, kind: output, shape index: {0}]
  %s27 = inlined_call_operand.hbm [shape: f32[2,8,32], index: 27, kind: output, shape index: {1}]
  %s28 = inlined_call_operand.hbm [shape: f32[2,8,32], index: 28, kind: output, shape index: {2}]
  %29 = xla_tuple %s26, %s27, %s28
  %s30 = sld [smem:[#allocation0]]
  $region170: #{tpu_custom_call.1} parent=0
    _
  %s32 = ssub.s32 1, %s30
  %s33 = scalar_select 0, %s32, %s30
  $region1: #{tpu_custom_call.1} parent=0
    #allocation2 [shape = 'u8[8192]{0}', space=vmem, size = 0x2000, scoped, tag = 'input window, operand 0, single buffered']
    #allocation3 [shape = 's32[1]{0}', space=sflag, size = 0x4, scoped, tag = 'scoped memory for tpu_custom_call.1']
    #allocation4 [shape = 's32[1]{0}', space=sflag, size = 0x4, scoped, tag = 'scoped memory for tpu_custom_call.1']
    #allocation5 [shape = 'u8[8192]{0}', space=vmem, size = 0x2000, scoped, tag = 'input window, operand 1, single buffered']
    #allocation6 [shape = 's32[1]{0}', space=sflag, size = 0x4, scoped, tag = 'scoped memory for tpu_custom_call.1']
    #allocation7 [shape = 'u8[8192]{0}', space=vmem, size = 0x2000, scoped, tag = 'input window, operand 4, single buffered']
    #allocation8 [shape = 'u8[8192]{0}', space=vmem, size = 0x2000, scoped, tag = 'input window, operand 5, single buffered']
    #allocation9 [shape = 's32[1]{0}', space=sflag, size = 0x4, scoped, tag = 'scoped memory for tpu_custom_call.1']
    #allocation10 [shape = 'u8[512]{0}', space=vmem, size = 0x400, scoped, tag = 'input window, operand 9, single buffered']
    #allocation11 [shape = 'u8[512]{0}', space=vmem, size = 0x400, scoped, tag = 'input window, operand 10, single buffered']
    #allocation12 [shape = 's32[1]{0}', space=sflag, size = 0x4, scoped, tag = 'scoped memory for tpu_custom_call.1']
    #allocation13 [shape = 'u8[512]{0}', space=vmem, size = 0x400, scoped, tag = 'input window, operand 11, single buffered']
    #allocation14 [shape = 'u8[512]{0}', space=vmem, size = 0x400, scoped, tag = 'input window, operand 13, single buffered']
    #allocation15 [shape = 's32[1]{0}', space=sflag, size = 0x4, scoped, tag = 'scoped memory for tpu_custom_call.1']
    #allocation16 [shape = 'u8[512]{0}', space=vmem, size = 0x400, scoped, tag = 'input window, operand 15, single buffered']
    #allocation17 [shape = 'u8[16384]{0}', space=vmem, size = 0x4000, scoped, tag = 'input window, operand 20, single buffered']
    #allocation18 [shape = 's32[1]{0}', space=sflag, size = 0x4, scoped, tag = 'scoped memory for tpu_custom_call.1']
    #allocation19 [shape = 'u8[8192]{0}', space=vmem, size = 0x2000, scoped, tag = 'output window, operand 0, single buffered']
    #allocation20 [shape = 'u8[8192]{0}', space=vmem, size = 0x2000, scoped, tag = 'output window, operand 1, single buffered']
    #allocation21 [shape = 's32[1]{0}', space=sflag, size = 0x4, scoped, tag = 'scoped memory for tpu_custom_call.1']
    #allocation22 [shape = 'u8[8192]{0}', space=vmem, size = 0x2000, scoped, tag = 'output window, operand 2, single buffered']
    %34 = vsyncpa [#allocation3], 0
    %35 = vsyncpa [#allocation6], 0
    %36 = vsyncpa [#allocation9], 0
    %37 = vsyncpa [#allocation12], 0
    %38 = vsyncpa [#allocation15], 0
    %39 = vsyncpa [#allocation18], 0
    %40 = vsyncpa [#allocation4], 0
    %41 = vsyncpa [#allocation21], 0
    // Predicated region
    $region2: #{tpu_custom_call.1} parent=1 // pred_check
      _
    $region3: #{tpu_custom_call.1} parent=1 // pred_check_branch
      %43 = sbr.rel (0) target = $region5
    $region4: #{tpu_custom_call.1} parent=1 // pred_region
      %s45 = ssub.s32 256, 256
      %46 = vsyncadd [#allocation3], %s45
      %s47 = sshll.u32 [#allocation2], 4
      %s48 = int_to_ptr.vmem [resolvable:$true] %s47
      %53 = dma.hbm_to_vmem [thread:$0]  %s0, 256, %s48, [#allocation3], 128, 128, 8
    $region5: #{tpu_custom_call.1} parent=1 // pred_fallthru
      _
    // Predicated region
    $region6: #{tpu_custom_call.1} parent=1 // pred_check
      _
    $region7: #{tpu_custom_call.1} parent=1 // pred_check_branch
      %55 = sbr.rel (0) target = $region9
    $region8: #{tpu_custom_call.1} parent=1 // pred_region
      %s57 = ssub.s32 256, 256
      %58 = vsyncadd [#allocation6], %s57
      %s59 = sshll.u32 [#allocation5], 4
      %s60 = int_to_ptr.vmem [resolvable:$true] %s59
      %65 = dma.hbm_to_vmem [thread:$0]  %s1, 256, %s60, [#allocation6], 128, 128, 8
    $region9: #{tpu_custom_call.1} parent=1 // pred_fallthru
      _
    // Predicated region
    $region10: #{tpu_custom_call.1} parent=1 // pred_check
      _
    $region11: #{tpu_custom_call.1} parent=1 // pred_check_branch
      %67 = sbr.rel (0) target = $region13
    $region12: #{tpu_custom_call.1} parent=1 // pred_region
      _
    $region13: #{tpu_custom_call.1} parent=1 // pred_fallthru
      _
    // Predicated region
    $region14: #{tpu_custom_call.1} parent=1 // pred_check
      _
    $region15: #{tpu_custom_call.1} parent=1 // pred_check_branch
      %69 = sbr.rel (0) target = $region17
    $region16: #{tpu_custom_call.1} parent=1 // pred_region
      _
    $region17: #{tpu_custom_call.1} parent=1 // pred_fallthru
      _
    // Predicated region
    $region18: #{tpu_custom_call.1} parent=1 // pred_check
      _
    $region19: #{tpu_custom_call.1} parent=1 // pred_check_branch
      %71 = sbr.rel (0) target = $region21
    $region20: #{tpu_custom_call.1} parent=1 // pred_region
      %s73 = ssub.s32 256, 256
      %74 = vsyncadd [#allocation6], %s73
      %s75 = sshll.u32 [#allocation7], 4
      %s76 = int_to_ptr.vmem [resolvable:$true] %s75
      %81 = dma.hbm_to_vmem [thread:$0]  %s4, 256, %s76, [#allocation6], 128, 128, 8
    $region21: #{tpu_custom_call.1} parent=1 // pred_fallthru
      _
    // Predicated region
    $region22: #{tpu_custom_call.1} parent=1 // pred_check
      _
    $region23: #{tpu_custom_call.1} parent=1 // pred_check_branch
      %83 = sbr.rel (0) target = $region25
    $region24: #{tpu_custom_call.1} parent=1 // pred_region
      %s85 = ssub.s32 256, 256
      %86 = vsyncadd [#allocation9], %s85
      %s87 = sshll.u32 [#allocation8], 4
      %s88 = int_to_ptr.vmem [resolvable:$true] %s87
      %93 = dma.hbm_to_vmem [thread:$0]  %s5, 256, %s88, [#allocation9], 128, 128, 8
    $region25: #{tpu_custom_call.1} parent=1 // pred_fallthru
      _
    // Predicated region
    $region26: #{tpu_custom_call.1} parent=1 // pred_check
      _
    $region27: #{tpu_custom_call.1} parent=1 // pred_check_branch
      %95 = sbr.rel (0) target = $region29
    $region28: #{tpu_custom_call.1} parent=1 // pred_region
      _
    $region29: #{tpu_custom_call.1} parent=1 // pred_fallthru
      _
    // Predicated region
    $region30: #{tpu_custom_call.1} parent=1 // pred_check
      _
    $region31: #{tpu_custom_call.1} parent=1 // pred_check_branch
      %97 = sbr.rel (0) target = $region33
    $region32: #{tpu_custom_call.1} parent=1 // pred_region
      _
    $region33: #{tpu_custom_call.1} parent=1 // pred_fallthru
      _
    // Predicated region
    $region34: #{tpu_custom_call.1} parent=1 // pred_check
      _
    $region35: #{tpu_custom_call.1} parent=1 // pred_check_branch
      %99 = sbr.rel (0) target = $region37
    $region36: #{tpu_custom_call.1} parent=1 // pred_region
      _
    $region37: #{tpu_custom_call.1} parent=1 // pred_fallthru
      _
    // Predicated region
    $region38: #{tpu_custom_call.1} parent=1 // pred_check
      _
    $region39: #{tpu_custom_call.1} parent=1 // pred_check_branch
      %101 = sbr.rel (0) target = $region41
    $region40: #{tpu_custom_call.1} parent=1 // pred_region
      %s103 = ssub.s32 16, 16
      %104 = vsyncadd [#allocation9], %s103
      %s106 = sshll.u32 [#allocation10], 4
      %s107 = int_to_ptr.vmem [resolvable:$true] %s106
      %109 = dma.hbm_to_vmem [thread:$0]  %s9, 16, %s107, [#allocation9]
    $region41: #{tpu_custom_call.1} parent=1 // pred_fallthru
      _
    // Predicated region
    $region42: #{tpu_custom_call.1} parent=1 // pred_check
      _
    $region43: #{tpu_custom_call.1} parent=1 // pred_check_branch
      %111 = sbr.rel (0) target = $region45
    $region44: #{tpu_custom_call.1} parent=1 // pred_region
      %s113 = ssub.s32 16, 16
      %114 = vsyncadd [#allocation12], %s113
      %s116 = sshll.u32 [#allocation11], 4
      %s117 = int_to_ptr.vmem [resolvable:$true] %s116
      %119 = dma.hbm_to_vmem [thread:$0]  %s10, 16, %s117, [#allocation12]
    $region45: #{tpu_custom_call.1} parent=1 // pred_fallthru
      _
    // Predicated region
    $region46: #{tpu_custom_call.1} parent=1 // pred_check
      _
    $region47: #{tpu_custom_call.1} parent=1 // pred_check_branch
      %121 = sbr.rel (0) target = $region49
    $region48: #{tpu_custom_call.1} parent=1 // pred_region
      %s123 = ssub.s32 16, 16
      %124 = vsyncadd [#allocation12], %s123
      %s126 = sshll.u32 [#allocation13], 4
      %s127 = int_to_ptr.vmem [resolvable:$true] %s126
      %129 = dma.hbm_to_vmem [thread:$0]  %s11, 16, %s127, [#allocation12]
    $region49: #{tpu_custom_call.1} parent=1 // pred_fallthru
      _
    // Predicated region
    $region50: #{tpu_custom_call.1} parent=1 // pred_check
      _
    $region51: #{tpu_custom_call.1} parent=1 // pred_check_branch
      %131 = sbr.rel (0) target = $region53
    $region52: #{tpu_custom_call.1} parent=1 // pred_region
      _
    $region53: #{tpu_custom_call.1} parent=1 // pred_fallthru
      _
    // Predicated region
    $region54: #{tpu_custom_call.1} parent=1 // pred_check
      _
    $region55: #{tpu_custom_call.1} parent=1 // pred_check_branch
      %133 = sbr.rel (0) target = $region57
    $region56: #{tpu_custom_call.1} parent=1 // pred_region
      %s135 = ssub.s32 16, 16
      %136 = vsyncadd [#allocation15], %s135
      %s138 = sshll.u32 [#allocation14], 4
      %s139 = int_to_ptr.vmem [resolvable:$true] %s138
      %141 = dma.hbm_to_vmem [thread:$0]  %s13, 16, %s139, [#allocation15]
    $region57: #{tpu_custom_call.1} parent=1 // pred_fallthru
      _
    // Predicated region
    $region58: #{tpu_custom_call.1} parent=1 // pred_check
      _
    $region59: #{tpu_custom_call.1} parent=1 // pred_check_branch
      %143 = sbr.rel (0) target = $region61
    $region60: #{tpu_custom_call.1} parent=1 // pred_region
      _
    $region61: #{tpu_custom_call.1} parent=1 // pred_fallthru
      _
    // Predicated region
    $region62: #{tpu_custom_call.1} parent=1 // pred_check
      _
    $region63: #{tpu_custom_call.1} parent=1 // pred_check_branch
      %145 = sbr.rel (0) target = $region65
    $region64: #{tpu_custom_call.1} parent=1 // pred_region
      %s147 = ssub.s32 16, 16
      %148 = vsyncadd [#allocation15], %s147
      %s150 = sshll.u32 [#allocation16], 4
      %s151 = int_to_ptr.vmem [resolvable:$true] %s150
      %153 = dma.hbm_to_vmem [thread:$0]  %s15, 16, %s151, [#allocation15]
    $region65: #{tpu_custom_call.1} parent=1 // pred_fallthru
      _
    // Predicated region
    $region66: #{tpu_custom_call.1} parent=1 // pred_check
      _
    $region67: #{tpu_custom_call.1} parent=1 // pred_check_branch
      %155 = sbr.rel (0) target = $region69
    $region68: #{tpu_custom_call.1} parent=1 // pred_region
      _
    $region69: #{tpu_custom_call.1} parent=1 // pred_fallthru
      _
    // Predicated region
    $region70: #{tpu_custom_call.1} parent=1 // pred_check
      _
    $region71: #{tpu_custom_call.1} parent=1 // pred_check_branch
      %157 = sbr.rel (0) target = $region73
    $region72: #{tpu_custom_call.1} parent=1 // pred_region
      _
    $region73: #{tpu_custom_call.1} parent=1 // pred_fallthru
      _
    // Predicated region
    $region74: #{tpu_custom_call.1} parent=1 // pred_check
      _
    $region75: #{tpu_custom_call.1} parent=1 // pred_check_branch
      %159 = sbr.rel (0) target = $region77
    $region76: #{tpu_custom_call.1} parent=1 // pred_region
      _
    $region77: #{tpu_custom_call.1} parent=1 // pred_fallthru
      _
    // Predicated region
    $region78: #{tpu_custom_call.1} parent=1 // pred_check
      _
    $region79: #{tpu_custom_call.1} parent=1 // pred_check_branch
      %161 = sbr.rel (0) target = $region81
    $region80: #{tpu_custom_call.1} parent=1 // pred_region
      _
    $region81: #{tpu_custom_call.1} parent=1 // pred_fallthru
      _
    // Predicated region
    $region82: #{tpu_custom_call.1} parent=1 // pred_check
      _
    $region83: #{tpu_custom_call.1} parent=1 // pred_check_branch
      %163 = sbr.rel (0) target = $region85
    $region84: #{tpu_custom_call.1} parent=1 // pred_region
      %s165 = ssub.s32 512, 512
      %166 = vsyncadd [#allocation18], %s165
      %s167 = sshll.u32 [#allocation17], 4
      %s168 = int_to_ptr.vmem [resolvable:$true] %s167
      %173 = dma.hbm_to_vmem [thread:$0]  %s20, 512, %s168, [#allocation18], 128, 128, 8
    $region85: #{tpu_custom_call.1} parent=1 // pred_fallthru
      _
    // Predicated region
    $region86: #{tpu_custom_call.1} parent=1 // pred_check
      _
    $region87: #{tpu_custom_call.1} parent=1 // pred_check_branch
      %175 = sbr.rel (0) target = $region89
    $region88: #{tpu_custom_call.1} parent=1 // pred_region
      _
    $region89: #{tpu_custom_call.1} parent=1 // pred_fallthru
      _
    // Predicated region
    $region90: #{tpu_custom_call.1} parent=1 // pred_check
      _
    $region91: #{tpu_custom_call.1} parent=1 // pred_check_branch
      %177 = sbr.rel (0) target = $region93
    $region92: #{tpu_custom_call.1} parent=1 // pred_region
      _
    $region93: #{tpu_custom_call.1} parent=1 // pred_fallthru
      _
    // Predicated region
    $region94: #{tpu_custom_call.1} parent=1 // pred_check
      _
    $region95: #{tpu_custom_call.1} parent=1 // pred_check_branch
      %179 = sbr.rel (0) target = $region97
    $region96: #{tpu_custom_call.1} parent=1 // pred_region
      _
    $region97: #{tpu_custom_call.1} parent=1 // pred_fallthru
      _
    // Predicated region
    $region98: #{tpu_custom_call.1} parent=1 // pred_check
      _
    $region99: #{tpu_custom_call.1} parent=1 // pred_check_branch
      %181 = sbr.rel (0) target = $region101
    $region100: #{tpu_custom_call.1} parent=1 // pred_region
      _
    $region101: #{tpu_custom_call.1} parent=1 // pred_fallthru
      _
    // Predicated region
    $region102: #{tpu_custom_call.1} parent=1 // pred_check
      _
    $region103: #{tpu_custom_call.1} parent=1 // pred_check_branch
      %183 = sbr.rel (0) target = $region105
    $region104: #{tpu_custom_call.1} parent=1 // pred_region
      _
    $region105: #{tpu_custom_call.1} parent=1 // pred_fallthru
      _
    // Predicated region
    $region106: #{tpu_custom_call.1} parent=1 // pred_check
      _
    $region107: #{tpu_custom_call.1} parent=1 // pred_check_branch
      %185 = sbr.rel (0) target = $region109
    $region108: #{tpu_custom_call.1} parent=1 // pred_region
      %186 = dma.done [#allocation3], 256
    $region109: #{tpu_custom_call.1} parent=1 // pred_fallthru
      _
    // Predicated region
    $region110: #{tpu_custom_call.1} parent=1 // pred_check
      _
    $region111: #{tpu_custom_call.1} parent=1 // pred_check_branch
      %188 = sbr.rel (0) target = $region113
    $region112: #{tpu_custom_call.1} parent=1 // pred_region
      %189 = dma.done [#allocation6], 256
    $region113: #{tpu_custom_call.1} parent=1 // pred_fallthru
      _
    // Predicated region
    $region114: #{tpu_custom_call.1} parent=1 // pred_check
      _
    $region115: #{tpu_custom_call.1} parent=1 // pred_check_branch
      %191 = sbr.rel (0) target = $region117
    $region116: #{tpu_custom_call.1} parent=1 // pred_region
      %192 = dma.done [#allocation6], 256
    $region117: #{tpu_custom_call.1} parent=1 // pred_fallthru
      _
    // Predicated region
    $region118: #{tpu_custom_call.1} parent=1 // pred_check
      _
    $region119: #{tpu_custom_call.1} parent=1 // pred_check_branch
      %194 = sbr.rel (0) target = $region121
    $region120: #{tpu_custom_call.1} parent=1 // pred_region
      %195 = dma.done [#allocation9], 256
    $region121: #{tpu_custom_call.1} parent=1 // pred_fallthru
      _
    // Predicated region
    $region122: #{tpu_custom_call.1} parent=1 // pred_check
      _
    $region123: #{tpu_custom_call.1} parent=1 // pred_check_branch
      %197 = sbr.rel (0) target = $region125
    $region124: #{tpu_custom_call.1} parent=1 // pred_region
      %198 = dma.done [#allocation9], 16
    $region125: #{tpu_custom_call.1} parent=1 // pred_fallthru
      _
    // Predicated region
    $region126: #{tpu_custom_call.1} parent=1 // pred_check
      _
    $region127: #{tpu_custom_call.1} parent=1 // pred_check_branch
      %200 = sbr.rel (0) target = $region129
    $region128: #{tpu_custom_call.1} parent=1 // pred_region
      %201 = dma.done [#allocation12], 16
    $region129: #{tpu_custom_call.1} parent=1 // pred_fallthru
      _
    // Predicated region
    $region130: #{tpu_custom_call.1} parent=1 // pred_check
      _
    $region131: #{tpu_custom_call.1} parent=1 // pred_check_branch
      %203 = sbr.rel (0) target = $region133
    $region132: #{tpu_custom_call.1} parent=1 // pred_region
      %204 = dma.done [#allocation12], 16
    $region133: #{tpu_custom_call.1} parent=1 // pred_fallthru
      _
    // Predicated region
    $region134: #{tpu_custom_call.1} parent=1 // pred_check
      _
    $region135: #{tpu_custom_call.1} parent=1 // pred_check_branch
      %206 = sbr.rel (0) target = $region137
    $region136: #{tpu_custom_call.1} parent=1 // pred_region
      %207 = dma.done [#allocation15], 16
    $region137: #{tpu_custom_call.1} parent=1 // pred_fallthru
      _
    // Predicated region
    $region138: #{tpu_custom_call.1} parent=1 // pred_check
      _
    $region139: #{tpu_custom_call.1} parent=1 // pred_check_branch
      %209 = sbr.rel (0) target = $region141
    $region140: #{tpu_custom_call.1} parent=1 // pred_region
      %210 = dma.done [#allocation15], 16
    $region141: #{tpu_custom_call.1} parent=1 // pred_fallthru
      _
    // Predicated region
    $region142: #{tpu_custom_call.1} parent=1 // pred_check
      _
    $region143: #{tpu_custom_call.1} parent=1 // pred_check_branch
      %212 = sbr.rel (0) target = $region145
    $region144: #{tpu_custom_call.1} parent=1 // pred_region
      %213 = dma.done [#allocation18], 512
    $region145: #{tpu_custom_call.1} parent=1 // pred_fallthru
      _
    %v214 = vld [vmem:[#allocation2] sm:$0xff]
    %v215 = vld [vmem:[#allocation2 + $0x8] sm:$0xff]
    %v216 = vld [vmem:[%s6] sm:$0xff]
    %v217 = vld [vmem:[%s6 + $0x8] sm:$0xff]
    %v218 = vld [vmem:[%s6 + $0x10] sm:$0xff]
    %v219 = vld [vmem:[%s6 + $0x18] sm:$0xff]
    %v220 = vld [vmem:[%s7] sm:$0x1]
    %v222 = vlaneseq
    %v223 = vshrl.u32 %v222, 7
    %v224 = vsub.s32 0, %v223
    %v225 = vrot.slane %v220, %v224
    %vm227 = vcmask 261120
    %v229 = vsel %vm227, %v214, 0
    %v232 = vsel %vm227, %v215, 0
    %234 = vmatprep.subr.mxu0 0.0
    %235 = vmatpush1.msra.mxu0 0.0
    %236 = vmatprep.subr.mxu0 0.0
    %237 = vmatpush1.msra.mxu0 0.0
    %238 = vmatprep.subr.mxu0 0.0
    %239 = vmatpush1.msra.mxu0 0.0
    %240 = vmatprep.subr.mxu0 0.0
    %241 = vmatpush1.msra.mxu0 0.0
    %242 = vmatprep.subr.mxu0 0.0
    %243 = vmatpush1.msra.mxu0 0.0
    %244 = vmatprep.subr.mxu0 0.0
    %245 = vmatpush1.msra.mxu0 0.0
    %246 = vmatprep.subr.mxu0 0.0
    %247 = vmatpush1.msra.mxu0 0.0
    %248 = vmatprep.subr.mxu0 0.0
    %249 = vmatpush1.msra.mxu0 0.0
    %250 = vmatprep.subr.mxu0 0.0
    %251 = vmatpush1.msra.mxu0 0.0
    %252 = vmatprep.subr.mxu0 0.0
    %253 = vmatpush1.msra.mxu0 0.0
    %254 = vmatprep.subr.mxu0 0.0
    %255 = vmatpush1.msra.mxu0 0.0
    %256 = vmatprep.subr.mxu0 0.0
    %257 = vmatpush1.msra.mxu0 0.0
    %258 = vmatprep.subr.mxu0 0.0
    %259 = vmatpush1.msra.mxu0 %v219
    %260 = vmatprep.subr.mxu0 0.0
    %261 = vmatpush1.msra.mxu0 %v218
    %262 = vmatprep.subr.mxu0 0.0
    %263 = vmatpush1.msra.mxu0 %v217
    %264 = vmatprep.subr.mxu0 0.0
    %265 = vmatpush1.msra.mxu0 %v216
    %266 = vmatprep.subr.mxu0 0.0
    %267 = vmatpush2.msra.mxu0 0.0
    %268 = vmatprep.subr.mxu0 0.0
    %269 = vmatpush2.msra.mxu0 0.0
    %270 = vmatprep.subr.mxu0 0.0
    %271 = vmatpush2.msra.mxu0 0.0
    %272 = vmatprep.subr.mxu0 0.0
    %273 = vmatpush2.msra.mxu0 0.0
    %274 = vmatprep.subr.mxu0 0.0
    %275 = vmatpush2.msra.mxu0 0.0
    %276 = vmatprep.subr.mxu0 0.0
    %277 = vmatpush2.msra.mxu0 0.0
    %278 = vmatprep.subr.mxu0 0.0
    %279 = vmatpush2.msra.mxu0 0.0
    %280 = vmatprep.subr.mxu0 0.0
    %281 = vmatpush2.msra.mxu0 0.0
    %282 = vmatprep.subr.mxu0 0.0
    %283 = vmatpush2.msra.mxu0 0.0
    %284 = vmatprep.subr.mxu0 0.0
    %285 = vmatpush2.msra.mxu0 0.0
    %286 = vmatprep.subr.mxu0 0.0
    %287 = vmatpush2.msra.mxu0 0.0
    %288 = vmatprep.subr.mxu0 0.0
    %289 = vmatpush2.msra.mxu0 0.0
    %290 = vmatprep.subr.mxu0 0.0
    %291 = vmatpush2.msra.mxu0 0.0
    %292 = vmatprep.subr.mxu0 0.0
    %293 = vmatpush2.msra.mxu0 0.0
    %294 = vmatprep.subr.mxu0 0.0
    %295 = vmatpush2.msra.mxu0 0.0
    %296 = vmatprep.subr.mxu0 0.0
    %297 = vmatpush2.msra.mxu0 0.0
    %298 = vmatprep.mubr.f32.mxu0 0.0
    %299 = vmatmul.mubr.f32.gmra.mxu0 %v229
    %v300 = vpop.f32.mrf.mxu0
    %v301 = vadd.f32 %v225, %v300
    %v302 = vpop.f32.mrf.mxu0
    %303 = vmatprep.mubr.f32.mxu0 0.0
    %304 = vmatmul.mubr.f32.gmra.mxu0 %v232
    %v305 = vpop.f32.mrf.mxu0
    %v306 = vadd.f32 %v225, %v305
    %v307 = vpop.f32.mrf.mxu0
    %308 = vdwg.mxu0
    %v309 = vld [vmem:[#allocation7] sm:$0xff]
    %v310 = vld [vmem:[#allocation7 + $0x8] sm:$0xff]
    %312 = vrot.lane.b32.xlu0 %v301, 96
    %v313 = vpop.permute.xlu0 %312
    %vm314 = vcmask 64512
    %v315 = vsel %vm314, %v301, 0
    %v317 = vsel %vm314, %v313, 0
    %319 = vmatprep.subr.mxu0 0.0
    %320 = vmatpush1.xpose.msra.mxu0 0.0
    %321 = vmatprep.subr.mxu0 0.0
    %322 = vmatpush1.xpose.msra.mxu0 0.0
    %323 = vmatprep.subr.mxu0 0.0
    %324 = vmatpush1.xpose.msra.mxu0 0.0
    %325 = vmatprep.subr.mxu0 0.0
    %326 = vmatpush1.xpose.msra.mxu0 0.0
    %327 = vmatprep.subr.mxu0 0.0
    %328 = vmatpush1.xpose.msra.mxu0 0.0
    %329 = vmatprep.subr.mxu0 0.0
    %330 = vmatpush1.xpose.msra.mxu0 0.0
    %331 = vmatprep.subr.mxu0 0.0
    %332 = vmatpush1.xpose.msra.mxu0 0.0
    %333 = vmatprep.subr.mxu0 0.0
    %334 = vmatpush1.xpose.msra.mxu0 0.0
    %335 = vmatprep.subr.mxu0 0.0
    %336 = vmatpush1.xpose.msra.mxu0 0.0
    %337 = vmatprep.subr.mxu0 0.0
    %338 = vmatpush1.xpose.msra.mxu0 0.0
    %339 = vmatprep.subr.mxu0 0.0
    %340 = vmatpush1.xpose.msra.mxu0 0.0
    %341 = vmatprep.subr.mxu0 0.0
    %342 = vmatpush1.xpose.msra.mxu0 0.0
    %343 = vmatprep.subr.mxu0 0.0
    %344 = vmatpush1.xpose.msra.mxu0 0.0
    %345 = vmatprep.subr.mxu0 0.0
    %346 = vmatpush1.xpose.msra.mxu0 0.0
    %347 = vmatprep.subr.mxu0 0.0
    %348 = vmatpush1.xpose.msra.mxu0 0.0
    %349 = vmatprep.subr.mxu0 0.0
    %350 = vmatpush1.xpose.msra.mxu0 %v317
    %351 = vmatprep.subr.mxu0 0.0
    %352 = vmatpush2.xpose.msra.mxu0 0.0
    %353 = vmatprep.subr.mxu0 0.0
    %354 = vmatpush2.xpose.msra.mxu0 0.0
    %355 = vmatprep.subr.mxu0 0.0
    %356 = vmatpush2.xpose.msra.mxu0 0.0
    %357 = vmatprep.subr.mxu0 0.0
    %358 = vmatpush2.xpose.msra.mxu0 0.0
    %359 = vmatprep.subr.mxu0 0.0
    %360 = vmatpush2.xpose.msra.mxu0 0.0
    %361 = vmatprep.subr.mxu0 0.0
    %362 = vmatpush2.xpose.msra.mxu0 0.0
    %363 = vmatprep.subr.mxu0 0.0
    %364 = vmatpush2.xpose.msra.mxu0 0.0
    %365 = vmatprep.subr.mxu0 0.0
    %366 = vmatpush2.xpose.msra.mxu0 0.0
    %367 = vmatprep.subr.mxu0 0.0
    %368 = vmatpush2.xpose.msra.mxu0 0.0
    %369 = vmatprep.subr.mxu0 0.0
    %370 = vmatpush2.xpose.msra.mxu0 0.0
    %371 = vmatprep.subr.mxu0 0.0
    %372 = vmatpush2.xpose.msra.mxu0 0.0
    %373 = vmatprep.subr.mxu0 0.0
    %374 = vmatpush2.xpose.msra.mxu0 0.0
    %375 = vmatprep.subr.mxu0 0.0
    %376 = vmatpush2.xpose.msra.mxu0 0.0
    %377 = vmatprep.subr.mxu0 0.0
    %378 = vmatpush2.xpose.msra.mxu0 0.0
    %379 = vmatprep.subr.mxu0 0.0
    %380 = vmatpush2.xpose.msra.mxu0 0.0
    %381 = vmatprep.subr.mxu0 0.0
    %382 = vmatpush2.xpose.msra.mxu0 0.0
    %383 = vmatprep.mubr.f32.mxu0 0.0
    %384 = vmatmul.mubr.f32.gmra.mxu0 %v315
    %v385 = vpop.f32.mrf.mxu0
    %v386 = vadd.f32 0.0, %v385
    %v387 = vpop.f32.mrf.mxu0
    %388 = vdwg.mxu0
    %390 = vrot.lane.b32.xlu0 %v306, 96
    %v391 = vpop.permute.xlu0 %390
    %v392 = vsel %vm314, %v306, 0
    %v394 = vsel %vm314, %v391, 0
    %396 = vmatprep.subr.mxu0 0.0
    %397 = vmatpush1.xpose.msra.mxu0 0.0
    %398 = vmatprep.subr.mxu0 0.0
    %399 = vmatpush1.xpose.msra.mxu0 0.0
    %400 = vmatprep.subr.mxu0 0.0
    %401 = vmatpush1.xpose.msra.mxu0 0.0
    %402 = vmatprep.subr.mxu0 0.0
    %403 = vmatpush1.xpose.msra.mxu0 0.0
    %404 = vmatprep.subr.mxu0 0.0
    %405 = vmatpush1.xpose.msra.mxu0 0.0
    %406 = vmatprep.subr.mxu0 0.0
    %407 = vmatpush1.xpose.msra.mxu0 0.0
    %408 = vmatprep.subr.mxu0 0.0
    %409 = vmatpush1.xpose.msra.mxu0 0.0
    %410 = vmatprep.subr.mxu0 0.0
    %411 = vmatpush1.xpose.msra.mxu0 0.0
    %412 = vmatprep.subr.mxu0 0.0
    %413 = vmatpush1.xpose.msra.mxu0 0.0
    %414 = vmatprep.subr.mxu0 0.0
    %415 = vmatpush1.xpose.msra.mxu0 0.0
    %416 = vmatprep.subr.mxu0 0.0
    %417 = vmatpush1.xpose.msra.mxu0 0.0
    %418 = vmatprep.subr.mxu0 0.0
    %419 = vmatpush1.xpose.msra.mxu0 0.0
    %420 = vmatprep.subr.mxu0 0.0
    %421 = vmatpush1.xpose.msra.mxu0 0.0
    %422 = vmatprep.subr.mxu0 0.0
    %423 = vmatpush1.xpose.msra.mxu0 0.0
    %424 = vmatprep.subr.mxu0 0.0
    %425 = vmatpush1.xpose.msra.mxu0 0.0
    %426 = vmatprep.subr.mxu0 0.0
    %427 = vmatpush1.xpose.msra.mxu0 %v394
    %428 = vmatprep.subr.mxu0 0.0
    %429 = vmatpush2.xpose.msra.mxu0 0.0
    %430 = vmatprep.subr.mxu0 0.0
    %431 = vmatpush2.xpose.msra.mxu0 0.0
    %432 = vmatprep.subr.mxu0 0.0
    %433 = vmatpush2.xpose.msra.mxu0 0.0
    %434 = vmatprep.subr.mxu0 0.0
    %435 = vmatpush2.xpose.msra.mxu0 0.0
    %436 = vmatprep.subr.mxu0 0.0
    %437 = vmatpush2.xpose.msra.mxu0 0.0
    %438 = vmatprep.subr.mxu0 0.0
    %439 = vmatpush2.xpose.msra.mxu0 0.0
    %440 = vmatprep.subr.mxu0 0.0
    %441 = vmatpush2.xpose.msra.mxu0 0.0
    %442 = vmatprep.subr.mxu0 0.0
    %443 = vmatpush2.xpose.msra.mxu0 0.0
    %444 = vmatprep.subr.mxu0 0.0
    %445 = vmatpush2.xpose.msra.mxu0 0.0
    %446 = vmatprep.subr.mxu0 0.0
    %447 = vmatpush2.xpose.msra.mxu0 0.0
    %448 = vmatprep.subr.mxu0 0.0
    %449 = vmatpush2.xpose.msra.mxu0 0.0
    %450 = vmatprep.subr.mxu0 0.0
    %451 = vmatpush2.xpose.msra.mxu0 0.0
    %452 = vmatprep.subr.mxu0 0.0
    %453 = vmatpush2.xpose.msra.mxu0 0.0
    %454 = vmatprep.subr.mxu0 0.0
    %455 = vmatpush2.xpose.msra.mxu0 0.0
    %456 = vmatprep.subr.mxu0 0.0
    %457 = vmatpush2.xpose.msra.mxu0 0.0
    %458 = vmatprep.subr.mxu0 0.0
    %459 = vmatpush2.xpose.msra.mxu0 0.0
    %460 = vmatprep.mubr.f32.mxu0 0.0
    %461 = vmatmul.mubr.f32.gmra.mxu0 %v392
    %v462 = vpop.f32.mrf.mxu0
    %v463 = vadd.f32 0.0, %v462
    %v464 = vpop.f32.mrf.mxu0
    %465 = vdwg.mxu0
    %v466 = vmul.f32 %v386, 0.35355338
    %v467 = vmul.f32 %v463, 0.35355338
    %vm468 = vcmp.gt.f32.partialorder %v309, 0.0
    %vm469 = vcmp.gt.f32.partialorder %v310, 0.0
    %v470 = vsel %vm468, -1e+30, %v466
    %v471 = vsel %vm469, -1e+30, %v467
    %v472 = vsel %vm314, %v470, -inf
    %473 = vmax.xlane.f32.xlu0 %v472
    %v474 = vpop.xlane.xlu0 %473
    %v475 = vsel %vm314, %v471, -inf
    %476 = vmax.xlane.f32.xlu0 %v475
    %v477 = vpop.xlane.xlu0 %476
    %v478 = vsub.f32 %v470, %v474
    %v479 = vsub.f32 %v471, %v477
    %v480 = vmul.f32 %v478, 1.442695
    %v481 = vpow.pop %v480
    %v482 = vmul.f32 %v479, 1.442695
    %v483 = vpow.pop %v482
    %v484 = vsel %vm314, %v481, 0.0
    %485 = vadd.xlane.f32.xlu0 %v484
    %v486 = vpop.xlane.xlu0 %485
    %v487 = vsel %vm314, %v483, 0.0
    %488 = vadd.xlane.f32.xlu0 %v487
    %v489 = vpop.xlane.xlu0 %488
    %v490 = vrcp.pop %v486
    %v491 = vrcp.pop %v489
    %v492 = vmul.f32 %v481, %v490
    %v493 = vmul.f32 %v483, %v491
    %494 = vrot.lane.b32.xlu0 %v301, 64
    %v495 = vpop.permute.xlu0 %494
    %v498 = vsel %vm314, %v492, 0
    %500 = vmatprep.subr.mxu0 0.0
    %501 = vmatpush1.msra.mxu0 0.0
    %502 = vmatprep.subr.mxu0 0.0
    %503 = vmatpush1.msra.mxu0 0.0
    %504 = vmatprep.subr.mxu0 0.0
    %505 = vmatpush1.msra.mxu0 0.0
    %506 = vmatprep.subr.mxu0 0.0
    %507 = vmatpush1.msra.mxu0 0.0
    %508 = vmatprep.subr.mxu0 0.0
    %509 = vmatpush1.msra.mxu0 0.0
    %510 = vmatprep.subr.mxu0 0.0
    %511 = vmatpush1.msra.mxu0 0.0
    %512 = vmatprep.subr.mxu0 0.0
    %513 = vmatpush1.msra.mxu0 0.0
    %514 = vmatprep.subr.mxu0 0.0
    %515 = vmatpush1.msra.mxu0 0.0
    %516 = vmatprep.subr.mxu0 0.0
    %517 = vmatpush1.msra.mxu0 0.0
    %518 = vmatprep.subr.mxu0 0.0
    %519 = vmatpush1.msra.mxu0 0.0
    %520 = vmatprep.subr.mxu0 0.0
    %521 = vmatpush1.msra.mxu0 0.0
    %522 = vmatprep.subr.mxu0 0.0
    %523 = vmatpush1.msra.mxu0 0.0
    %524 = vmatprep.subr.mxu0 0.0
    %525 = vmatpush1.msra.mxu0 0.0
    %526 = vmatprep.subr.mxu0 0.0
    %527 = vmatpush1.msra.mxu0 0.0
    %528 = vmatprep.subr.mxu0 0.0
    %529 = vmatpush1.msra.mxu0 0.0
    %530 = vmatprep.subr.mxu0 0.0
    %531 = vmatpush1.msra.mxu0 %v495
    %532 = vmatprep.subr.mxu0 0.0
    %533 = vmatpush2.msra.mxu0 0.0
    %534 = vmatprep.subr.mxu0 0.0
    %535 = vmatpush2.msra.mxu0 0.0
    %536 = vmatprep.subr.mxu0 0.0
    %537 = vmatpush2.msra.mxu0 0.0
    %538 = vmatprep.subr.mxu0 0.0
    %539 = vmatpush2.msra.mxu0 0.0
    %540 = vmatprep.subr.mxu0 0.0
    %541 = vmatpush2.msra.mxu0 0.0
    %542 = vmatprep.subr.mxu0 0.0
    %543 = vmatpush2.msra.mxu0 0.0
    %544 = vmatprep.subr.mxu0 0.0
    %545 = vmatpush2.msra.mxu0 0.0
    %546 = vmatprep.subr.mxu0 0.0
    %547 = vmatpush2.msra.mxu0 0.0
    %548 = vmatprep.subr.mxu0 0.0
    %549 = vmatpush2.msra.mxu0 0.0
    %550 = vmatprep.subr.mxu0 0.0
    %551 = vmatpush2.msra.mxu0 0.0
    %552 = vmatprep.subr.mxu0 0.0
    %553 = vmatpush2.msra.mxu0 0.0
    %554 = vmatprep.subr.mxu0 0.0
    %555 = vmatpush2.msra.mxu0 0.0
    %556 = vmatprep.subr.mxu0 0.0
    %557 = vmatpush2.msra.mxu0 0.0
    %558 = vmatprep.subr.mxu0 0.0
    %559 = vmatpush2.msra.mxu0 0.0
    %560 = vmatprep.subr.mxu0 0.0
    %561 = vmatpush2.msra.mxu0 0.0
    %562 = vmatprep.subr.mxu0 0.0
    %563 = vmatpush2.msra.mxu0 0.0
    %564 = vmatprep.mubr.f32.mxu0 0.0
    %565 = vmatmul.mubr.f32.gmra.mxu0 %v498
    %v566 = vpop.f32.mrf.mxu0
    %v567 = vadd.f32 0.0, %v566
    %v568 = vpop.f32.mrf.mxu0
    %569 = vdwg.mxu0
    %570 = vrot.lane.b32.xlu0 %v306, 64
    %v571 = vpop.permute.xlu0 %570
    %v574 = vsel %vm314, %v493, 0
    %576 = vmatprep.subr.mxu0 0.0
    %577 = vmatpush1.msra.mxu0 0.0
    %578 = vmatprep.subr.mxu0 0.0
    %579 = vmatpush1.msra.mxu0 0.0
    %580 = vmatprep.subr.mxu0 0.0
    %581 = vmatpush1.msra.mxu0 0.0
    %582 = vmatprep.subr.mxu0 0.0
    %583 = vmatpush1.msra.mxu0 0.0
    %584 = vmatprep.subr.mxu0 0.0
    %585 = vmatpush1.msra.mxu0 0.0
    %586 = vmatprep.subr.mxu0 0.0
    %587 = vmatpush1.msra.mxu0 0.0
    %588 = vmatprep.subr.mxu0 0.0
    %589 = vmatpush1.msra.mxu0 0.0
    %590 = vmatprep.subr.mxu0 0.0
    %591 = vmatpush1.msra.mxu0 0.0
    %592 = vmatprep.subr.mxu0 0.0
    %593 = vmatpush1.msra.mxu0 0.0
    %594 = vmatprep.subr.mxu0 0.0
    %595 = vmatpush1.msra.mxu0 0.0
    %596 = vmatprep.subr.mxu0 0.0
    %597 = vmatpush1.msra.mxu0 0.0
    %598 = vmatprep.subr.mxu0 0.0
    %599 = vmatpush1.msra.mxu0 0.0
    %600 = vmatprep.subr.mxu0 0.0
    %601 = vmatpush1.msra.mxu0 0.0
    %602 = vmatprep.subr.mxu0 0.0
    %603 = vmatpush1.msra.mxu0 0.0
    %604 = vmatprep.subr.mxu0 0.0
    %605 = vmatpush1.msra.mxu0 0.0
    %606 = vmatprep.subr.mxu0 0.0
    %607 = vmatpush1.msra.mxu0 %v571
    %608 = vmatprep.subr.mxu0 0.0
    %609 = vmatpush2.msra.mxu0 0.0
    %610 = vmatprep.subr.mxu0 0.0
    %611 = vmatpush2.msra.mxu0 0.0
    %612 = vmatprep.subr.mxu0 0.0
    %613 = vmatpush2.msra.mxu0 0.0
    %614 = vmatprep.subr.mxu0 0.0
    %615 = vmatpush2.msra.mxu0 0.0
    %616 = vmatprep.subr.mxu0 0.0
    %617 = vmatpush2.msra.mxu0 0.0
    %618 = vmatprep.subr.mxu0 0.0
    %619 = vmatpush2.msra.mxu0 0.0
    %620 = vmatprep.subr.mxu0 0.0
    %621 = vmatpush2.msra.mxu0 0.0
    %622 = vmatprep.subr.mxu0 0.0
    %623 = vmatpush2.msra.mxu0 0.0
    %624 = vmatprep.subr.mxu0 0.0
    %625 = vmatpush2.msra.mxu0 0.0
    %626 = vmatprep.subr.mxu0 0.0
    %627 = vmatpush2.msra.mxu0 0.0
    %628 = vmatprep.subr.mxu0 0.0
    %629 = vmatpush2.msra.mxu0 0.0
    %630 = vmatprep.subr.mxu0 0.0
    %631 = vmatpush2.msra.mxu0 0.0
    %632 = vmatprep.subr.mxu0 0.0
    %633 = vmatpush2.msra.mxu0 0.0
    %634 = vmatprep.subr.mxu0 0.0
    %635 = vmatpush2.msra.mxu0 0.0
    %636 = vmatprep.subr.mxu0 0.0
    %637 = vmatpush2.msra.mxu0 0.0
    %638 = vmatprep.subr.mxu0 0.0
    %639 = vmatpush2.msra.mxu0 0.0
    %640 = vmatprep.mubr.f32.mxu0 0.0
    %641 = vmatmul.mubr.f32.gmra.mxu0 %v574
    %v642 = vpop.f32.mrf.mxu0
    %v643 = vadd.f32 0.0, %v642
    %v644 = vpop.f32.mrf.mxu0
    %645 = vdwg.mxu0
    %646 = vrot.lane.b32.xlu0 %v301, 120
    %v647 = vpop.permute.xlu0 %646
    %648 = vrot.lane.b32.xlu0 %v301, 88
    %v649 = vpop.permute.xlu0 %648
    %v650 = vsel %vm314, %v647, 0
    %v652 = vsel %vm314, %v649, 0
    %654 = vmatprep.subr.mxu0 0.0
    %655 = vmatpush1.xpose.msra.mxu0 0.0
    %656 = vmatprep.subr.mxu0 0.0
    %657 = vmatpush1.xpose.msra.mxu0 0.0
    %658 = vmatprep.subr.mxu0 0.0
    %659 = vmatpush1.xpose.msra.mxu0 0.0
    %660 = vmatprep.subr.mxu0 0.0
    %661 = vmatpush1.xpose.msra.mxu0 0.0
    %662 = vmatprep.subr.mxu0 0.0
    %663 = vmatpush1.xpose.msra.mxu0 0.0
    %664 = vmatprep.subr.mxu0 0.0
    %665 = vmatpush1.xpose.msra.mxu0 0.0
    %666 = vmatprep.subr.mxu0 0.0
    %667 = vmatpush1.xpose.msra.mxu0 0.0
    %668 = vmatprep.subr.mxu0 0.0
    %669 = vmatpush1.xpose.msra.mxu0 0.0
    %670 = vmatprep.subr.mxu0 0.0
    %671 = vmatpush1.xpose.msra.mxu0 0.0
    %672 = vmatprep.subr.mxu0 0.0
    %673 = vmatpush1.xpose.msra.mxu0 0.0
    %674 = vmatprep.subr.mxu0 0.0
    %675 = vmatpush1.xpose.msra.mxu0 0.0
    %676 = vmatprep.subr.mxu0 0.0
    %677 = vmatpush1.xpose.msra.mxu0 0.0
    %678 = vmatprep.subr.mxu0 0.0
    %679 = vmatpush1.xpose.msra.mxu0 0.0
    %680 = vmatprep.subr.mxu0 0.0
    %681 = vmatpush1.xpose.msra.mxu0 0.0
    %682 = vmatprep.subr.mxu0 0.0
    %683 = vmatpush1.xpose.msra.mxu0 0.0
    %684 = vmatprep.subr.mxu0 0.0
    %685 = vmatpush1.xpose.msra.mxu0 %v652
    %686 = vmatprep.subr.mxu0 0.0
    %687 = vmatpush2.xpose.msra.mxu0 0.0
    %688 = vmatprep.subr.mxu0 0.0
    %689 = vmatpush2.xpose.msra.mxu0 0.0
    %690 = vmatprep.subr.mxu0 0.0
    %691 = vmatpush2.xpose.msra.mxu0 0.0
    %692 = vmatprep.subr.mxu0 0.0
    %693 = vmatpush2.xpose.msra.mxu0 0.0
    %694 = vmatprep.subr.mxu0 0.0
    %695 = vmatpush2.xpose.msra.mxu0 0.0
    %696 = vmatprep.subr.mxu0 0.0
    %697 = vmatpush2.xpose.msra.mxu0 0.0
    %698 = vmatprep.subr.mxu0 0.0
    %699 = vmatpush2.xpose.msra.mxu0 0.0
    %700 = vmatprep.subr.mxu0 0.0
    %701 = vmatpush2.xpose.msra.mxu0 0.0
    %702 = vmatprep.subr.mxu0 0.0
    %703 = vmatpush2.xpose.msra.mxu0 0.0
    %704 = vmatprep.subr.mxu0 0.0
    %705 = vmatpush2.xpose.msra.mxu0 0.0
    %706 = vmatprep.subr.mxu0 0.0
    %707 = vmatpush2.xpose.msra.mxu0 0.0
    %708 = vmatprep.subr.mxu0 0.0
    %709 = vmatpush2.xpose.msra.mxu0 0.0
    %710 = vmatprep.subr.mxu0 0.0
    %711 = vmatpush2.xpose.msra.mxu0 0.0
    %712 = vmatprep.subr.mxu0 0.0
    %713 = vmatpush2.xpose.msra.mxu0 0.0
    %714 = vmatprep.subr.mxu0 0.0
    %715 = vmatpush2.xpose.msra.mxu0 0.0
    %716 = vmatprep.subr.mxu0 0.0
    %717 = vmatpush2.xpose.msra.mxu0 0.0
    %718 = vmatprep.mubr.f32.mxu0 0.0
    %719 = vmatmul.mubr.f32.gmra.mxu0 %v650
    %v720 = vpop.f32.mrf.mxu0
    %v721 = vadd.f32 0.0, %v720
    %v722 = vpop.f32.mrf.mxu0
    %723 = vdwg.mxu0
    %724 = vrot.lane.b32.xlu0 %v306, 120
    %v725 = vpop.permute.xlu0 %724
    %726 = vrot.lane.b32.xlu0 %v306, 88
    %v727 = vpop.permute.xlu0 %726
    %v728 = vsel %vm314, %v725, 0
    %v730 = vsel %vm314, %v727, 0
    %732 = vmatprep.subr.mxu0 0.0
    %733 = vmatpush1.xpose.msra.mxu0 0.0
    %734 = vmatprep.subr.mxu0 0.0
    %735 = vmatpush1.xpose.msra.mxu0 0.0
    %736 = vmatprep.subr.mxu0 0.0
    %737 = vmatpush1.xpose.msra.mxu0 0.0
    %738 = vmatprep.subr.mxu0 0.0
    %739 = vmatpush1.xpose.msra.mxu0 0.0
    %740 = vmatprep.subr.mxu0 0.0
    %741 = vmatpush1.xpose.msra.mxu0 0.0
    %742 = vmatprep.subr.mxu0 0.0
    %743 = vmatpush1.xpose.msra.mxu0 0.0
    %744 = vmatprep.subr.mxu0 0.0
    %745 = vmatpush1.xpose.msra.mxu0 0.0
    %746 = vmatprep.subr.mxu0 0.0
    %747 = vmatpush1.xpose.msra.mxu0 0.0
    %748 = vmatprep.subr.mxu0 0.0
    %749 = vmatpush1.xpose.msra.mxu0 0.0
    %750 = vmatprep.subr.mxu0 0.0
    %751 = vmatpush1.xpose.msra.mxu0 0.0
    %752 = vmatprep.subr.mxu0 0.0
    %753 = vmatpush1.xpose.msra.mxu0 0.0
    %754 = vmatprep.subr.mxu0 0.0
    %755 = vmatpush1.xpose.msra.mxu0 0.0
    %756 = vmatprep.subr.mxu0 0.0
    %757 = vmatpush1.xpose.msra.mxu0 0.0
    %758 = vmatprep.subr.mxu0 0.0
    %759 = vmatpush1.xpose.msra.mxu0 0.0
    %760 = vmatprep.subr.mxu0 0.0
    %761 = vmatpush1.xpose.msra.mxu0 0.0
    %762 = vmatprep.subr.mxu0 0.0
    %763 = vmatpush1.xpose.msra.mxu0 %v730
    %764 = vmatprep.subr.mxu0 0.0
    %765 = vmatpush2.xpose.msra.mxu0 0.0
    %766 = vmatprep.subr.mxu0 0.0
    %767 = vmatpush2.xpose.msra.mxu0 0.0
    %768 = vmatprep.subr.mxu0 0.0
    %769 = vmatpush2.xpose.msra.mxu0 0.0
    %770 = vmatprep.subr.mxu0 0.0
    %771 = vmatpush2.xpose.msra.mxu0 0.0
    %772 = vmatprep.subr.mxu0 0.0
    %773 = vmatpush2.xpose.msra.mxu0 0.0
    %774 = vmatprep.subr.mxu0 0.0
    %775 = vmatpush2.xpose.msra.mxu0 0.0
    %776 = vmatprep.subr.mxu0 0.0
    %777 = vmatpush2.xpose.msra.mxu0 0.0
    %778 = vmatprep.subr.mxu0 0.0
    %779 = vmatpush2.xpose.msra.mxu0 0.0
    %780 = vmatprep.subr.mxu0 0.0
    %781 = vmatpush2.xpose.msra.mxu0 0.0
    %782 = vmatprep.subr.mxu0 0.0
    %783 = vmatpush2.xpose.msra.mxu0 0.0
    %784 = vmatprep.subr.mxu0 0.0
    %785 = vmatpush2.xpose.msra.mxu0 0.0
    %786 = vmatprep.subr.mxu0 0.0
    %787 = vmatpush2.xpose.msra.mxu0 0.0
    %788 = vmatprep.subr.mxu0 0.0
    %789 = vmatpush2.xpose.msra.mxu0 0.0
    %790 = vmatprep.subr.mxu0 0.0
    %791 = vmatpush2.xpose.msra.mxu0 0.0
    %792 = vmatprep.subr.mxu0 0.0
    %793 = vmatpush2.xpose.msra.mxu0 0.0
    %794 = vmatprep.subr.mxu0 0.0
    %795 = vmatpush2.xpose.msra.mxu0 0.0
    %796 = vmatprep.mubr.f32.mxu0 0.0
    %797 = vmatmul.mubr.f32.gmra.mxu0 %v728
    %v798 = vpop.f32.mrf.mxu0
    %v799 = vadd.f32 0.0, %v798
    %v800 = vpop.f32.mrf.mxu0
    %801 = vdwg.mxu0
    %v802 = vmul.f32 %v721, 0.35355338
    %v803 = vmul.f32 %v799, 0.35355338
    %v804 = vsel %vm468, -1e+30, %v802
    %v805 = vsel %vm469, -1e+30, %v803
    %v806 = vsel %vm314, %v804, -inf
    %807 = vmax.xlane.f32.xlu0 %v806
    %v808 = vpop.xlane.xlu0 %807
    %v809 = vsel %vm314, %v805, -inf
    %810 = vmax.xlane.f32.xlu0 %v809
    %v811 = vpop.xlane.xlu0 %810
    %v812 = vsub.f32 %v804, %v808
    %v813 = vsub.f32 %v805, %v811
    %v814 = vmul.f32 %v812, 1.442695
    %v815 = vpow.pop %v814
    %v816 = vmul.f32 %v813, 1.442695
    %v817 = vpow.pop %v816
    %v818 = vsel %vm314, %v815, 0.0
    %819 = vadd.xlane.f32.xlu0 %v818
    %v820 = vpop.xlane.xlu0 %819
    %v821 = vsel %vm314, %v817, 0.0
    %822 = vadd.xlane.f32.xlu0 %v821
    %v823 = vpop.xlane.xlu0 %822
    %v824 = vrcp.pop %v820
    %v825 = vrcp.pop %v823
    %v826 = vmul.f32 %v815, %v824
    %v827 = vmul.f32 %v817, %v825
    %828 = vrot.lane.b32.xlu0 %v301, 56
    %v829 = vpop.permute.xlu0 %828
    %v832 = vsel %vm314, %v826, 0
    %834 = vmatprep.subr.mxu0 0.0
    %835 = vmatpush1.msra.mxu0 0.0
    %836 = vmatprep.subr.mxu0 0.0
    %837 = vmatpush1.msra.mxu0 0.0
    %838 = vmatprep.subr.mxu0 0.0
    %839 = vmatpush1.msra.mxu0 0.0
    %840 = vmatprep.subr.mxu0 0.0
    %841 = vmatpush1.msra.mxu0 0.0
    %842 = vmatprep.subr.mxu0 0.0
    %843 = vmatpush1.msra.mxu0 0.0
    %844 = vmatprep.subr.mxu0 0.0
    %845 = vmatpush1.msra.mxu0 0.0
    %846 = vmatprep.subr.mxu0 0.0
    %847 = vmatpush1.msra.mxu0 0.0
    %848 = vmatprep.subr.mxu0 0.0
    %849 = vmatpush1.msra.mxu0 0.0
    %850 = vmatprep.subr.mxu0 0.0
    %851 = vmatpush1.msra.mxu0 0.0
    %852 = vmatprep.subr.mxu0 0.0
    %853 = vmatpush1.msra.mxu0 0.0
    %854 = vmatprep.subr.mxu0 0.0
    %855 = vmatpush1.msra.mxu0 0.0
    %856 = vmatprep.subr.mxu0 0.0
    %857 = vmatpush1.msra.mxu0 0.0
    %858 = vmatprep.subr.mxu0 0.0
    %859 = vmatpush1.msra.mxu0 0.0
    %860 = vmatprep.subr.mxu0 0.0
    %861 = vmatpush1.msra.mxu0 0.0
    %862 = vmatprep.subr.mxu0 0.0
    %863 = vmatpush1.msra.mxu0 0.0
    %864 = vmatprep.subr.mxu0 0.0
    %865 = vmatpush1.msra.mxu0 %v829
    %866 = vmatprep.subr.mxu0 0.0
    %867 = vmatpush2.msra.mxu0 0.0
    %868 = vmatprep.subr.mxu0 0.0
    %869 = vmatpush2.msra.mxu0 0.0
    %870 = vmatprep.subr.mxu0 0.0
    %871 = vmatpush2.msra.mxu0 0.0
    %872 = vmatprep.subr.mxu0 0.0
    %873 = vmatpush2.msra.mxu0 0.0
    %874 = vmatprep.subr.mxu0 0.0
    %875 = vmatpush2.msra.mxu0 0.0
    %876 = vmatprep.subr.mxu0 0.0
    %877 = vmatpush2.msra.mxu0 0.0
    %878 = vmatprep.subr.mxu0 0.0
    %879 = vmatpush2.msra.mxu0 0.0
    %880 = vmatprep.subr.mxu0 0.0
    %881 = vmatpush2.msra.mxu0 0.0
    %882 = vmatprep.subr.mxu0 0.0
    %883 = vmatpush2.msra.mxu0 0.0
    %884 = vmatprep.subr.mxu0 0.0
    %885 = vmatpush2.msra.mxu0 0.0
    %886 = vmatprep.subr.mxu0 0.0
    %887 = vmatpush2.msra.mxu0 0.0
    %888 = vmatprep.subr.mxu0 0.0
    %889 = vmatpush2.msra.mxu0 0.0
    %890 = vmatprep.subr.mxu0 0.0
    %891 = vmatpush2.msra.mxu0 0.0
    %892 = vmatprep.subr.mxu0 0.0
    %893 = vmatpush2.msra.mxu0 0.0
    %894 = vmatprep.subr.mxu0 0.0
    %895 = vmatpush2.msra.mxu0 0.0
    %896 = vmatprep.subr.mxu0 0.0
    %897 = vmatpush2.msra.mxu0 0.0
    %898 = vmatprep.mubr.f32.mxu0 0.0
    %899 = vmatmul.mubr.f32.gmra.mxu0 %v832
    %v900 = vpop.f32.mrf.mxu0
    %v901 = vadd.f32 0.0, %v900
    %v902 = vpop.f32.mrf.mxu0
    %903 = vdwg.mxu0
    %904 = vrot.lane.b32.xlu0 %v306, 56
    %v905 = vpop.permute.xlu0 %904
    %v908 = vsel %vm314, %v827, 0
    %910 = vmatprep.subr.mxu0 0.0
    %911 = vmatpush1.msra.mxu0 0.0
    %912 = vmatprep.subr.mxu0 0.0
    %913 = vmatpush1.msra.mxu0 0.0
    %914 = vmatprep.subr.mxu0 0.0
    %915 = vmatpush1.msra.mxu0 0.0
    %916 = vmatprep.subr.mxu0 0.0
    %917 = vmatpush1.msra.mxu0 0.0
    %918 = vmatprep.subr.mxu0 0.0
    %919 = vmatpush1.msra.mxu0 0.0
    %920 = vmatprep.subr.mxu0 0.0
    %921 = vmatpush1.msra.mxu0 0.0
    %922 = vmatprep.subr.mxu0 0.0
    %923 = vmatpush1.msra.mxu0 0.0
    %924 = vmatprep.subr.mxu0 0.0
    %925 = vmatpush1.msra.mxu0 0.0
    %926 = vmatprep.subr.mxu0 0.0
    %927 = vmatpush1.msra.mxu0 0.0
    %928 = vmatprep.subr.mxu0 0.0
    %929 = vmatpush1.msra.mxu0 0.0
    %930 = vmatprep.subr.mxu0 0.0
    %931 = vmatpush1.msra.mxu0 0.0
    %932 = vmatprep.subr.mxu0 0.0
    %933 = vmatpush1.msra.mxu0 0.0
    %934 = vmatprep.subr.mxu0 0.0
    %935 = vmatpush1.msra.mxu0 0.0
    %936 = vmatprep.subr.mxu0 0.0
    %937 = vmatpush1.msra.mxu0 0.0
    %938 = vmatprep.subr.mxu0 0.0
    %939 = vmatpush1.msra.mxu0 0.0
    %940 = vmatprep.subr.mxu0 0.0
    %941 = vmatpush1.msra.mxu0 %v905
    %942 = vmatprep.subr.mxu0 0.0
    %943 = vmatpush2.msra.mxu0 0.0
    %944 = vmatprep.subr.mxu0 0.0
    %945 = vmatpush2.msra.mxu0 0.0
    %946 = vmatprep.subr.mxu0 0.0
    %947 = vmatpush2.msra.mxu0 0.0
    %948 = vmatprep.subr.mxu0 0.0
    %949 = vmatpush2.msra.mxu0 0.0
    %950 = vmatprep.subr.mxu0 0.0
    %951 = vmatpush2.msra.mxu0 0.0
    %952 = vmatprep.subr.mxu0 0.0
    %953 = vmatpush2.msra.mxu0 0.0
    %954 = vmatprep.subr.mxu0 0.0
    %955 = vmatpush2.msra.mxu0 0.0
    %956 = vmatprep.subr.mxu0 0.0
    %957 = vmatpush2.msra.mxu0 0.0
    %958 = vmatprep.subr.mxu0 0.0
    %959 = vmatpush2.msra.mxu0 0.0
    %960 = vmatprep.subr.mxu0 0.0
    %961 = vmatpush2.msra.mxu0 0.0
    %962 = vmatprep.subr.mxu0 0.0
    %963 = vmatpush2.msra.mxu0 0.0
    %964 = vmatprep.subr.mxu0 0.0
    %965 = vmatpush2.msra.mxu0 0.0
    %966 = vmatprep.subr.mxu0 0.0
    %967 = vmatpush2.msra.mxu0 0.0
    %968 = vmatprep.subr.mxu0 0.0
    %969 = vmatpush2.msra.mxu0 0.0
    %970 = vmatprep.subr.mxu0 0.0
    %971 = vmatpush2.msra.mxu0 0.0
    %972 = vmatprep.subr.mxu0 0.0
    %973 = vmatpush2.msra.mxu0 0.0
    %974 = vmatprep.mubr.f32.mxu0 0.0
    %975 = vmatmul.mubr.f32.gmra.mxu0 %v908
    %v976 = vpop.f32.mrf.mxu0
    %v977 = vadd.f32 0.0, %v976
    %v978 = vpop.f32.mrf.mxu0
    %979 = vdwg.mxu0
    %980 = vrot.lane.b32.xlu0 %v301, 112
    %v981 = vpop.permute.xlu0 %980
    %982 = vrot.lane.b32.xlu0 %v301, 80
    %v983 = vpop.permute.xlu0 %982
    %v984 = vsel %vm314, %v981, 0
    %v986 = vsel %vm314, %v983, 0
    %988 = vmatprep.subr.mxu0 0.0
    %989 = vmatpush1.xpose.msra.mxu0 0.0
    %990 = vmatprep.subr.mxu0 0.0
    %991 = vmatpush1.xpose.msra.mxu0 0.0
    %992 = vmatprep.subr.mxu0 0.0
    %993 = vmatpush1.xpose.msra.mxu0 0.0
    %994 = vmatprep.subr.mxu0 0.0
    %995 = vmatpush1.xpose.msra.mxu0 0.0
    %996 = vmatprep.subr.mxu0 0.0
    %997 = vmatpush1.xpose.msra.mxu0 0.0
    %998 = vmatprep.subr.mxu0 0.0
    %999 = vmatpush1.xpose.msra.mxu0 0.0
    %1000 = vmatprep.subr.mxu0 0.0
    %1001 = vmatpush1.xpose.msra.mxu0 0.0
    %1002 = vmatprep.subr.mxu0 0.0
    %1003 = vmatpush1.xpose.msra.mxu0 0.0
    %1004 = vmatprep.subr.mxu0 0.0
    %1005 = vmatpush1.xpose.msra.mxu0 0.0
    %1006 = vmatprep.subr.mxu0 0.0
    %1007 = vmatpush1.xpose.msra.mxu0 0.0
    %1008 = vmatprep.subr.mxu0 0.0
    %1009 = vmatpush1.xpose.msra.mxu0 0.0
    %1010 = vmatprep.subr.mxu0 0.0
    %1011 = vmatpush1.xpose.msra.mxu0 0.0
    %1012 = vmatprep.subr.mxu0 0.0
    %1013 = vmatpush1.xpose.msra.mxu0 0.0
    %1014 = vmatprep.subr.mxu0 0.0
    %1015 = vmatpush1.xpose.msra.mxu0 0.0
    %1016 = vmatprep.subr.mxu0 0.0
    %1017 = vmatpush1.xpose.msra.mxu0 0.0
    %1018 = vmatprep.subr.mxu0 0.0
    %1019 = vmatpush1.xpose.msra.mxu0 %v986
    %1020 = vmatprep.subr.mxu0 0.0
    %1021 = vmatpush2.xpose.msra.mxu0 0.0
    %1022 = vmatprep.subr.mxu0 0.0
    %1023 = vmatpush2.xpose.msra.mxu0 0.0
    %1024 = vmatprep.subr.mxu0 0.0
    %1025 = vmatpush2.xpose.msra.mxu0 0.0
    %1026 = vmatprep.subr.mxu0 0.0
    %1027 = vmatpush2.xpose.msra.mxu0 0.0
    %1028 = vmatprep.subr.mxu0 0.0
    %1029 = vmatpush2.xpose.msra.mxu0 0.0
    %1030 = vmatprep.subr.mxu0 0.0
    %1031 = vmatpush2.xpose.msra.mxu0 0.0
    %1032 = vmatprep.subr.mxu0 0.0
    %1033 = vmatpush2.xpose.msra.mxu0 0.0
    %1034 = vmatprep.subr.mxu0 0.0
    %1035 = vmatpush2.xpose.msra.mxu0 0.0
    %1036 = vmatprep.subr.mxu0 0.0
    %1037 = vmatpush2.xpose.msra.mxu0 0.0
    %1038 = vmatprep.subr.mxu0 0.0
    %1039 = vmatpush2.xpose.msra.mxu0 0.0
    %1040 = vmatprep.subr.mxu0 0.0
    %1041 = vmatpush2.xpose.msra.mxu0 0.0
    %1042 = vmatprep.subr.mxu0 0.0
    %1043 = vmatpush2.xpose.msra.mxu0 0.0
    %1044 = vmatprep.subr.mxu0 0.0
    %1045 = vmatpush2.xpose.msra.mxu0 0.0
    %1046 = vmatprep.subr.mxu0 0.0
    %1047 = vmatpush2.xpose.msra.mxu0 0.0
    %1048 = vmatprep.subr.mxu0 0.0
    %1049 = vmatpush2.xpose.msra.mxu0 0.0
    %1050 = vmatprep.subr.mxu0 0.0
    %1051 = vmatpush2.xpose.msra.mxu0 0.0
    %1052 = vmatprep.mubr.f32.mxu0 0.0
    %1053 = vmatmul.mubr.f32.gmra.mxu0 %v984
    %v1054 = vpop.f32.mrf.mxu0
    %v1055 = vadd.f32 0.0, %v1054
    %v1056 = vpop.f32.mrf.mxu0
    %1057 = vdwg.mxu0
    %1058 = vrot.lane.b32.xlu0 %v306, 112
    %v1059 = vpop.permute.xlu0 %1058
    %1060 = vrot.lane.b32.xlu0 %v306, 80
    %v1061 = vpop.permute.xlu0 %1060
    %v1062 = vsel %vm314, %v1059, 0
    %v1064 = vsel %vm314, %v1061, 0
    %1066 = vmatprep.subr.mxu0 0.0
    %1067 = vmatpush1.xpose.msra.mxu0 0.0
    %1068 = vmatprep.subr.mxu0 0.0
    %1069 = vmatpush1.xpose.msra.mxu0 0.0
    %1070 = vmatprep.subr.mxu0 0.0
    %1071 = vmatpush1.xpose.msra.mxu0 0.0
    %1072 = vmatprep.subr.mxu0 0.0
    %1073 = vmatpush1.xpose.msra.mxu0 0.0
    %1074 = vmatprep.subr.mxu0 0.0
    %1075 = vmatpush1.xpose.msra.mxu0 0.0
    %1076 = vmatprep.subr.mxu0 0.0
    %1077 = vmatpush1.xpose.msra.mxu0 0.0
    %1078 = vmatprep.subr.mxu0 0.0
    %1079 = vmatpush1.xpose.msra.mxu0 0.0
    %1080 = vmatprep.subr.mxu0 0.0
    %1081 = vmatpush1.xpose.msra.mxu0 0.0
    %1082 = vmatprep.subr.mxu0 0.0
    %1083 = vmatpush1.xpose.msra.mxu0 0.0
    %1084 = vmatprep.subr.mxu0 0.0
    %1085 = vmatpush1.xpose.msra.mxu0 0.0
    %1086 = vmatprep.subr.mxu0 0.0
    %1087 = vmatpush1.xpose.msra.mxu0 0.0
    %1088 = vmatprep.subr.mxu0 0.0
    %1089 = vmatpush1.xpose.msra.mxu0 0.0
    %1090 = vmatprep.subr.mxu0 0.0
    %1091 = vmatpush1.xpose.msra.mxu0 0.0
    %1092 = vmatprep.subr.mxu0 0.0
    %1093 = vmatpush1.xpose.msra.mxu0 0.0
    %1094 = vmatprep.subr.mxu0 0.0
    %1095 = vmatpush1.xpose.msra.mxu0 0.0
    %1096 = vmatprep.subr.mxu0 0.0
    %1097 = vmatpush1.xpose.msra.mxu0 %v1064
    %1098 = vmatprep.subr.mxu0 0.0
    %1099 = vmatpush2.xpose.msra.mxu0 0.0
    %1100 = vmatprep.subr.mxu0 0.0
    %1101 = vmatpush2.xpose.msra.mxu0 0.0
    %1102 = vmatprep.subr.mxu0 0.0
    %1103 = vmatpush2.xpose.msra.mxu0 0.0
    %1104 = vmatprep.subr.mxu0 0.0
    %1105 = vmatpush2.xpose.msra.mxu0 0.0
    %1106 = vmatprep.subr.mxu0 0.0
    %1107 = vmatpush2.xpose.msra.mxu0 0.0
    %1108 = vmatprep.subr.mxu0 0.0
    %1109 = vmatpush2.xpose.msra.mxu0 0.0
    %1110 = vmatprep.subr.mxu0 0.0
    %1111 = vmatpush2.xpose.msra.mxu0 0.0
    %1112 = vmatprep.subr.mxu0 0.0
    %1113 = vmatpush2.xpose.msra.mxu0 0.0
    %1114 = vmatprep.subr.mxu0 0.0
    %1115 = vmatpush2.xpose.msra.mxu0 0.0
    %1116 = vmatprep.subr.mxu0 0.0
    %1117 = vmatpush2.xpose.msra.mxu0 0.0
    %1118 = vmatprep.subr.mxu0 0.0
    %1119 = vmatpush2.xpose.msra.mxu0 0.0
    %1120 = vmatprep.subr.mxu0 0.0
    %1121 = vmatpush2.xpose.msra.mxu0 0.0
    %1122 = vmatprep.subr.mxu0 0.0
    %1123 = vmatpush2.xpose.msra.mxu0 0.0
    %1124 = vmatprep.subr.mxu0 0.0
    %1125 = vmatpush2.xpose.msra.mxu0 0.0
    %1126 = vmatprep.subr.mxu0 0.0
    %1127 = vmatpush2.xpose.msra.mxu0 0.0
    %1128 = vmatprep.subr.mxu0 0.0
    %1129 = vmatpush2.xpose.msra.mxu0 0.0
    %1130 = vmatprep.mubr.f32.mxu0 0.0
    %1131 = vmatmul.mubr.f32.gmra.mxu0 %v1062
    %v1132 = vpop.f32.mrf.mxu0
    %v1133 = vadd.f32 0.0, %v1132
    %v1134 = vpop.f32.mrf.mxu0
    %1135 = vdwg.mxu0
    %v1136 = vmul.f32 %v1055, 0.35355338
    %v1137 = vmul.f32 %v1133, 0.35355338
    %v1138 = vsel %vm468, -1e+30, %v1136
    %v1139 = vsel %vm469, -1e+30, %v1137
    %v1140 = vsel %vm314, %v1138, -inf
    %1141 = vmax.xlane.f32.xlu0 %v1140
    %v1142 = vpop.xlane.xlu0 %1141
    %v1143 = vsel %vm314, %v1139, -inf
    %1144 = vmax.xlane.f32.xlu0 %v1143
    %v1145 = vpop.xlane.xlu0 %1144
    %v1146 = vsub.f32 %v1138, %v1142
    %v1147 = vsub.f32 %v1139, %v1145
    %v1148 = vmul.f32 %v1146, 1.442695
    %v1149 = vpow.pop %v1148
    %v1150 = vmul.f32 %v1147, 1.442695
    %v1151 = vpow.pop %v1150
    %v1152 = vsel %vm314, %v1149, 0.0
    %1153 = vadd.xlane.f32.xlu0 %v1152
    %v1154 = vpop.xlane.xlu0 %1153
    %v1155 = vsel %vm314, %v1151, 0.0
    %1156 = vadd.xlane.f32.xlu0 %v1155
    %v1157 = vpop.xlane.xlu0 %1156
    %v1158 = vrcp.pop %v1154
    %v1159 = vrcp.pop %v1157
    %v1160 = vmul.f32 %v1149, %v1158
    %v1161 = vmul.f32 %v1151, %v1159
    %1162 = vrot.lane.b32.xlu0 %v301, 48
    %v1163 = vpop.permute.xlu0 %1162
    %v1166 = vsel %vm314, %v1160, 0
    %1168 = vmatprep.subr.mxu0 0.0
    %1169 = vmatpush1.msra.mxu0 0.0
    %1170 = vmatprep.subr.mxu0 0.0
    %1171 = vmatpush1.msra.mxu0 0.0
    %1172 = vmatprep.subr.mxu0 0.0
    %1173 = vmatpush1.msra.mxu0 0.0
    %1174 = vmatprep.subr.mxu0 0.0
    %1175 = vmatpush1.msra.mxu0 0.0
    %1176 = vmatprep.subr.mxu0 0.0
    %1177 = vmatpush1.msra.mxu0 0.0
    %1178 = vmatprep.subr.mxu0 0.0
    %1179 = vmatpush1.msra.mxu0 0.0
    %1180 = vmatprep.subr.mxu0 0.0
    %1181 = vmatpush1.msra.mxu0 0.0
    %1182 = vmatprep.subr.mxu0 0.0
    %1183 = vmatpush1.msra.mxu0 0.0
    %1184 = vmatprep.subr.mxu0 0.0
    %1185 = vmatpush1.msra.mxu0 0.0
    %1186 = vmatprep.subr.mxu0 0.0
    %1187 = vmatpush1.msra.mxu0 0.0
    %1188 = vmatprep.subr.mxu0 0.0
    %1189 = vmatpush1.msra.mxu0 0.0
    %1190 = vmatprep.subr.mxu0 0.0
    %1191 = vmatpush1.msra.mxu0 0.0
    %1192 = vmatprep.subr.mxu0 0.0
    %1193 = vmatpush1.msra.mxu0 0.0
    %1194 = vmatprep.subr.mxu0 0.0
    %1195 = vmatpush1.msra.mxu0 0.0
    %1196 = vmatprep.subr.mxu0 0.0
    %1197 = vmatpush1.msra.mxu0 0.0
    %1198 = vmatprep.subr.mxu0 0.0
    %1199 = vmatpush1.msra.mxu0 %v1163
    %1200 = vmatprep.subr.mxu0 0.0
    %1201 = vmatpush2.msra.mxu0 0.0
    %1202 = vmatprep.subr.mxu0 0.0
    %1203 = vmatpush2.msra.mxu0 0.0
    %1204 = vmatprep.subr.mxu0 0.0
    %1205 = vmatpush2.msra.mxu0 0.0
    %1206 = vmatprep.subr.mxu0 0.0
    %1207 = vmatpush2.msra.mxu0 0.0
    %1208 = vmatprep.subr.mxu0 0.0
    %1209 = vmatpush2.msra.mxu0 0.0
    %1210 = vmatprep.subr.mxu0 0.0
    %1211 = vmatpush2.msra.mxu0 0.0
    %1212 = vmatprep.subr.mxu0 0.0
    %1213 = vmatpush2.msra.mxu0 0.0
    %1214 = vmatprep.subr.mxu0 0.0
    %1215 = vmatpush2.msra.mxu0 0.0
    %1216 = vmatprep.subr.mxu0 0.0
    %1217 = vmatpush2.msra.mxu0 0.0
    %1218 = vmatprep.subr.mxu0 0.0
    %1219 = vmatpush2.msra.mxu0 0.0
    %1220 = vmatprep.subr.mxu0 0.0
    %1221 = vmatpush2.msra.mxu0 0.0
    %1222 = vmatprep.subr.mxu0 0.0
    %1223 = vmatpush2.msra.mxu0 0.0
    %1224 = vmatprep.subr.mxu0 0.0
    %1225 = vmatpush2.msra.mxu0 0.0
    %1226 = vmatprep.subr.mxu0 0.0
    %1227 = vmatpush2.msra.mxu0 0.0
    %1228 = vmatprep.subr.mxu0 0.0
    %1229 = vmatpush2.msra.mxu0 0.0
    %1230 = vmatprep.subr.mxu0 0.0
    %1231 = vmatpush2.msra.mxu0 0.0
    %1232 = vmatprep.mubr.f32.mxu0 0.0
    %1233 = vmatmul.mubr.f32.gmra.mxu0 %v1166
    %v1234 = vpop.f32.mrf.mxu0
    %v1235 = vadd.f32 0.0, %v1234
    %v1236 = vpop.f32.mrf.mxu0
    %1237 = vdwg.mxu0
    %1238 = vrot.lane.b32.xlu0 %v306, 48
    %v1239 = vpop.permute.xlu0 %1238
    %v1242 = vsel %vm314, %v1161, 0
    %1244 = vmatprep.subr.mxu0 0.0
    %1245 = vmatpush1.msra.mxu0 0.0
    %1246 = vmatprep.subr.mxu0 0.0
    %1247 = vmatpush1.msra.mxu0 0.0
    %1248 = vmatprep.subr.mxu0 0.0
    %1249 = vmatpush1.msra.mxu0 0.0
    %1250 = vmatprep.subr.mxu0 0.0
    %1251 = vmatpush1.msra.mxu0 0.0
    %1252 = vmatprep.subr.mxu0 0.0
    %1253 = vmatpush1.msra.mxu0 0.0
    %1254 = vmatprep.subr.mxu0 0.0
    %1255 = vmatpush1.msra.mxu0 0.0
    %1256 = vmatprep.subr.mxu0 0.0
    %1257 = vmatpush1.msra.mxu0 0.0
    %1258 = vmatprep.subr.mxu0 0.0
    %1259 = vmatpush1.msra.mxu0 0.0
    %1260 = vmatprep.subr.mxu0 0.0
    %1261 = vmatpush1.msra.mxu0 0.0
    %1262 = vmatprep.subr.mxu0 0.0
    %1263 = vmatpush1.msra.mxu0 0.0
    %1264 = vmatprep.subr.mxu0 0.0
    %1265 = vmatpush1.msra.mxu0 0.0
    %1266 = vmatprep.subr.mxu0 0.0
    %1267 = vmatpush1.msra.mxu0 0.0
    %1268 = vmatprep.subr.mxu0 0.0
    %1269 = vmatpush1.msra.mxu0 0.0
    %1270 = vmatprep.subr.mxu0 0.0
    %1271 = vmatpush1.msra.mxu0 0.0
    %1272 = vmatprep.subr.mxu0 0.0
    %1273 = vmatpush1.msra.mxu0 0.0
    %1274 = vmatprep.subr.mxu0 0.0
    %1275 = vmatpush1.msra.mxu0 %v1239
    %1276 = vmatprep.subr.mxu0 0.0
    %1277 = vmatpush2.msra.mxu0 0.0
    %1278 = vmatprep.subr.mxu0 0.0
    %1279 = vmatpush2.msra.mxu0 0.0
    %1280 = vmatprep.subr.mxu0 0.0
    %1281 = vmatpush2.msra.mxu0 0.0
    %1282 = vmatprep.subr.mxu0 0.0
    %1283 = vmatpush2.msra.mxu0 0.0
    %1284 = vmatprep.subr.mxu0 0.0
    %1285 = vmatpush2.msra.mxu0 0.0
    %1286 = vmatprep.subr.mxu0 0.0
    %1287 = vmatpush2.msra.mxu0 0.0
    %1288 = vmatprep.subr.mxu0 0.0
    %1289 = vmatpush2.msra.mxu0 0.0
    %1290 = vmatprep.subr.mxu0 0.0
    %1291 = vmatpush2.msra.mxu0 0.0
    %1292 = vmatprep.subr.mxu0 0.0
    %1293 = vmatpush2.msra.mxu0 0.0
    %1294 = vmatprep.subr.mxu0 0.0
    %1295 = vmatpush2.msra.mxu0 0.0
    %1296 = vmatprep.subr.mxu0 0.0
    %1297 = vmatpush2.msra.mxu0 0.0
    %1298 = vmatprep.subr.mxu0 0.0
    %1299 = vmatpush2.msra.mxu0 0.0
    %1300 = vmatprep.subr.mxu0 0.0
    %1301 = vmatpush2.msra.mxu0 0.0
    %1302 = vmatprep.subr.mxu0 0.0
    %1303 = vmatpush2.msra.mxu0 0.0
    %1304 = vmatprep.subr.mxu0 0.0
    %1305 = vmatpush2.msra.mxu0 0.0
    %1306 = vmatprep.subr.mxu0 0.0
    %1307 = vmatpush2.msra.mxu0 0.0
    %1308 = vmatprep.mubr.f32.mxu0 0.0
    %1309 = vmatmul.mubr.f32.gmra.mxu0 %v1242
    %v1310 = vpop.f32.mrf.mxu0
    %v1311 = vadd.f32 0.0, %v1310
    %v1312 = vpop.f32.mrf.mxu0
    %1313 = vdwg.mxu0
    %1314 = vrot.lane.b32.xlu0 %v301, 104
    %v1315 = vpop.permute.xlu0 %1314
    %1316 = vrot.lane.b32.xlu0 %v301, 72
    %v1317 = vpop.permute.xlu0 %1316
    %v1318 = vsel %vm314, %v1315, 0
    %v1320 = vsel %vm314, %v1317, 0
    %1322 = vmatprep.subr.mxu0 0.0
    %1323 = vmatpush1.xpose.msra.mxu0 0.0
    %1324 = vmatprep.subr.mxu0 0.0
    %1325 = vmatpush1.xpose.msra.mxu0 0.0
    %1326 = vmatprep.subr.mxu0 0.0
    %1327 = vmatpush1.xpose.msra.mxu0 0.0
    %1328 = vmatprep.subr.mxu0 0.0
    %1329 = vmatpush1.xpose.msra.mxu0 0.0
    %1330 = vmatprep.subr.mxu0 0.0
    %1331 = vmatpush1.xpose.msra.mxu0 0.0
    %1332 = vmatprep.subr.mxu0 0.0
    %1333 = vmatpush1.xpose.msra.mxu0 0.0
    %1334 = vmatprep.subr.mxu0 0.0
    %1335 = vmatpush1.xpose.msra.mxu0 0.0
    %1336 = vmatprep.subr.mxu0 0.0
    %1337 = vmatpush1.xpose.msra.mxu0 0.0
    %1338 = vmatprep.subr.mxu0 0.0
    %1339 = vmatpush1.xpose.msra.mxu0 0.0
    %1340 = vmatprep.subr.mxu0 0.0
    %1341 = vmatpush1.xpose.msra.mxu0 0.0
    %1342 = vmatprep.subr.mxu0 0.0
    %1343 = vmatpush1.xpose.msra.mxu0 0.0
    %1344 = vmatprep.subr.mxu0 0.0
    %1345 = vmatpush1.xpose.msra.mxu0 0.0
    %1346 = vmatprep.subr.mxu0 0.0
    %1347 = vmatpush1.xpose.msra.mxu0 0.0
    %1348 = vmatprep.subr.mxu0 0.0
    %1349 = vmatpush1.xpose.msra.mxu0 0.0
    %1350 = vmatprep.subr.mxu0 0.0
    %1351 = vmatpush1.xpose.msra.mxu0 0.0
    %1352 = vmatprep.subr.mxu0 0.0
    %1353 = vmatpush1.xpose.msra.mxu0 %v1320
    %1354 = vmatprep.subr.mxu0 0.0
    %1355 = vmatpush2.xpose.msra.mxu0 0.0
    %1356 = vmatprep.subr.mxu0 0.0
    %1357 = vmatpush2.xpose.msra.mxu0 0.0
    %1358 = vmatprep.subr.mxu0 0.0
    %1359 = vmatpush2.xpose.msra.mxu0 0.0
    %1360 = vmatprep.subr.mxu0 0.0
    %1361 = vmatpush2.xpose.msra.mxu0 0.0
    %1362 = vmatprep.subr.mxu0 0.0
    %1363 = vmatpush2.xpose.msra.mxu0 0.0
    %1364 = vmatprep.subr.mxu0 0.0
    %1365 = vmatpush2.xpose.msra.mxu0 0.0
    %1366 = vmatprep.subr.mxu0 0.0
    %1367 = vmatpush2.xpose.msra.mxu0 0.0
    %1368 = vmatprep.subr.mxu0 0.0
    %1369 = vmatpush2.xpose.msra.mxu0 0.0
    %1370 = vmatprep.subr.mxu0 0.0
    %1371 = vmatpush2.xpose.msra.mxu0 0.0
    %1372 = vmatprep.subr.mxu0 0.0
    %1373 = vmatpush2.xpose.msra.mxu0 0.0
    %1374 = vmatprep.subr.mxu0 0.0
    %1375 = vmatpush2.xpose.msra.mxu0 0.0
    %1376 = vmatprep.subr.mxu0 0.0
    %1377 = vmatpush2.xpose.msra.mxu0 0.0
    %1378 = vmatprep.subr.mxu0 0.0
    %1379 = vmatpush2.xpose.msra.mxu0 0.0
    %1380 = vmatprep.subr.mxu0 0.0
    %1381 = vmatpush2.xpose.msra.mxu0 0.0
    %1382 = vmatprep.subr.mxu0 0.0
    %1383 = vmatpush2.xpose.msra.mxu0 0.0
    %1384 = vmatprep.subr.mxu0 0.0
    %1385 = vmatpush2.xpose.msra.mxu0 0.0
    %1386 = vmatprep.mubr.f32.mxu0 0.0
    %1387 = vmatmul.mubr.f32.gmra.mxu0 %v1318
    %v1388 = vpop.f32.mrf.mxu0
    %v1389 = vadd.f32 0.0, %v1388
    %v1390 = vpop.f32.mrf.mxu0
    %1391 = vdwg.mxu0
    %1392 = vrot.lane.b32.xlu0 %v306, 104
    %v1393 = vpop.permute.xlu0 %1392
    %1394 = vrot.lane.b32.xlu0 %v306, 72
    %v1395 = vpop.permute.xlu0 %1394
    %v1396 = vsel %vm314, %v1393, 0
    %v1398 = vsel %vm314, %v1395, 0
    %1400 = vmatprep.subr.mxu0 0.0
    %1401 = vmatpush1.xpose.msra.mxu0 0.0
    %1402 = vmatprep.subr.mxu0 0.0
    %1403 = vmatpush1.xpose.msra.mxu0 0.0
    %1404 = vmatprep.subr.mxu0 0.0
    %1405 = vmatpush1.xpose.msra.mxu0 0.0
    %1406 = vmatprep.subr.mxu0 0.0
    %1407 = vmatpush1.xpose.msra.mxu0 0.0
    %1408 = vmatprep.subr.mxu0 0.0
    %1409 = vmatpush1.xpose.msra.mxu0 0.0
    %1410 = vmatprep.subr.mxu0 0.0
    %1411 = vmatpush1.xpose.msra.mxu0 0.0
    %1412 = vmatprep.subr.mxu0 0.0
    %1413 = vmatpush1.xpose.msra.mxu0 0.0
    %1414 = vmatprep.subr.mxu0 0.0
    %1415 = vmatpush1.xpose.msra.mxu0 0.0
    %1416 = vmatprep.subr.mxu0 0.0
    %1417 = vmatpush1.xpose.msra.mxu0 0.0
    %1418 = vmatprep.subr.mxu0 0.0
    %1419 = vmatpush1.xpose.msra.mxu0 0.0
    %1420 = vmatprep.subr.mxu0 0.0
    %1421 = vmatpush1.xpose.msra.mxu0 0.0
    %1422 = vmatprep.subr.mxu0 0.0
    %1423 = vmatpush1.xpose.msra.mxu0 0.0
    %1424 = vmatprep.subr.mxu0 0.0
    %1425 = vmatpush1.xpose.msra.mxu0 0.0
    %1426 = vmatprep.subr.mxu0 0.0
    %1427 = vmatpush1.xpose.msra.mxu0 0.0
    %1428 = vmatprep.subr.mxu0 0.0
    %1429 = vmatpush1.xpose.msra.mxu0 0.0
    %1430 = vmatprep.subr.mxu0 0.0
    %1431 = vmatpush1.xpose.msra.mxu0 %v1398
    %1432 = vmatprep.subr.mxu0 0.0
    %1433 = vmatpush2.xpose.msra.mxu0 0.0
    %1434 = vmatprep.subr.mxu0 0.0
    %1435 = vmatpush2.xpose.msra.mxu0 0.0
    %1436 = vmatprep.subr.mxu0 0.0
    %1437 = vmatpush2.xpose.msra.mxu0 0.0
    %1438 = vmatprep.subr.mxu0 0.0
    %1439 = vmatpush2.xpose.msra.mxu0 0.0
    %1440 = vmatprep.subr.mxu0 0.0
    %1441 = vmatpush2.xpose.msra.mxu0 0.0
    %1442 = vmatprep.subr.mxu0 0.0
    %1443 = vmatpush2.xpose.msra.mxu0 0.0
    %1444 = vmatprep.subr.mxu0 0.0
    %1445 = vmatpush2.xpose.msra.mxu0 0.0
    %1446 = vmatprep.subr.mxu0 0.0
    %1447 = vmatpush2.xpose.msra.mxu0 0.0
    %1448 = vmatprep.subr.mxu0 0.0
    %1449 = vmatpush2.xpose.msra.mxu0 0.0
    %1450 = vmatprep.subr.mxu0 0.0
    %1451 = vmatpush2.xpose.msra.mxu0 0.0
    %1452 = vmatprep.subr.mxu0 0.0
    %1453 = vmatpush2.xpose.msra.mxu0 0.0
    %1454 = vmatprep.subr.mxu0 0.0
    %1455 = vmatpush2.xpose.msra.mxu0 0.0
    %1456 = vmatprep.subr.mxu0 0.0
    %1457 = vmatpush2.xpose.msra.mxu0 0.0
    %1458 = vmatprep.subr.mxu0 0.0
    %1459 = vmatpush2.xpose.msra.mxu0 0.0
    %1460 = vmatprep.subr.mxu0 0.0
    %1461 = vmatpush2.xpose.msra.mxu0 0.0
    %1462 = vmatprep.subr.mxu0 0.0
    %1463 = vmatpush2.xpose.msra.mxu0 0.0
    %1464 = vmatprep.mubr.f32.mxu0 0.0
    %1465 = vmatmul.mubr.f32.gmra.mxu0 %v1396
    %v1466 = vpop.f32.mrf.mxu0
    %v1467 = vadd.f32 0.0, %v1466
    %v1468 = vpop.f32.mrf.mxu0
    %1469 = vdwg.mxu0
    %v1470 = vmul.f32 %v1389, 0.35355338
    %v1471 = vmul.f32 %v1467, 0.35355338
    %v1472 = vsel %vm468, -1e+30, %v1470
    %v1473 = vsel %vm469, -1e+30, %v1471
    %v1474 = vsel %vm314, %v1472, -inf
    %1475 = vmax.xlane.f32.xlu0 %v1474
    %v1476 = vpop.xlane.xlu0 %1475
    %v1477 = vsel %vm314, %v1473, -inf
    %1478 = vmax.xlane.f32.xlu0 %v1477
    %v1479 = vpop.xlane.xlu0 %1478
    %v1480 = vsub.f32 %v1472, %v1476
    %v1481 = vsub.f32 %v1473, %v1479
    %v1482 = vmul.f32 %v1480, 1.442695
    %v1483 = vpow.pop %v1482
    %v1484 = vmul.f32 %v1481, 1.442695
    %v1485 = vpow.pop %v1484
    %v1486 = vsel %vm314, %v1483, 0.0
    %1487 = vadd.xlane.f32.xlu0 %v1486
    %v1488 = vpop.xlane.xlu0 %1487
    %v1489 = vsel %vm314, %v1485, 0.0
    %1490 = vadd.xlane.f32.xlu0 %v1489
    %v1491 = vpop.xlane.xlu0 %1490
    %v1492 = vrcp.pop %v1488
    %v1493 = vrcp.pop %v1491
    %v1494 = vmul.f32 %v1483, %v1492
    %v1495 = vmul.f32 %v1485, %v1493
    %1496 = vrot.lane.b32.xlu0 %v301, 40
    %v1497 = vpop.permute.xlu0 %1496
    %v1500 = vsel %vm314, %v1494, 0
    %1502 = vmatprep.subr.mxu0 0.0
    %1503 = vmatpush1.msra.mxu0 0.0
    %1504 = vmatprep.subr.mxu0 0.0
    %1505 = vmatpush1.msra.mxu0 0.0
    %1506 = vmatprep.subr.mxu0 0.0
    %1507 = vmatpush1.msra.mxu0 0.0
    %1508 = vmatprep.subr.mxu0 0.0
    %1509 = vmatpush1.msra.mxu0 0.0
    %1510 = vmatprep.subr.mxu0 0.0
    %1511 = vmatpush1.msra.mxu0 0.0
    %1512 = vmatprep.subr.mxu0 0.0
    %1513 = vmatpush1.msra.mxu0 0.0
    %1514 = vmatprep.subr.mxu0 0.0
    %1515 = vmatpush1.msra.mxu0 0.0
    %1516 = vmatprep.subr.mxu0 0.0
    %1517 = vmatpush1.msra.mxu0 0.0
    %1518 = vmatprep.subr.mxu0 0.0
    %1519 = vmatpush1.msra.mxu0 0.0
    %1520 = vmatprep.subr.mxu0 0.0
    %1521 = vmatpush1.msra.mxu0 0.0
    %1522 = vmatprep.subr.mxu0 0.0
    %1523 = vmatpush1.msra.mxu0 0.0
    %1524 = vmatprep.subr.mxu0 0.0
    %1525 = vmatpush1.msra.mxu0 0.0
    %1526 = vmatprep.subr.mxu0 0.0
    %1527 = vmatpush1.msra.mxu0 0.0
    %1528 = vmatprep.subr.mxu0 0.0
    %1529 = vmatpush1.msra.mxu0 0.0
    %1530 = vmatprep.subr.mxu0 0.0
    %1531 = vmatpush1.msra.mxu0 0.0
    %1532 = vmatprep.subr.mxu0 0.0
    %1533 = vmatpush1.msra.mxu0 %v1497
    %1534 = vmatprep.subr.mxu0 0.0
    %1535 = vmatpush2.msra.mxu0 0.0
    %1536 = vmatprep.subr.mxu0 0.0
    %1537 = vmatpush2.msra.mxu0 0.0
    %1538 = vmatprep.subr.mxu0 0.0
    %1539 = vmatpush2.msra.mxu0 0.0
    %1540 = vmatprep.subr.mxu0 0.0
    %1541 = vmatpush2.msra.mxu0 0.0
    %1542 = vmatprep.subr.mxu0 0.0
    %1543 = vmatpush2.msra.mxu0 0.0
    %1544 = vmatprep.subr.mxu0 0.0
    %1545 = vmatpush2.msra.mxu0 0.0
    %1546 = vmatprep.subr.mxu0 0.0
    %1547 = vmatpush2.msra.mxu0 0.0
    %1548 = vmatprep.subr.mxu0 0.0
    %1549 = vmatpush2.msra.mxu0 0.0
    %1550 = vmatprep.subr.mxu0 0.0
    %1551 = vmatpush2.msra.mxu0 0.0
    %1552 = vmatprep.subr.mxu0 0.0
    %1553 = vmatpush2.msra.mxu0 0.0
    %1554 = vmatprep.subr.mxu0 0.0
    %1555 = vmatpush2.msra.mxu0 0.0
    %1556 = vmatprep.subr.mxu0 0.0
    %1557 = vmatpush2.msra.mxu0 0.0
    %1558 = vmatprep.subr.mxu0 0.0
    %1559 = vmatpush2.msra.mxu0 0.0
    %1560 = vmatprep.subr.mxu0 0.0
    %1561 = vmatpush2.msra.mxu0 0.0
    %1562 = vmatprep.subr.mxu0 0.0
    %1563 = vmatpush2.msra.mxu0 0.0
    %1564 = vmatprep.subr.mxu0 0.0
    %1565 = vmatpush2.msra.mxu0 0.0
    %1566 = vmatprep.mubr.f32.mxu0 0.0
    %1567 = vmatmul.mubr.f32.gmra.mxu0 %v1500
    %v1568 = vpop.f32.mrf.mxu0
    %v1569 = vadd.f32 0.0, %v1568
    %v1570 = vpop.f32.mrf.mxu0
    %1571 = vdwg.mxu0
    %1572 = vrot.lane.b32.xlu0 %v306, 40
    %v1573 = vpop.permute.xlu0 %1572
    %v1576 = vsel %vm314, %v1495, 0
    %1578 = vmatprep.subr.mxu0 0.0
    %1579 = vmatpush1.msra.mxu0 0.0
    %1580 = vmatprep.subr.mxu0 0.0
    %1581 = vmatpush1.msra.mxu0 0.0
    %1582 = vmatprep.subr.mxu0 0.0
    %1583 = vmatpush1.msra.mxu0 0.0
    %1584 = vmatprep.subr.mxu0 0.0
    %1585 = vmatpush1.msra.mxu0 0.0
    %1586 = vmatprep.subr.mxu0 0.0
    %1587 = vmatpush1.msra.mxu0 0.0
    %1588 = vmatprep.subr.mxu0 0.0
    %1589 = vmatpush1.msra.mxu0 0.0
    %1590 = vmatprep.subr.mxu0 0.0
    %1591 = vmatpush1.msra.mxu0 0.0
    %1592 = vmatprep.subr.mxu0 0.0
    %1593 = vmatpush1.msra.mxu0 0.0
    %1594 = vmatprep.subr.mxu0 0.0
    %1595 = vmatpush1.msra.mxu0 0.0
    %1596 = vmatprep.subr.mxu0 0.0
    %1597 = vmatpush1.msra.mxu0 0.0
    %1598 = vmatprep.subr.mxu0 0.0
    %1599 = vmatpush1.msra.mxu0 0.0
    %1600 = vmatprep.subr.mxu0 0.0
    %1601 = vmatpush1.msra.mxu0 0.0
    %1602 = vmatprep.subr.mxu0 0.0
    %1603 = vmatpush1.msra.mxu0 0.0
    %1604 = vmatprep.subr.mxu0 0.0
    %1605 = vmatpush1.msra.mxu0 0.0
    %1606 = vmatprep.subr.mxu0 0.0
    %1607 = vmatpush1.msra.mxu0 0.0
    %1608 = vmatprep.subr.mxu0 0.0
    %1609 = vmatpush1.msra.mxu0 %v1573
    %1610 = vmatprep.subr.mxu0 0.0
    %1611 = vmatpush2.msra.mxu0 0.0
    %1612 = vmatprep.subr.mxu0 0.0
    %1613 = vmatpush2.msra.mxu0 0.0
    %1614 = vmatprep.subr.mxu0 0.0
    %1615 = vmatpush2.msra.mxu0 0.0
    %1616 = vmatprep.subr.mxu0 0.0
    %1617 = vmatpush2.msra.mxu0 0.0
    %1618 = vmatprep.subr.mxu0 0.0
    %1619 = vmatpush2.msra.mxu0 0.0
    %1620 = vmatprep.subr.mxu0 0.0
    %1621 = vmatpush2.msra.mxu0 0.0
    %1622 = vmatprep.subr.mxu0 0.0
    %1623 = vmatpush2.msra.mxu0 0.0
    %1624 = vmatprep.subr.mxu0 0.0
    %1625 = vmatpush2.msra.mxu0 0.0
    %1626 = vmatprep.subr.mxu0 0.0
    %1627 = vmatpush2.msra.mxu0 0.0
    %1628 = vmatprep.subr.mxu0 0.0
    %1629 = vmatpush2.msra.mxu0 0.0
    %1630 = vmatprep.subr.mxu0 0.0
    %1631 = vmatpush2.msra.mxu0 0.0
    %1632 = vmatprep.subr.mxu0 0.0
    %1633 = vmatpush2.msra.mxu0 0.0
    %1634 = vmatprep.subr.mxu0 0.0
    %1635 = vmatpush2.msra.mxu0 0.0
    %1636 = vmatprep.subr.mxu0 0.0
    %1637 = vmatpush2.msra.mxu0 0.0
    %1638 = vmatprep.subr.mxu0 0.0
    %1639 = vmatpush2.msra.mxu0 0.0
    %1640 = vmatprep.subr.mxu0 0.0
    %1641 = vmatpush2.msra.mxu0 0.0
    %1642 = vmatprep.mubr.f32.mxu0 0.0
    %1643 = vmatmul.mubr.f32.gmra.mxu0 %v1576
    %v1644 = vpop.f32.mrf.mxu0
    %v1645 = vadd.f32 0.0, %v1644
    %v1646 = vpop.f32.mrf.mxu0
    %1647 = vdwg.mxu0
    %1648 = vrot.lane.b32.xlu0 %v826, 8
    %v1649 = vpop.permute.xlu0 %1648
    %1650 = vrot.lane.b32.xlu0 %v827, 8
    %v1651 = vpop.permute.xlu0 %1650
    %1654 = vrot.lane.b32.xlu0 %v1160, 16
    %v1655 = vpop.permute.xlu0 %1654
    %1656 = vrot.lane.b32.xlu0 %v1161, 16
    %v1657 = vpop.permute.xlu0 %1656
    %1660 = vrot.lane.b32.xlu0 %v1494, 24
    %v1661 = vpop.permute.xlu0 %1660
    %1662 = vrot.lane.b32.xlu0 %v1495, 24
    %v1663 = vpop.permute.xlu0 %1662
    %v1666 = vsel %vm314, %v492, %v1649
    %v1667 = vsel %vm314, %v493, %v1651
    %vm1668 = vcmask 130048
    %v1669 = vsel %vm1668, %v1666, %v1655
    %v1670 = vsel %vm1668, %v1667, %v1657
    %vm1671 = vcmask 195584
    %v1672 = vsel %vm1671, %v1669, %v1661
    %v1673 = vsel %vm1671, %v1670, %v1663
    %1674 = vst.msk [vmem:[#allocation20] sm:$0xff] %vm227, %v1672
    %1675 = vst.msk [vmem:[#allocation20 + $0x8] sm:$0xff] %vm227, %v1673
    %1678 = vrot.lane.b32.xlu0 %v901, 8
    %v1679 = vpop.permute.xlu0 %1678
    %1680 = vrot.lane.b32.xlu0 %v977, 8
    %v1681 = vpop.permute.xlu0 %1680
    %1686 = vrot.lane.b32.xlu0 %v1235, 16
    %v1687 = vpop.permute.xlu0 %1686
    %1688 = vrot.lane.b32.xlu0 %v1311, 16
    %v1689 = vpop.permute.xlu0 %1688
    %1694 = vrot.lane.b32.xlu0 %v1569, 24
    %v1695 = vpop.permute.xlu0 %1694
    %1696 = vrot.lane.b32.xlu0 %v1645, 24
    %v1697 = vpop.permute.xlu0 %1696
    %v1700 = vsel %vm314, %v567, %v1679
    %v1701 = vsel %vm314, %v643, %v1681
    %v1702 = vsel %vm1668, %v1700, %v1687
    %v1703 = vsel %vm1668, %v1701, %v1689
    %v1704 = vsel %vm1671, %v1702, %v1695
    %v1705 = vsel %vm1671, %v1703, %v1697
    %v1706 = vld [vmem:[%s8] sm:$0xff]
    %v1707 = vld [vmem:[%s8 + $0x8] sm:$0xff]
    %v1708 = vld [vmem:[%s8 + $0x10] sm:$0xff]
    %v1709 = vld [vmem:[%s8 + $0x18] sm:$0xff]
    %v1710 = vld [vmem:[#allocation10] sm:$0x1]
    %v1712 = vlaneseq
    %v1713 = vshrl.u32 %v1712, 7
    %v1714 = vsub.s32 0, %v1713
    %v1715 = vrot.slane %v1710, %v1714
    %v1718 = vsel %vm227, %v1704, 0
    %v1721 = vsel %vm227, %v1705, 0
    %1723 = vmatprep.subr.mxu0 0.0
    %1724 = vmatpush1.msra.mxu0 0.0
    %1725 = vmatprep.subr.mxu0 0.0
    %1726 = vmatpush1.msra.mxu0 0.0
    %1727 = vmatprep.subr.mxu0 0.0
    %1728 = vmatpush1.msra.mxu0 0.0
    %1729 = vmatprep.subr.mxu0 0.0
    %1730 = vmatpush1.msra.mxu0 0.0
    %1731 = vmatprep.subr.mxu0 0.0
    %1732 = vmatpush1.msra.mxu0 0.0
    %1733 = vmatprep.subr.mxu0 0.0
    %1734 = vmatpush1.msra.mxu0 0.0
    %1735 = vmatprep.subr.mxu0 0.0
    %1736 = vmatpush1.msra.mxu0 0.0
    %1737 = vmatprep.subr.mxu0 0.0
    %1738 = vmatpush1.msra.mxu0 0.0
    %1739 = vmatprep.subr.mxu0 0.0
    %1740 = vmatpush1.msra.mxu0 0.0
    %1741 = vmatprep.subr.mxu0 0.0
    %1742 = vmatpush1.msra.mxu0 0.0
    %1743 = vmatprep.subr.mxu0 0.0
    %1744 = vmatpush1.msra.mxu0 0.0
    %1745 = vmatprep.subr.mxu0 0.0
    %1746 = vmatpush1.msra.mxu0 0.0
    %1747 = vmatprep.subr.mxu0 0.0
    %1748 = vmatpush1.msra.mxu0 %v1709
    %1749 = vmatprep.subr.mxu0 0.0
    %1750 = vmatpush1.msra.mxu0 %v1708
    %1751 = vmatprep.subr.mxu0 0.0
    %1752 = vmatpush1.msra.mxu0 %v1707
    %1753 = vmatprep.subr.mxu0 0.0
    %1754 = vmatpush1.msra.mxu0 %v1706
    %1755 = vmatprep.subr.mxu0 0.0
    %1756 = vmatpush2.msra.mxu0 0.0
    %1757 = vmatprep.subr.mxu0 0.0
    %1758 = vmatpush2.msra.mxu0 0.0
    %1759 = vmatprep.subr.mxu0 0.0
    %1760 = vmatpush2.msra.mxu0 0.0
    %1761 = vmatprep.subr.mxu0 0.0
    %1762 = vmatpush2.msra.mxu0 0.0
    %1763 = vmatprep.subr.mxu0 0.0
    %1764 = vmatpush2.msra.mxu0 0.0
    %1765 = vmatprep.subr.mxu0 0.0
    %1766 = vmatpush2.msra.mxu0 0.0
    %1767 = vmatprep.subr.mxu0 0.0
    %1768 = vmatpush2.msra.mxu0 0.0
    %1769 = vmatprep.subr.mxu0 0.0
    %1770 = vmatpush2.msra.mxu0 0.0
    %1771 = vmatprep.subr.mxu0 0.0
    %1772 = vmatpush2.msra.mxu0 0.0
    %1773 = vmatprep.subr.mxu0 0.0
    %1774 = vmatpush2.msra.mxu0 0.0
    %1775 = vmatprep.subr.mxu0 0.0
    %1776 = vmatpush2.msra.mxu0 0.0
    %1777 = vmatprep.subr.mxu0 0.0
    %1778 = vmatpush2.msra.mxu0 0.0
    %1779 = vmatprep.subr.mxu0 0.0
    %1780 = vmatpush2.msra.mxu0 0.0
    %1781 = vmatprep.subr.mxu0 0.0
    %1782 = vmatpush2.msra.mxu0 0.0
    %1783 = vmatprep.subr.mxu0 0.0
    %1784 = vmatpush2.msra.mxu0 0.0
    %1785 = vmatprep.subr.mxu0 0.0
    %1786 = vmatpush2.msra.mxu0 0.0
    %1787 = vmatprep.mubr.f32.mxu0 0.0
    %1788 = vmatmul.mubr.f32.gmra.mxu0 %v1718
    %v1789 = vpop.f32.mrf.mxu0
    %v1790 = vadd.f32 %v1715, %v1789
    %v1791 = vpop.f32.mrf.mxu0
    %1792 = vmatprep.mubr.f32.mxu0 0.0
    %1793 = vmatmul.mubr.f32.gmra.mxu0 %v1721
    %v1794 = vpop.f32.mrf.mxu0
    %v1795 = vadd.f32 %v1715, %v1794
    %v1796 = vpop.f32.mrf.mxu0
    %1797 = vdwg.mxu0
    %v1798 = vld [vmem:[#allocation2] sm:$0xff]
    %v1799 = vld [vmem:[#allocation2 + $0x8] sm:$0xff]
    %v1800 = vadd.f32 %v1790, %v1798
    %v1801 = vadd.f32 %v1795, %v1799
    %v1802 = vld [vmem:[#allocation11] sm:$0x1]
    %v1803 = vld [vmem:[#allocation13] sm:$0x1]
    %v1804 = vsel %vm227, %v1800, 0.0
    %1805 = vadd.xlane.f32.xlu0 %v1804
    %v1806 = vpop.xlane.xlu0 %1805
    %v1807 = vsel %vm227, %v1801, 0.0
    %1808 = vadd.xlane.f32.xlu0 %v1807
    %v1809 = vpop.xlane.xlu0 %1808
    %v1810 = vrcp.pop 32.0
    %v1811 = vmul.f32 %v1806, %v1810
    %v1812 = vmul.f32 %v1809, %v1810
    %v1813 = vsub.f32 %v1800, %v1811
    %v1814 = vsub.f32 %v1801, %v1812
    %v1815 = vmul.f32 %v1813, %v1813
    %v1816 = vmul.f32 %v1814, %v1814
    %v1817 = vsel %vm227, %v1815, 0.0
    %1818 = vadd.xlane.f32.xlu0 %v1817
    %v1819 = vpop.xlane.xlu0 %1818
    %v1820 = vsel %vm227, %v1816, 0.0
    %1821 = vadd.xlane.f32.xlu0 %v1820
    %v1822 = vpop.xlane.xlu0 %1821
    %v1823 = vmul.f32 %v1819, %v1810
    %v1824 = vmul.f32 %v1822, %v1810
    %v1825 = vadd.f32 %v1823, 1e-05
    %v1826 = vadd.f32 %v1824, 1e-05
    %v1827 = vrsqrt.pop %v1825
    %v1828 = vrsqrt.pop %v1826
    %v1829 = vmul.f32 %v1813, %v1827
    %v1830 = vmul.f32 %v1814, %v1828
    %v1832 = vlaneseq
    %v1833 = vshrl.u32 %v1832, 7
    %v1834 = vsub.s32 0, %v1833
    %v1835 = vrot.slane %v1802, %v1834
    %v1837 = vmul.f32 %v1829, %v1835
    %v1838 = vmul.f32 %v1830, %v1835
    %v1840 = vlaneseq
    %v1841 = vshrl.u32 %v1840, 7
    %v1842 = vsub.s32 0, %v1841
    %v1843 = vrot.slane %v1803, %v1842
    %v1845 = vadd.f32 %v1837, %v1843
    %v1846 = vadd.f32 %v1838, %v1843
    %v1847 = vld [vmem:[%s2] sm:$0xff]
    %v1848 = vld [vmem:[%s2 + $0x8] sm:$0xff]
    %1850 = vset.pattern.permute.xlu0 0
    %1851 = vperm.xlu0 %1850, %v1847
    %v1852 = vpop.permute.xlu0 %1851
    %1855 = vset.pattern.permute.xlu0 0
    %1856 = vperm.xlu0 %1855, %v1848
    %v1857 = vpop.permute.xlu0 %1856
    %v1859 = vmul.f32 %v1845, %v1852
    %v1860 = vmul.f32 %v1846, %v1857
    %v1861 = vld [vmem:[#allocation5] sm:$0xff]
    %v1862 = vld [vmem:[#allocation5 + $0x8] sm:$0xff]
    %v1863 = vld [vmem:[%s12] sm:$0xff]
    %v1864 = vld [vmem:[%s12 + $0x8] sm:$0xff]
    %v1865 = vld [vmem:[%s12 + $0x10] sm:$0xff]
    %v1866 = vld [vmem:[%s12 + $0x18] sm:$0xff]
    %v1867 = vld [vmem:[#allocation14] sm:$0x1]
    %v1869 = vlaneseq
    %v1870 = vshrl.u32 %v1869, 7
    %v1871 = vsub.s32 0, %v1870
    %v1872 = vrot.slane %v1867, %v1871
    %v1875 = vsel %vm227, %v1861, 0
    %v1878 = vsel %vm227, %v1862, 0
    %1880 = vmatprep.subr.mxu0 0.0
    %1881 = vmatpush1.msra.mxu0 0.0
    %1882 = vmatprep.subr.mxu0 0.0
    %1883 = vmatpush1.msra.mxu0 0.0
    %1884 = vmatprep.subr.mxu0 0.0
    %1885 = vmatpush1.msra.mxu0 0.0
    %1886 = vmatprep.subr.mxu0 0.0
    %1887 = vmatpush1.msra.mxu0 0.0
    %1888 = vmatprep.subr.mxu0 0.0
    %1889 = vmatpush1.msra.mxu0 0.0
    %1890 = vmatprep.subr.mxu0 0.0
    %1891 = vmatpush1.msra.mxu0 0.0
    %1892 = vmatprep.subr.mxu0 0.0
    %1893 = vmatpush1.msra.mxu0 0.0
    %1894 = vmatprep.subr.mxu0 0.0
    %1895 = vmatpush1.msra.mxu0 0.0
    %1896 = vmatprep.subr.mxu0 0.0
    %1897 = vmatpush1.msra.mxu0 0.0
    %1898 = vmatprep.subr.mxu0 0.0
    %1899 = vmatpush1.msra.mxu0 0.0
    %1900 = vmatprep.subr.mxu0 0.0
    %1901 = vmatpush1.msra.mxu0 0.0
    %1902 = vmatprep.subr.mxu0 0.0
    %1903 = vmatpush1.msra.mxu0 0.0
    %1904 = vmatprep.subr.mxu0 0.0
    %1905 = vmatpush1.msra.mxu0 %v1866
    %1906 = vmatprep.subr.mxu0 0.0
    %1907 = vmatpush1.msra.mxu0 %v1865
    %1908 = vmatprep.subr.mxu0 0.0
    %1909 = vmatpush1.msra.mxu0 %v1864
    %1910 = vmatprep.subr.mxu0 0.0
    %1911 = vmatpush1.msra.mxu0 %v1863
    %1912 = vmatprep.subr.mxu0 0.0
    %1913 = vmatpush2.msra.mxu0 0.0
    %1914 = vmatprep.subr.mxu0 0.0
    %1915 = vmatpush2.msra.mxu0 0.0
    %1916 = vmatprep.subr.mxu0 0.0
    %1917 = vmatpush2.msra.mxu0 0.0
    %1918 = vmatprep.subr.mxu0 0.0
    %1919 = vmatpush2.msra.mxu0 0.0
    %1920 = vmatprep.subr.mxu0 0.0
    %1921 = vmatpush2.msra.mxu0 0.0
    %1922 = vmatprep.subr.mxu0 0.0
    %1923 = vmatpush2.msra.mxu0 0.0
    %1924 = vmatprep.subr.mxu0 0.0
    %1925 = vmatpush2.msra.mxu0 0.0
    %1926 = vmatprep.subr.mxu0 0.0
    %1927 = vmatpush2.msra.mxu0 0.0
    %1928 = vmatprep.subr.mxu0 0.0
    %1929 = vmatpush2.msra.mxu0 0.0
    %1930 = vmatprep.subr.mxu0 0.0
    %1931 = vmatpush2.msra.mxu0 0.0
    %1932 = vmatprep.subr.mxu0 0.0
    %1933 = vmatpush2.msra.mxu0 0.0
    %1934 = vmatprep.subr.mxu0 0.0
    %1935 = vmatpush2.msra.mxu0 0.0
    %1936 = vmatprep.subr.mxu0 0.0
    %1937 = vmatpush2.msra.mxu0 0.0
    %1938 = vmatprep.subr.mxu0 0.0
    %1939 = vmatpush2.msra.mxu0 0.0
    %1940 = vmatprep.subr.mxu0 0.0
    %1941 = vmatpush2.msra.mxu0 0.0
    %1942 = vmatprep.subr.mxu0 0.0
    %1943 = vmatpush2.msra.mxu0 0.0
    %1944 = vmatprep.mubr.f32.mxu0 0.0
    %1945 = vmatmul.mubr.f32.gmra.mxu0 %v1875
    %v1946 = vpop.f32.mrf.mxu0
    %v1947 = vadd.f32 %v1872, %v1946
    %v1948 = vpop.f32.mrf.mxu0
    %1949 = vmatprep.mubr.f32.mxu0 0.0
    %1950 = vmatmul.mubr.f32.gmra.mxu0 %v1878
    %v1951 = vpop.f32.mrf.mxu0
    %v1952 = vadd.f32 %v1872, %v1951
    %v1953 = vpop.f32.mrf.mxu0
    %1954 = vdwg.mxu0
    %v1955 = vld [vmem:[%s14] sm:$0xff]
    %v1956 = vld [vmem:[%s14 + $0x8] sm:$0xff]
    %v1957 = vld [vmem:[%s14 + $0x10] sm:$0xff]
    %v1958 = vld [vmem:[%s14 + $0x18] sm:$0xff]
    %v1959 = vld [vmem:[#allocation16] sm:$0x1]
    %v1961 = vlaneseq
    %v1962 = vshrl.u32 %v1961, 7
    %v1963 = vsub.s32 0, %v1962
    %v1964 = vrot.slane %v1959, %v1963
    %v1967 = vsel %vm227, %v1859, 0
    %v1970 = vsel %vm227, %v1860, 0
    %1972 = vmatprep.subr.mxu0 0.0
    %1973 = vmatpush1.msra.mxu0 0.0
    %1974 = vmatprep.subr.mxu0 0.0
    %1975 = vmatpush1.msra.mxu0 0.0
    %1976 = vmatprep.subr.mxu0 0.0
    %1977 = vmatpush1.msra.mxu0 0.0
    %1978 = vmatprep.subr.mxu0 0.0
    %1979 = vmatpush1.msra.mxu0 0.0
    %1980 = vmatprep.subr.mxu0 0.0
    %1981 = vmatpush1.msra.mxu0 0.0
    %1982 = vmatprep.subr.mxu0 0.0
    %1983 = vmatpush1.msra.mxu0 0.0
    %1984 = vmatprep.subr.mxu0 0.0
    %1985 = vmatpush1.msra.mxu0 0.0
    %1986 = vmatprep.subr.mxu0 0.0
    %1987 = vmatpush1.msra.mxu0 0.0
    %1988 = vmatprep.subr.mxu0 0.0
    %1989 = vmatpush1.msra.mxu0 0.0
    %1990 = vmatprep.subr.mxu0 0.0
    %1991 = vmatpush1.msra.mxu0 0.0
    %1992 = vmatprep.subr.mxu0 0.0
    %1993 = vmatpush1.msra.mxu0 0.0
    %1994 = vmatprep.subr.mxu0 0.0
    %1995 = vmatpush1.msra.mxu0 0.0
    %1996 = vmatprep.subr.mxu0 0.0
    %1997 = vmatpush1.msra.mxu0 %v1958
    %1998 = vmatprep.subr.mxu0 0.0
    %1999 = vmatpush1.msra.mxu0 %v1957
    %2000 = vmatprep.subr.mxu0 0.0
    %2001 = vmatpush1.msra.mxu0 %v1956
    %2002 = vmatprep.subr.mxu0 0.0
    %2003 = vmatpush1.msra.mxu0 %v1955
    %2004 = vmatprep.subr.mxu0 0.0
    %2005 = vmatpush2.msra.mxu0 0.0
    %2006 = vmatprep.subr.mxu0 0.0
    %2007 = vmatpush2.msra.mxu0 0.0
    %2008 = vmatprep.subr.mxu0 0.0
    %2009 = vmatpush2.msra.mxu0 0.0
    %2010 = vmatprep.subr.mxu0 0.0
    %2011 = vmatpush2.msra.mxu0 0.0
    %2012 = vmatprep.subr.mxu0 0.0
    %2013 = vmatpush2.msra.mxu0 0.0
    %2014 = vmatprep.subr.mxu0 0.0
    %2015 = vmatpush2.msra.mxu0 0.0
    %2016 = vmatprep.subr.mxu0 0.0
    %2017 = vmatpush2.msra.mxu0 0.0
    %2018 = vmatprep.subr.mxu0 0.0
    %2019 = vmatpush2.msra.mxu0 0.0
    %2020 = vmatprep.subr.mxu0 0.0
    %2021 = vmatpush2.msra.mxu0 0.0
    %2022 = vmatprep.subr.mxu0 0.0
    %2023 = vmatpush2.msra.mxu0 0.0
    %2024 = vmatprep.subr.mxu0 0.0
    %2025 = vmatpush2.msra.mxu0 0.0
    %2026 = vmatprep.subr.mxu0 0.0
    %2027 = vmatpush2.msra.mxu0 0.0
    %2028 = vmatprep.subr.mxu0 0.0
    %2029 = vmatpush2.msra.mxu0 0.0
    %2030 = vmatprep.subr.mxu0 0.0
    %2031 = vmatpush2.msra.mxu0 0.0
    %2032 = vmatprep.subr.mxu0 0.0
    %2033 = vmatpush2.msra.mxu0 0.0
    %2034 = vmatprep.subr.mxu0 0.0
    %2035 = vmatpush2.msra.mxu0 0.0
    %2036 = vmatprep.mubr.f32.mxu0 0.0
    %2037 = vmatmul.mubr.f32.gmra.mxu0 %v1967
    %v2038 = vpop.f32.mrf.mxu0
    %v2039 = vadd.f32 %v1964, %v2038
    %v2040 = vpop.f32.mrf.mxu0
    %2041 = vmatprep.mubr.f32.mxu0 0.0
    %2042 = vmatmul.mubr.f32.gmra.mxu0 %v1970
    %v2043 = vpop.f32.mrf.mxu0
    %v2044 = vadd.f32 %v1964, %v2043
    %v2045 = vpop.f32.mrf.mxu0
    %2046 = vdwg.mxu0
    %v2047 = vld [vmem:[#allocation8] sm:$0xff]
    %v2048 = vld [vmem:[#allocation8 + $0x8] sm:$0xff]
    %v2050 = vsel %vm314, %v1947, 0
    %v2053 = vsel %vm314, %v2039, 0
    %2055 = vmatprep.subr.mxu0 0.0
    %2056 = vmatpush1.xpose.msra.mxu0 0.0
    %2057 = vmatprep.subr.mxu0 0.0
    %2058 = vmatpush1.xpose.msra.mxu0 0.0
    %2059 = vmatprep.subr.mxu0 0.0
    %2060 = vmatpush1.xpose.msra.mxu0 0.0
    %2061 = vmatprep.subr.mxu0 0.0
    %2062 = vmatpush1.xpose.msra.mxu0 0.0
    %2063 = vmatprep.subr.mxu0 0.0
    %2064 = vmatpush1.xpose.msra.mxu0 0.0
    %2065 = vmatprep.subr.mxu0 0.0
    %2066 = vmatpush1.xpose.msra.mxu0 0.0
    %2067 = vmatprep.subr.mxu0 0.0
    %2068 = vmatpush1.xpose.msra.mxu0 0.0
    %2069 = vmatprep.subr.mxu0 0.0
    %2070 = vmatpush1.xpose.msra.mxu0 0.0
    %2071 = vmatprep.subr.mxu0 0.0
    %2072 = vmatpush1.xpose.msra.mxu0 0.0
    %2073 = vmatprep.subr.mxu0 0.0
    %2074 = vmatpush1.xpose.msra.mxu0 0.0
    %2075 = vmatprep.subr.mxu0 0.0
    %2076 = vmatpush1.xpose.msra.mxu0 0.0
    %2077 = vmatprep.subr.mxu0 0.0
    %2078 = vmatpush1.xpose.msra.mxu0 0.0
    %2079 = vmatprep.subr.mxu0 0.0
    %2080 = vmatpush1.xpose.msra.mxu0 0.0
    %2081 = vmatprep.subr.mxu0 0.0
    %2082 = vmatpush1.xpose.msra.mxu0 0.0
    %2083 = vmatprep.subr.mxu0 0.0
    %2084 = vmatpush1.xpose.msra.mxu0 0.0
    %2085 = vmatprep.subr.mxu0 0.0
    %2086 = vmatpush1.xpose.msra.mxu0 %v2053
    %2087 = vmatprep.subr.mxu0 0.0
    %2088 = vmatpush2.xpose.msra.mxu0 0.0
    %2089 = vmatprep.subr.mxu0 0.0
    %2090 = vmatpush2.xpose.msra.mxu0 0.0
    %2091 = vmatprep.subr.mxu0 0.0
    %2092 = vmatpush2.xpose.msra.mxu0 0.0
    %2093 = vmatprep.subr.mxu0 0.0
    %2094 = vmatpush2.xpose.msra.mxu0 0.0
    %2095 = vmatprep.subr.mxu0 0.0
    %2096 = vmatpush2.xpose.msra.mxu0 0.0
    %2097 = vmatprep.subr.mxu0 0.0
    %2098 = vmatpush2.xpose.msra.mxu0 0.0
    %2099 = vmatprep.subr.mxu0 0.0
    %2100 = vmatpush2.xpose.msra.mxu0 0.0
    %2101 = vmatprep.subr.mxu0 0.0
    %2102 = vmatpush2.xpose.msra.mxu0 0.0
    %2103 = vmatprep.subr.mxu0 0.0
    %2104 = vmatpush2.xpose.msra.mxu0 0.0
    %2105 = vmatprep.subr.mxu0 0.0
    %2106 = vmatpush2.xpose.msra.mxu0 0.0
    %2107 = vmatprep.subr.mxu0 0.0
    %2108 = vmatpush2.xpose.msra.mxu0 0.0
    %2109 = vmatprep.subr.mxu0 0.0
    %2110 = vmatpush2.xpose.msra.mxu0 0.0
    %2111 = vmatprep.subr.mxu0 0.0
    %2112 = vmatpush2.xpose.msra.mxu0 0.0
    %2113 = vmatprep.subr.mxu0 0.0
    %2114 = vmatpush2.xpose.msra.mxu0 0.0
    %2115 = vmatprep.subr.mxu0 0.0
    %2116 = vmatpush2.xpose.msra.mxu0 0.0
    %2117 = vmatprep.subr.mxu0 0.0
    %2118 = vmatpush2.xpose.msra.mxu0 0.0
    %2119 = vmatprep.mubr.f32.mxu0 0.0
    %2120 = vmatmul.mubr.f32.gmra.mxu0 %v2050
    %v2121 = vpop.f32.mrf.mxu0
    %v2122 = vadd.f32 0.0, %v2121
    %v2123 = vpop.f32.mrf.mxu0
    %2124 = vdwg.mxu0
    %v2126 = vsel %vm314, %v1952, 0
    %v2129 = vsel %vm314, %v2044, 0
    %2131 = vmatprep.subr.mxu0 0.0
    %2132 = vmatpush1.xpose.msra.mxu0 0.0
    %2133 = vmatprep.subr.mxu0 0.0
    %2134 = vmatpush1.xpose.msra.mxu0 0.0
    %2135 = vmatprep.subr.mxu0 0.0
    %2136 = vmatpush1.xpose.msra.mxu0 0.0
    %2137 = vmatprep.subr.mxu0 0.0
    %2138 = vmatpush1.xpose.msra.mxu0 0.0
    %2139 = vmatprep.subr.mxu0 0.0
    %2140 = vmatpush1.xpose.msra.mxu0 0.0
    %2141 = vmatprep.subr.mxu0 0.0
    %2142 = vmatpush1.xpose.msra.mxu0 0.0
    %2143 = vmatprep.subr.mxu0 0.0
    %2144 = vmatpush1.xpose.msra.mxu0 0.0
    %2145 = vmatprep.subr.mxu0 0.0
    %2146 = vmatpush1.xpose.msra.mxu0 0.0
    %2147 = vmatprep.subr.mxu0 0.0
    %2148 = vmatpush1.xpose.msra.mxu0 0.0
    %2149 = vmatprep.subr.mxu0 0.0
    %2150 = vmatpush1.xpose.msra.mxu0 0.0
    %2151 = vmatprep.subr.mxu0 0.0
    %2152 = vmatpush1.xpose.msra.mxu0 0.0
    %2153 = vmatprep.subr.mxu0 0.0
    %2154 = vmatpush1.xpose.msra.mxu0 0.0
    %2155 = vmatprep.subr.mxu0 0.0
    %2156 = vmatpush1.xpose.msra.mxu0 0.0
    %2157 = vmatprep.subr.mxu0 0.0
    %2158 = vmatpush1.xpose.msra.mxu0 0.0
    %2159 = vmatprep.subr.mxu0 0.0
    %2160 = vmatpush1.xpose.msra.mxu0 0.0
    %2161 = vmatprep.subr.mxu0 0.0
    %2162 = vmatpush1.xpose.msra.mxu0 %v2129
    %2163 = vmatprep.subr.mxu0 0.0
    %2164 = vmatpush2.xpose.msra.mxu0 0.0
    %2165 = vmatprep.subr.mxu0 0.0
    %2166 = vmatpush2.xpose.msra.mxu0 0.0
    %2167 = vmatprep.subr.mxu0 0.0
    %2168 = vmatpush2.xpose.msra.mxu0 0.0
    %2169 = vmatprep.subr.mxu0 0.0
    %2170 = vmatpush2.xpose.msra.mxu0 0.0
    %2171 = vmatprep.subr.mxu0 0.0
    %2172 = vmatpush2.xpose.msra.mxu0 0.0
    %2173 = vmatprep.subr.mxu0 0.0
    %2174 = vmatpush2.xpose.msra.mxu0 0.0
    %2175 = vmatprep.subr.mxu0 0.0
    %2176 = vmatpush2.xpose.msra.mxu0 0.0
    %2177 = vmatprep.subr.mxu0 0.0
    %2178 = vmatpush2.xpose.msra.mxu0 0.0
    %2179 = vmatprep.subr.mxu0 0.0
    %2180 = vmatpush2.xpose.msra.mxu0 0.0
    %2181 = vmatprep.subr.mxu0 0.0
    %2182 = vmatpush2.xpose.msra.mxu0 0.0
    %2183 = vmatprep.subr.mxu0 0.0
    %2184 = vmatpush2.xpose.msra.mxu0 0.0
    %2185 = vmatprep.subr.mxu0 0.0
    %2186 = vmatpush2.xpose.msra.mxu0 0.0
    %2187 = vmatprep.subr.mxu0 0.0
    %2188 = vmatpush2.xpose.msra.mxu0 0.0
    %2189 = vmatprep.subr.mxu0 0.0
    %2190 = vmatpush2.xpose.msra.mxu0 0.0
    %2191 = vmatprep.subr.mxu0 0.0
    %2192 = vmatpush2.xpose.msra.mxu0 0.0
    %2193 = vmatprep.subr.mxu0 0.0
    %2194 = vmatpush2.xpose.msra.mxu0 0.0
    %2195 = vmatprep.mubr.f32.mxu0 0.0
    %2196 = vmatmul.mubr.f32.gmra.mxu0 %v2126
    %v2197 = vpop.f32.mrf.mxu0
    %v2198 = vadd.f32 0.0, %v2197
    %v2199 = vpop.f32.mrf.mxu0
    %2200 = vdwg.mxu0
    %v2201 = vmul.f32 %v2122, 0.35355338
    %v2202 = vmul.f32 %v2198, 0.35355338
    %vm2203 = vcmp.gt.f32.partialorder %v2047, 0.0
    %vm2204 = vcmp.gt.f32.partialorder %v2048, 0.0
    %v2205 = vsel %vm2203, -1e+30, %v2201
    %v2206 = vsel %vm2204, -1e+30, %v2202
    %v2207 = vsel %vm314, %v2205, -inf
    %2208 = vmax.xlane.f32.xlu0 %v2207
    %v2209 = vpop.xlane.xlu0 %2208
    %v2210 = vsel %vm314, %v2206, -inf
    %2211 = vmax.xlane.f32.xlu0 %v2210
    %v2212 = vpop.xlane.xlu0 %2211
    %v2213 = vsub.f32 %v2205, %v2209
    %v2214 = vsub.f32 %v2206, %v2212
    %v2215 = vmul.f32 %v2213, 1.442695
    %v2216 = vpow.pop %v2215
    %v2217 = vmul.f32 %v2214, 1.442695
    %v2218 = vpow.pop %v2217
    %v2219 = vsel %vm314, %v2216, 0.0
    %2220 = vadd.xlane.f32.xlu0 %v2219
    %v2221 = vpop.xlane.xlu0 %2220
    %v2222 = vsel %vm314, %v2218, 0.0
    %2223 = vadd.xlane.f32.xlu0 %v2222
    %v2224 = vpop.xlane.xlu0 %2223
    %v2225 = vrcp.pop %v2221
    %v2226 = vrcp.pop %v2224
    %v2227 = vmul.f32 %v2216, %v2225
    %v2228 = vmul.f32 %v2218, %v2226
    %2229 = vrot.lane.b32.xlu0 %v2039, 96
    %v2230 = vpop.permute.xlu0 %2229
    %v2233 = vsel %vm314, %v2227, 0
    %2235 = vmatprep.subr.mxu0 0.0
    %2236 = vmatpush1.msra.mxu0 0.0
    %2237 = vmatprep.subr.mxu0 0.0
    %2238 = vmatpush1.msra.mxu0 0.0
    %2239 = vmatprep.subr.mxu0 0.0
    %2240 = vmatpush1.msra.mxu0 0.0
    %2241 = vmatprep.subr.mxu0 0.0
    %2242 = vmatpush1.msra.mxu0 0.0
    %2243 = vmatprep.subr.mxu0 0.0
    %2244 = vmatpush1.msra.mxu0 0.0
    %2245 = vmatprep.subr.mxu0 0.0
    %2246 = vmatpush1.msra.mxu0 0.0
    %2247 = vmatprep.subr.mxu0 0.0
    %2248 = vmatpush1.msra.mxu0 0.0
    %2249 = vmatprep.subr.mxu0 0.0
    %2250 = vmatpush1.msra.mxu0 0.0
    %2251 = vmatprep.subr.mxu0 0.0
    %2252 = vmatpush1.msra.mxu0 0.0
    %2253 = vmatprep.subr.mxu0 0.0
    %2254 = vmatpush1.msra.mxu0 0.0
    %2255 = vmatprep.subr.mxu0 0.0
    %2256 = vmatpush1.msra.mxu0 0.0
    %2257 = vmatprep.subr.mxu0 0.0
    %2258 = vmatpush1.msra.mxu0 0.0
    %2259 = vmatprep.subr.mxu0 0.0
    %2260 = vmatpush1.msra.mxu0 0.0
    %2261 = vmatprep.subr.mxu0 0.0
    %2262 = vmatpush1.msra.mxu0 0.0
    %2263 = vmatprep.subr.mxu0 0.0
    %2264 = vmatpush1.msra.mxu0 0.0
    %2265 = vmatprep.subr.mxu0 0.0
    %2266 = vmatpush1.msra.mxu0 %v2230
    %2267 = vmatprep.subr.mxu0 0.0
    %2268 = vmatpush2.msra.mxu0 0.0
    %2269 = vmatprep.subr.mxu0 0.0
    %2270 = vmatpush2.msra.mxu0 0.0
    %2271 = vmatprep.subr.mxu0 0.0
    %2272 = vmatpush2.msra.mxu0 0.0
    %2273 = vmatprep.subr.mxu0 0.0
    %2274 = vmatpush2.msra.mxu0 0.0
    %2275 = vmatprep.subr.mxu0 0.0
    %2276 = vmatpush2.msra.mxu0 0.0
    %2277 = vmatprep.subr.mxu0 0.0
    %2278 = vmatpush2.msra.mxu0 0.0
    %2279 = vmatprep.subr.mxu0 0.0
    %2280 = vmatpush2.msra.mxu0 0.0
    %2281 = vmatprep.subr.mxu0 0.0
    %2282 = vmatpush2.msra.mxu0 0.0
    %2283 = vmatprep.subr.mxu0 0.0
    %2284 = vmatpush2.msra.mxu0 0.0
    %2285 = vmatprep.subr.mxu0 0.0
    %2286 = vmatpush2.msra.mxu0 0.0
    %2287 = vmatprep.subr.mxu0 0.0
    %2288 = vmatpush2.msra.mxu0 0.0
    %2289 = vmatprep.subr.mxu0 0.0
    %2290 = vmatpush2.msra.mxu0 0.0
    %2291 = vmatprep.subr.mxu0 0.0
    %2292 = vmatpush2.msra.mxu0 0.0
    %2293 = vmatprep.subr.mxu0 0.0
    %2294 = vmatpush2.msra.mxu0 0.0
    %2295 = vmatprep.subr.mxu0 0.0
    %2296 = vmatpush2.msra.mxu0 0.0
    %2297 = vmatprep.subr.mxu0 0.0
    %2298 = vmatpush2.msra.mxu0 0.0
    %2299 = vmatprep.mubr.f32.mxu0 0.0
    %2300 = vmatmul.mubr.f32.gmra.mxu0 %v2233
    %v2301 = vpop.f32.mrf.mxu0
    %v2302 = vadd.f32 0.0, %v2301
    %v2303 = vpop.f32.mrf.mxu0
    %2304 = vdwg.mxu0
    %2305 = vrot.lane.b32.xlu0 %v2044, 96
    %v2306 = vpop.permute.xlu0 %2305
    %v2309 = vsel %vm314, %v2228, 0
    %2311 = vmatprep.subr.mxu0 0.0
    %2312 = vmatpush1.msra.mxu0 0.0
    %2313 = vmatprep.subr.mxu0 0.0
    %2314 = vmatpush1.msra.mxu0 0.0
    %2315 = vmatprep.subr.mxu0 0.0
    %2316 = vmatpush1.msra.mxu0 0.0
    %2317 = vmatprep.subr.mxu0 0.0
    %2318 = vmatpush1.msra.mxu0 0.0
    %2319 = vmatprep.subr.mxu0 0.0
    %2320 = vmatpush1.msra.mxu0 0.0
    %2321 = vmatprep.subr.mxu0 0.0
    %2322 = vmatpush1.msra.mxu0 0.0
    %2323 = vmatprep.subr.mxu0 0.0
    %2324 = vmatpush1.msra.mxu0 0.0
    %2325 = vmatprep.subr.mxu0 0.0
    %2326 = vmatpush1.msra.mxu0 0.0
    %2327 = vmatprep.subr.mxu0 0.0
    %2328 = vmatpush1.msra.mxu0 0.0
    %2329 = vmatprep.subr.mxu0 0.0
    %2330 = vmatpush1.msra.mxu0 0.0
    %2331 = vmatprep.subr.mxu0 0.0
    %2332 = vmatpush1.msra.mxu0 0.0
    %2333 = vmatprep.subr.mxu0 0.0
    %2334 = vmatpush1.msra.mxu0 0.0
    %2335 = vmatprep.subr.mxu0 0.0
    %2336 = vmatpush1.msra.mxu0 0.0
    %2337 = vmatprep.subr.mxu0 0.0
    %2338 = vmatpush1.msra.mxu0 0.0
    %2339 = vmatprep.subr.mxu0 0.0
    %2340 = vmatpush1.msra.mxu0 0.0
    %2341 = vmatprep.subr.mxu0 0.0
    %2342 = vmatpush1.msra.mxu0 %v2306
    %2343 = vmatprep.subr.mxu0 0.0
    %2344 = vmatpush2.msra.mxu0 0.0
    %2345 = vmatprep.subr.mxu0 0.0
    %2346 = vmatpush2.msra.mxu0 0.0
    %2347 = vmatprep.subr.mxu0 0.0
    %2348 = vmatpush2.msra.mxu0 0.0
    %2349 = vmatprep.subr.mxu0 0.0
    %2350 = vmatpush2.msra.mxu0 0.0
    %2351 = vmatprep.subr.mxu0 0.0
    %2352 = vmatpush2.msra.mxu0 0.0
    %2353 = vmatprep.subr.mxu0 0.0
    %2354 = vmatpush2.msra.mxu0 0.0
    %2355 = vmatprep.subr.mxu0 0.0
    %2356 = vmatpush2.msra.mxu0 0.0
    %2357 = vmatprep.subr.mxu0 0.0
    %2358 = vmatpush2.msra.mxu0 0.0
    %2359 = vmatprep.subr.mxu0 0.0
    %2360 = vmatpush2.msra.mxu0 0.0
    %2361 = vmatprep.subr.mxu0 0.0
    %2362 = vmatpush2.msra.mxu0 0.0
    %2363 = vmatprep.subr.mxu0 0.0
    %2364 = vmatpush2.msra.mxu0 0.0
    %2365 = vmatprep.subr.mxu0 0.0
    %2366 = vmatpush2.msra.mxu0 0.0
    %2367 = vmatprep.subr.mxu0 0.0
    %2368 = vmatpush2.msra.mxu0 0.0
    %2369 = vmatprep.subr.mxu0 0.0
    %2370 = vmatpush2.msra.mxu0 0.0
    %2371 = vmatprep.subr.mxu0 0.0
    %2372 = vmatpush2.msra.mxu0 0.0
    %2373 = vmatprep.subr.mxu0 0.0
    %2374 = vmatpush2.msra.mxu0 0.0
    %2375 = vmatprep.mubr.f32.mxu0 0.0
    %2376 = vmatmul.mubr.f32.gmra.mxu0 %v2309
    %v2377 = vpop.f32.mrf.mxu0
    %v2378 = vadd.f32 0.0, %v2377
    %v2379 = vpop.f32.mrf.mxu0
    %2380 = vdwg.mxu0
    %2381 = vrot.lane.b32.xlu0 %v1947, 120
    %v2382 = vpop.permute.xlu0 %2381
    %2383 = vrot.lane.b32.xlu0 %v2039, 120
    %v2384 = vpop.permute.xlu0 %2383
    %v2385 = vsel %vm314, %v2382, 0
    %v2387 = vsel %vm314, %v2384, 0
    %2389 = vmatprep.subr.mxu0 0.0
    %2390 = vmatpush1.xpose.msra.mxu0 0.0
    %2391 = vmatprep.subr.mxu0 0.0
    %2392 = vmatpush1.xpose.msra.mxu0 0.0
    %2393 = vmatprep.subr.mxu0 0.0
    %2394 = vmatpush1.xpose.msra.mxu0 0.0
    %2395 = vmatprep.subr.mxu0 0.0
    %2396 = vmatpush1.xpose.msra.mxu0 0.0
    %2397 = vmatprep.subr.mxu0 0.0
    %2398 = vmatpush1.xpose.msra.mxu0 0.0
    %2399 = vmatprep.subr.mxu0 0.0
    %2400 = vmatpush1.xpose.msra.mxu0 0.0
    %2401 = vmatprep.subr.mxu0 0.0
    %2402 = vmatpush1.xpose.msra.mxu0 0.0
    %2403 = vmatprep.subr.mxu0 0.0
    %2404 = vmatpush1.xpose.msra.mxu0 0.0
    %2405 = vmatprep.subr.mxu0 0.0
    %2406 = vmatpush1.xpose.msra.mxu0 0.0
    %2407 = vmatprep.subr.mxu0 0.0
    %2408 = vmatpush1.xpose.msra.mxu0 0.0
    %2409 = vmatprep.subr.mxu0 0.0
    %2410 = vmatpush1.xpose.msra.mxu0 0.0
    %2411 = vmatprep.subr.mxu0 0.0
    %2412 = vmatpush1.xpose.msra.mxu0 0.0
    %2413 = vmatprep.subr.mxu0 0.0
    %2414 = vmatpush1.xpose.msra.mxu0 0.0
    %2415 = vmatprep.subr.mxu0 0.0
    %2416 = vmatpush1.xpose.msra.mxu0 0.0
    %2417 = vmatprep.subr.mxu0 0.0
    %2418 = vmatpush1.xpose.msra.mxu0 0.0
    %2419 = vmatprep.subr.mxu0 0.0
    %2420 = vmatpush1.xpose.msra.mxu0 %v2387
    %2421 = vmatprep.subr.mxu0 0.0
    %2422 = vmatpush2.xpose.msra.mxu0 0.0
    %2423 = vmatprep.subr.mxu0 0.0
    %2424 = vmatpush2.xpose.msra.mxu0 0.0
    %2425 = vmatprep.subr.mxu0 0.0
    %2426 = vmatpush2.xpose.msra.mxu0 0.0
    %2427 = vmatprep.subr.mxu0 0.0
    %2428 = vmatpush2.xpose.msra.mxu0 0.0
    %2429 = vmatprep.subr.mxu0 0.0
    %2430 = vmatpush2.xpose.msra.mxu0 0.0
    %2431 = vmatprep.subr.mxu0 0.0
    %2432 = vmatpush2.xpose.msra.mxu0 0.0
    %2433 = vmatprep.subr.mxu0 0.0
    %2434 = vmatpush2.xpose.msra.mxu0 0.0
    %2435 = vmatprep.subr.mxu0 0.0
    %2436 = vmatpush2.xpose.msra.mxu0 0.0
    %2437 = vmatprep.subr.mxu0 0.0
    %2438 = vmatpush2.xpose.msra.mxu0 0.0
    %2439 = vmatprep.subr.mxu0 0.0
    %2440 = vmatpush2.xpose.msra.mxu0 0.0
    %2441 = vmatprep.subr.mxu0 0.0
    %2442 = vmatpush2.xpose.msra.mxu0 0.0
    %2443 = vmatprep.subr.mxu0 0.0
    %2444 = vmatpush2.xpose.msra.mxu0 0.0
    %2445 = vmatprep.subr.mxu0 0.0
    %2446 = vmatpush2.xpose.msra.mxu0 0.0
    %2447 = vmatprep.subr.mxu0 0.0
    %2448 = vmatpush2.xpose.msra.mxu0 0.0
    %2449 = vmatprep.subr.mxu0 0.0
    %2450 = vmatpush2.xpose.msra.mxu0 0.0
    %2451 = vmatprep.subr.mxu0 0.0
    %2452 = vmatpush2.xpose.msra.mxu0 0.0
    %2453 = vmatprep.mubr.f32.mxu0 0.0
    %2454 = vmatmul.mubr.f32.gmra.mxu0 %v2385
    %v2455 = vpop.f32.mrf.mxu0
    %v2456 = vadd.f32 0.0, %v2455
    %v2457 = vpop.f32.mrf.mxu0
    %2458 = vdwg.mxu0
    %2459 = vrot.lane.b32.xlu0 %v1952, 120
    %v2460 = vpop.permute.xlu0 %2459
    %2461 = vrot.lane.b32.xlu0 %v2044, 120
    %v2462 = vpop.permute.xlu0 %2461
    %v2463 = vsel %vm314, %v2460, 0
    %v2465 = vsel %vm314, %v2462, 0
    %2467 = vmatprep.subr.mxu0 0.0
    %2468 = vmatpush1.xpose.msra.mxu0 0.0
    %2469 = vmatprep.subr.mxu0 0.0
    %2470 = vmatpush1.xpose.msra.mxu0 0.0
    %2471 = vmatprep.subr.mxu0 0.0
    %2472 = vmatpush1.xpose.msra.mxu0 0.0
    %2473 = vmatprep.subr.mxu0 0.0
    %2474 = vmatpush1.xpose.msra.mxu0 0.0
    %2475 = vmatprep.subr.mxu0 0.0
    %2476 = vmatpush1.xpose.msra.mxu0 0.0
    %2477 = vmatprep.subr.mxu0 0.0
    %2478 = vmatpush1.xpose.msra.mxu0 0.0
    %2479 = vmatprep.subr.mxu0 0.0
    %2480 = vmatpush1.xpose.msra.mxu0 0.0
    %2481 = vmatprep.subr.mxu0 0.0
    %2482 = vmatpush1.xpose.msra.mxu0 0.0
    %2483 = vmatprep.subr.mxu0 0.0
    %2484 = vmatpush1.xpose.msra.mxu0 0.0
    %2485 = vmatprep.subr.mxu0 0.0
    %2486 = vmatpush1.xpose.msra.mxu0 0.0
    %2487 = vmatprep.subr.mxu0 0.0
    %2488 = vmatpush1.xpose.msra.mxu0 0.0
    %2489 = vmatprep.subr.mxu0 0.0
    %2490 = vmatpush1.xpose.msra.mxu0 0.0
    %2491 = vmatprep.subr.mxu0 0.0
    %2492 = vmatpush1.xpose.msra.mxu0 0.0
    %2493 = vmatprep.subr.mxu0 0.0
    %2494 = vmatpush1.xpose.msra.mxu0 0.0
    %2495 = vmatprep.subr.mxu0 0.0
    %2496 = vmatpush1.xpose.msra.mxu0 0.0
    %2497 = vmatprep.subr.mxu0 0.0
    %2498 = vmatpush1.xpose.msra.mxu0 %v2465
    %2499 = vmatprep.subr.mxu0 0.0
    %2500 = vmatpush2.xpose.msra.mxu0 0.0
    %2501 = vmatprep.subr.mxu0 0.0
    %2502 = vmatpush2.xpose.msra.mxu0 0.0
    %2503 = vmatprep.subr.mxu0 0.0
    %2504 = vmatpush2.xpose.msra.mxu0 0.0
    %2505 = vmatprep.subr.mxu0 0.0
    %2506 = vmatpush2.xpose.msra.mxu0 0.0
    %2507 = vmatprep.subr.mxu0 0.0
    %2508 = vmatpush2.xpose.msra.mxu0 0.0
    %2509 = vmatprep.subr.mxu0 0.0
    %2510 = vmatpush2.xpose.msra.mxu0 0.0
    %2511 = vmatprep.subr.mxu0 0.0
    %2512 = vmatpush2.xpose.msra.mxu0 0.0
    %2513 = vmatprep.subr.mxu0 0.0
    %2514 = vmatpush2.xpose.msra.mxu0 0.0
    %2515 = vmatprep.subr.mxu0 0.0
    %2516 = vmatpush2.xpose.msra.mxu0 0.0
    %2517 = vmatprep.subr.mxu0 0.0
    %2518 = vmatpush2.xpose.msra.mxu0 0.0
    %2519 = vmatprep.subr.mxu0 0.0
    %2520 = vmatpush2.xpose.msra.mxu0 0.0
    %2521 = vmatprep.subr.mxu0 0.0
    %2522 = vmatpush2.xpose.msra.mxu0 0.0
    %2523 = vmatprep.subr.mxu0 0.0
    %2524 = vmatpush2.xpose.msra.mxu0 0.0
    %2525 = vmatprep.subr.mxu0 0.0
    %2526 = vmatpush2.xpose.msra.mxu0 0.0
    %2527 = vmatprep.subr.mxu0 0.0
    %2528 = vmatpush2.xpose.msra.mxu0 0.0
    %2529 = vmatprep.subr.mxu0 0.0
    %2530 = vmatpush2.xpose.msra.mxu0 0.0
    %2531 = vmatprep.mubr.f32.mxu0 0.0
    %2532 = vmatmul.mubr.f32.gmra.mxu0 %v2463
    %v2533 = vpop.f32.mrf.mxu0
    %v2534 = vadd.f32 0.0, %v2533
    %v2535 = vpop.f32.mrf.mxu0
    %2536 = vdwg.mxu0
    %v2537 = vmul.f32 %v2456, 0.35355338
    %v2538 = vmul.f32 %v2534, 0.35355338
    %v2539 = vsel %vm2203, -1e+30, %v2537
    %v2540 = vsel %vm2204, -1e+30, %v2538
    %v2541 = vsel %vm314, %v2539, -inf
    %2542 = vmax.xlane.f32.xlu0 %v2541
    %v2543 = vpop.xlane.xlu0 %2542
    %v2544 = vsel %vm314, %v2540, -inf
    %2545 = vmax.xlane.f32.xlu0 %v2544
    %v2546 = vpop.xlane.xlu0 %2545
    %v2547 = vsub.f32 %v2539, %v2543
    %v2548 = vsub.f32 %v2540, %v2546
    %v2549 = vmul.f32 %v2547, 1.442695
    %v2550 = vpow.pop %v2549
    %v2551 = vmul.f32 %v2548, 1.442695
    %v2552 = vpow.pop %v2551
    %v2553 = vsel %vm314, %v2550, 0.0
    %2554 = vadd.xlane.f32.xlu0 %v2553
    %v2555 = vpop.xlane.xlu0 %2554
    %v2556 = vsel %vm314, %v2552, 0.0
    %2557 = vadd.xlane.f32.xlu0 %v2556
    %v2558 = vpop.xlane.xlu0 %2557
    %v2559 = vrcp.pop %v2555
    %v2560 = vrcp.pop %v2558
    %v2561 = vmul.f32 %v2550, %v2559
    %v2562 = vmul.f32 %v2552, %v2560
    %2563 = vrot.lane.b32.xlu0 %v2039, 88
    %v2564 = vpop.permute.xlu0 %2563
    %v2567 = vsel %vm314, %v2561, 0
    %2569 = vmatprep.subr.mxu0 0.0
    %2570 = vmatpush1.msra.mxu0 0.0
    %2571 = vmatprep.subr.mxu0 0.0
    %2572 = vmatpush1.msra.mxu0 0.0
    %2573 = vmatprep.subr.mxu0 0.0
    %2574 = vmatpush1.msra.mxu0 0.0
    %2575 = vmatprep.subr.mxu0 0.0
    %2576 = vmatpush1.msra.mxu0 0.0
    %2577 = vmatprep.subr.mxu0 0.0
    %2578 = vmatpush1.msra.mxu0 0.0
    %2579 = vmatprep.subr.mxu0 0.0
    %2580 = vmatpush1.msra.mxu0 0.0
    %2581 = vmatprep.subr.mxu0 0.0
    %2582 = vmatpush1.msra.mxu0 0.0
    %2583 = vmatprep.subr.mxu0 0.0
    %2584 = vmatpush1.msra.mxu0 0.0
    %2585 = vmatprep.subr.mxu0 0.0
    %2586 = vmatpush1.msra.mxu0 0.0
    %2587 = vmatprep.subr.mxu0 0.0
    %2588 = vmatpush1.msra.mxu0 0.0
    %2589 = vmatprep.subr.mxu0 0.0
    %2590 = vmatpush1.msra.mxu0 0.0
    %2591 = vmatprep.subr.mxu0 0.0
    %2592 = vmatpush1.msra.mxu0 0.0
    %2593 = vmatprep.subr.mxu0 0.0
    %2594 = vmatpush1.msra.mxu0 0.0
    %2595 = vmatprep.subr.mxu0 0.0
    %2596 = vmatpush1.msra.mxu0 0.0
    %2597 = vmatprep.subr.mxu0 0.0
    %2598 = vmatpush1.msra.mxu0 0.0
    %2599 = vmatprep.subr.mxu0 0.0
    %2600 = vmatpush1.msra.mxu0 %v2564
    %2601 = vmatprep.subr.mxu0 0.0
    %2602 = vmatpush2.msra.mxu0 0.0
    %2603 = vmatprep.subr.mxu0 0.0
    %2604 = vmatpush2.msra.mxu0 0.0
    %2605 = vmatprep.subr.mxu0 0.0
    %2606 = vmatpush2.msra.mxu0 0.0
    %2607 = vmatprep.subr.mxu0 0.0
    %2608 = vmatpush2.msra.mxu0 0.0
    %2609 = vmatprep.subr.mxu0 0.0
    %2610 = vmatpush2.msra.mxu0 0.0
    %2611 = vmatprep.subr.mxu0 0.0
    %2612 = vmatpush2.msra.mxu0 0.0
    %2613 = vmatprep.subr.mxu0 0.0
    %2614 = vmatpush2.msra.mxu0 0.0
    %2615 = vmatprep.subr.mxu0 0.0
    %2616 = vmatpush2.msra.mxu0 0.0
    %2617 = vmatprep.subr.mxu0 0.0
    %2618 = vmatpush2.msra.mxu0 0.0
    %2619 = vmatprep.subr.mxu0 0.0
    %2620 = vmatpush2.msra.mxu0 0.0
    %2621 = vmatprep.subr.mxu0 0.0
    %2622 = vmatpush2.msra.mxu0 0.0
    %2623 = vmatprep.subr.mxu0 0.0
    %2624 = vmatpush2.msra.mxu0 0.0
    %2625 = vmatprep.subr.mxu0 0.0
    %2626 = vmatpush2.msra.mxu0 0.0
    %2627 = vmatprep.subr.mxu0 0.0
    %2628 = vmatpush2.msra.mxu0 0.0
    %2629 = vmatprep.subr.mxu0 0.0
    %2630 = vmatpush2.msra.mxu0 0.0
    %2631 = vmatprep.subr.mxu0 0.0
    %2632 = vmatpush2.msra.mxu0 0.0
    %2633 = vmatprep.mubr.f32.mxu0 0.0
    %2634 = vmatmul.mubr.f32.gmra.mxu0 %v2567
    %v2635 = vpop.f32.mrf.mxu0
    %v2636 = vadd.f32 0.0, %v2635
    %v2637 = vpop.f32.mrf.mxu0
    %2638 = vdwg.mxu0
    %2639 = vrot.lane.b32.xlu0 %v2044, 88
    %v2640 = vpop.permute.xlu0 %2639
    %v2643 = vsel %vm314, %v2562, 0
    %2645 = vmatprep.subr.mxu0 0.0
    %2646 = vmatpush1.msra.mxu0 0.0
    %2647 = vmatprep.subr.mxu0 0.0
    %2648 = vmatpush1.msra.mxu0 0.0
    %2649 = vmatprep.subr.mxu0 0.0
    %2650 = vmatpush1.msra.mxu0 0.0
    %2651 = vmatprep.subr.mxu0 0.0
    %2652 = vmatpush1.msra.mxu0 0.0
    %2653 = vmatprep.subr.mxu0 0.0
    %2654 = vmatpush1.msra.mxu0 0.0
    %2655 = vmatprep.subr.mxu0 0.0
    %2656 = vmatpush1.msra.mxu0 0.0
    %2657 = vmatprep.subr.mxu0 0.0
    %2658 = vmatpush1.msra.mxu0 0.0
    %2659 = vmatprep.subr.mxu0 0.0
    %2660 = vmatpush1.msra.mxu0 0.0
    %2661 = vmatprep.subr.mxu0 0.0
    %2662 = vmatpush1.msra.mxu0 0.0
    %2663 = vmatprep.subr.mxu0 0.0
    %2664 = vmatpush1.msra.mxu0 0.0
    %2665 = vmatprep.subr.mxu0 0.0
    %2666 = vmatpush1.msra.mxu0 0.0
    %2667 = vmatprep.subr.mxu0 0.0
    %2668 = vmatpush1.msra.mxu0 0.0
    %2669 = vmatprep.subr.mxu0 0.0
    %2670 = vmatpush1.msra.mxu0 0.0
    %2671 = vmatprep.subr.mxu0 0.0
    %2672 = vmatpush1.msra.mxu0 0.0
    %2673 = vmatprep.subr.mxu0 0.0
    %2674 = vmatpush1.msra.mxu0 0.0
    %2675 = vmatprep.subr.mxu0 0.0
    %2676 = vmatpush1.msra.mxu0 %v2640
    %2677 = vmatprep.subr.mxu0 0.0
    %2678 = vmatpush2.msra.mxu0 0.0
    %2679 = vmatprep.subr.mxu0 0.0
    %2680 = vmatpush2.msra.mxu0 0.0
    %2681 = vmatprep.subr.mxu0 0.0
    %2682 = vmatpush2.msra.mxu0 0.0
    %2683 = vmatprep.subr.mxu0 0.0
    %2684 = vmatpush2.msra.mxu0 0.0
    %2685 = vmatprep.subr.mxu0 0.0
    %2686 = vmatpush2.msra.mxu0 0.0
    %2687 = vmatprep.subr.mxu0 0.0
    %2688 = vmatpush2.msra.mxu0 0.0
    %2689 = vmatprep.subr.mxu0 0.0
    %2690 = vmatpush2.msra.mxu0 0.0
    %2691 = vmatprep.subr.mxu0 0.0
    %2692 = vmatpush2.msra.mxu0 0.0
    %2693 = vmatprep.subr.mxu0 0.0
    %2694 = vmatpush2.msra.mxu0 0.0
    %2695 = vmatprep.subr.mxu0 0.0
    %2696 = vmatpush2.msra.mxu0 0.0
    %2697 = vmatprep.subr.mxu0 0.0
    %2698 = vmatpush2.msra.mxu0 0.0
    %2699 = vmatprep.subr.mxu0 0.0
    %2700 = vmatpush2.msra.mxu0 0.0
    %2701 = vmatprep.subr.mxu0 0.0
    %2702 = vmatpush2.msra.mxu0 0.0
    %2703 = vmatprep.subr.mxu0 0.0
    %2704 = vmatpush2.msra.mxu0 0.0
    %2705 = vmatprep.subr.mxu0 0.0
    %2706 = vmatpush2.msra.mxu0 0.0
    %2707 = vmatprep.subr.mxu0 0.0
    %2708 = vmatpush2.msra.mxu0 0.0
    %2709 = vmatprep.mubr.f32.mxu0 0.0
    %2710 = vmatmul.mubr.f32.gmra.mxu0 %v2643
    %v2711 = vpop.f32.mrf.mxu0
    %v2712 = vadd.f32 0.0, %v2711
    %v2713 = vpop.f32.mrf.mxu0
    %2714 = vdwg.mxu0
    %2715 = vrot.lane.b32.xlu0 %v1947, 112
    %v2716 = vpop.permute.xlu0 %2715
    %2717 = vrot.lane.b32.xlu0 %v2039, 112
    %v2718 = vpop.permute.xlu0 %2717
    %v2719 = vsel %vm314, %v2716, 0
    %v2721 = vsel %vm314, %v2718, 0
    %2723 = vmatprep.subr.mxu0 0.0
    %2724 = vmatpush1.xpose.msra.mxu0 0.0
    %2725 = vmatprep.subr.mxu0 0.0
    %2726 = vmatpush1.xpose.msra.mxu0 0.0
    %2727 = vmatprep.subr.mxu0 0.0
    %2728 = vmatpush1.xpose.msra.mxu0 0.0
    %2729 = vmatprep.subr.mxu0 0.0
    %2730 = vmatpush1.xpose.msra.mxu0 0.0
    %2731 = vmatprep.subr.mxu0 0.0
    %2732 = vmatpush1.xpose.msra.mxu0 0.0
    %2733 = vmatprep.subr.mxu0 0.0
    %2734 = vmatpush1.xpose.msra.mxu0 0.0
    %2735 = vmatprep.subr.mxu0 0.0
    %2736 = vmatpush1.xpose.msra.mxu0 0.0
    %2737 = vmatprep.subr.mxu0 0.0
    %2738 = vmatpush1.xpose.msra.mxu0 0.0
    %2739 = vmatprep.subr.mxu0 0.0
    %2740 = vmatpush1.xpose.msra.mxu0 0.0
    %2741 = vmatprep.subr.mxu0 0.0
    %2742 = vmatpush1.xpose.msra.mxu0 0.0
    %2743 = vmatprep.subr.mxu0 0.0
    %2744 = vmatpush1.xpose.msra.mxu0 0.0
    %2745 = vmatprep.subr.mxu0 0.0
    %2746 = vmatpush1.xpose.msra.mxu0 0.0
    %2747 = vmatprep.subr.mxu0 0.0
    %2748 = vmatpush1.xpose.msra.mxu0 0.0
    %2749 = vmatprep.subr.mxu0 0.0
    %2750 = vmatpush1.xpose.msra.mxu0 0.0
    %2751 = vmatprep.subr.mxu0 0.0
    %2752 = vmatpush1.xpose.msra.mxu0 0.0
    %2753 = vmatprep.subr.mxu0 0.0
    %2754 = vmatpush1.xpose.msra.mxu0 %v2721
    %2755 = vmatprep.subr.mxu0 0.0
    %2756 = vmatpush2.xpose.msra.mxu0 0.0
    %2757 = vmatprep.subr.mxu0 0.0
    %2758 = vmatpush2.xpose.msra.mxu0 0.0
    %2759 = vmatprep.subr.mxu0 0.0
    %2760 = vmatpush2.xpose.msra.mxu0 0.0
    %2761 = vmatprep.subr.mxu0 0.0
    %2762 = vmatpush2.xpose.msra.mxu0 0.0
    %2763 = vmatprep.subr.mxu0 0.0
    %2764 = vmatpush2.xpose.msra.mxu0 0.0
    %2765 = vmatprep.subr.mxu0 0.0
    %2766 = vmatpush2.xpose.msra.mxu0 0.0
    %2767 = vmatprep.subr.mxu0 0.0
    %2768 = vmatpush2.xpose.msra.mxu0 0.0
    %2769 = vmatprep.subr.mxu0 0.0
    %2770 = vmatpush2.xpose.msra.mxu0 0.0
    %2771 = vmatprep.subr.mxu0 0.0
    %2772 = vmatpush2.xpose.msra.mxu0 0.0
    %2773 = vmatprep.subr.mxu0 0.0
    %2774 = vmatpush2.xpose.msra.mxu0 0.0
    %2775 = vmatprep.subr.mxu0 0.0
    %2776 = vmatpush2.xpose.msra.mxu0 0.0
    %2777 = vmatprep.subr.mxu0 0.0
    %2778 = vmatpush2.xpose.msra.mxu0 0.0
    %2779 = vmatprep.subr.mxu0 0.0
    %2780 = vmatpush2.xpose.msra.mxu0 0.0
    %2781 = vmatprep.subr.mxu0 0.0
    %2782 = vmatpush2.xpose.msra.mxu0 0.0
    %2783 = vmatprep.subr.mxu0 0.0
    %2784 = vmatpush2.xpose.msra.mxu0 0.0
    %2785 = vmatprep.subr.mxu0 0.0
    %2786 = vmatpush2.xpose.msra.mxu0 0.0
    %2787 = vmatprep.mubr.f32.mxu0 0.0
    %2788 = vmatmul.mubr.f32.gmra.mxu0 %v2719
    %v2789 = vpop.f32.mrf.mxu0
    %v2790 = vadd.f32 0.0, %v2789
    %v2791 = vpop.f32.mrf.mxu0
    %2792 = vdwg.mxu0
    %2793 = vrot.lane.b32.xlu0 %v1952, 112
    %v2794 = vpop.permute.xlu0 %2793
    %2795 = vrot.lane.b32.xlu0 %v2044, 112
    %v2796 = vpop.permute.xlu0 %2795
    %v2797 = vsel %vm314, %v2794, 0
    %v2799 = vsel %vm314, %v2796, 0
    %2801 = vmatprep.subr.mxu0 0.0
    %2802 = vmatpush1.xpose.msra.mxu0 0.0
    %2803 = vmatprep.subr.mxu0 0.0
    %2804 = vmatpush1.xpose.msra.mxu0 0.0
    %2805 = vmatprep.subr.mxu0 0.0
    %2806 = vmatpush1.xpose.msra.mxu0 0.0
    %2807 = vmatprep.subr.mxu0 0.0
    %2808 = vmatpush1.xpose.msra.mxu0 0.0
    %2809 = vmatprep.subr.mxu0 0.0
    %2810 = vmatpush1.xpose.msra.mxu0 0.0
    %2811 = vmatprep.subr.mxu0 0.0
    %2812 = vmatpush1.xpose.msra.mxu0 0.0
    %2813 = vmatprep.subr.mxu0 0.0
    %2814 = vmatpush1.xpose.msra.mxu0 0.0
    %2815 = vmatprep.subr.mxu0 0.0
    %2816 = vmatpush1.xpose.msra.mxu0 0.0
    %2817 = vmatprep.subr.mxu0 0.0
    %2818 = vmatpush1.xpose.msra.mxu0 0.0
    %2819 = vmatprep.subr.mxu0 0.0
    %2820 = vmatpush1.xpose.msra.mxu0 0.0
    %2821 = vmatprep.subr.mxu0 0.0
    %2822 = vmatpush1.xpose.msra.mxu0 0.0
    %2823 = vmatprep.subr.mxu0 0.0
    %2824 = vmatpush1.xpose.msra.mxu0 0.0
    %2825 = vmatprep.subr.mxu0 0.0
    %2826 = vmatpush1.xpose.msra.mxu0 0.0
    %2827 = vmatprep.subr.mxu0 0.0
    %2828 = vmatpush1.xpose.msra.mxu0 0.0
    %2829 = vmatprep.subr.mxu0 0.0
    %2830 = vmatpush1.xpose.msra.mxu0 0.0
    %2831 = vmatprep.subr.mxu0 0.0
    %2832 = vmatpush1.xpose.msra.mxu0 %v2799
    %2833 = vmatprep.subr.mxu0 0.0
    %2834 = vmatpush2.xpose.msra.mxu0 0.0
    %2835 = vmatprep.subr.mxu0 0.0
    %2836 = vmatpush2.xpose.msra.mxu0 0.0
    %2837 = vmatprep.subr.mxu0 0.0
    %2838 = vmatpush2.xpose.msra.mxu0 0.0
    %2839 = vmatprep.subr.mxu0 0.0
    %2840 = vmatpush2.xpose.msra.mxu0 0.0
    %2841 = vmatprep.subr.mxu0 0.0
    %2842 = vmatpush2.xpose.msra.mxu0 0.0
    %2843 = vmatprep.subr.mxu0 0.0
    %2844 = vmatpush2.xpose.msra.mxu0 0.0
    %2845 = vmatprep.subr.mxu0 0.0
    %2846 = vmatpush2.xpose.msra.mxu0 0.0
    %2847 = vmatprep.subr.mxu0 0.0
    %2848 = vmatpush2.xpose.msra.mxu0 0.0
    %2849 = vmatprep.subr.mxu0 0.0
    %2850 = vmatpush2.xpose.msra.mxu0 0.0
    %2851 = vmatprep.subr.mxu0 0.0
    %2852 = vmatpush2.xpose.msra.mxu0 0.0
    %2853 = vmatprep.subr.mxu0 0.0
    %2854 = vmatpush2.xpose.msra.mxu0 0.0
    %2855 = vmatprep.subr.mxu0 0.0
    %2856 = vmatpush2.xpose.msra.mxu0 0.0
    %2857 = vmatprep.subr.mxu0 0.0
    %2858 = vmatpush2.xpose.msra.mxu0 0.0
    %2859 = vmatprep.subr.mxu0 0.0
    %2860 = vmatpush2.xpose.msra.mxu0 0.0
    %2861 = vmatprep.subr.mxu0 0.0
    %2862 = vmatpush2.xpose.msra.mxu0 0.0
    %2863 = vmatprep.subr.mxu0 0.0
    %2864 = vmatpush2.xpose.msra.mxu0 0.0
    %2865 = vmatprep.mubr.f32.mxu0 0.0
    %2866 = vmatmul.mubr.f32.gmra.mxu0 %v2797
    %v2867 = vpop.f32.mrf.mxu0
    %v2868 = vadd.f32 0.0, %v2867
    %v2869 = vpop.f32.mrf.mxu0
    %2870 = vdwg.mxu0
    %v2871 = vmul.f32 %v2790, 0.35355338
    %v2872 = vmul.f32 %v2868, 0.35355338
    %v2873 = vsel %vm2203, -1e+30, %v2871
    %v2874 = vsel %vm2204, -1e+30, %v2872
    %v2875 = vsel %vm314, %v2873, -inf
    %2876 = vmax.xlane.f32.xlu0 %v2875
    %v2877 = vpop.xlane.xlu0 %2876
    %v2878 = vsel %vm314, %v2874, -inf
    %2879 = vmax.xlane.f32.xlu0 %v2878
    %v2880 = vpop.xlane.xlu0 %2879
    %v2881 = vsub.f32 %v2873, %v2877
    %v2882 = vsub.f32 %v2874, %v2880
    %v2883 = vmul.f32 %v2881, 1.442695
    %v2884 = vpow.pop %v2883
    %v2885 = vmul.f32 %v2882, 1.442695
    %v2886 = vpow.pop %v2885
    %v2887 = vsel %vm314, %v2884, 0.0
    %2888 = vadd.xlane.f32.xlu0 %v2887
    %v2889 = vpop.xlane.xlu0 %2888
    %v2890 = vsel %vm314, %v2886, 0.0
    %2891 = vadd.xlane.f32.xlu0 %v2890
    %v2892 = vpop.xlane.xlu0 %2891
    %v2893 = vrcp.pop %v2889
    %v2894 = vrcp.pop %v2892
    %v2895 = vmul.f32 %v2884, %v2893
    %v2896 = vmul.f32 %v2886, %v2894
    %2897 = vrot.lane.b32.xlu0 %v2039, 80
    %v2898 = vpop.permute.xlu0 %2897
    %v2901 = vsel %vm314, %v2895, 0
    %2903 = vmatprep.subr.mxu0 0.0
    %2904 = vmatpush1.msra.mxu0 0.0
    %2905 = vmatprep.subr.mxu0 0.0
    %2906 = vmatpush1.msra.mxu0 0.0
    %2907 = vmatprep.subr.mxu0 0.0
    %2908 = vmatpush1.msra.mxu0 0.0
    %2909 = vmatprep.subr.mxu0 0.0
    %2910 = vmatpush1.msra.mxu0 0.0
    %2911 = vmatprep.subr.mxu0 0.0
    %2912 = vmatpush1.msra.mxu0 0.0
    %2913 = vmatprep.subr.mxu0 0.0
    %2914 = vmatpush1.msra.mxu0 0.0
    %2915 = vmatprep.subr.mxu0 0.0
    %2916 = vmatpush1.msra.mxu0 0.0
    %2917 = vmatprep.subr.mxu0 0.0
    %2918 = vmatpush1.msra.mxu0 0.0
    %2919 = vmatprep.subr.mxu0 0.0
    %2920 = vmatpush1.msra.mxu0 0.0
    %2921 = vmatprep.subr.mxu0 0.0
    %2922 = vmatpush1.msra.mxu0 0.0
    %2923 = vmatprep.subr.mxu0 0.0
    %2924 = vmatpush1.msra.mxu0 0.0
    %2925 = vmatprep.subr.mxu0 0.0
    %2926 = vmatpush1.msra.mxu0 0.0
    %2927 = vmatprep.subr.mxu0 0.0
    %2928 = vmatpush1.msra.mxu0 0.0
    %2929 = vmatprep.subr.mxu0 0.0
    %2930 = vmatpush1.msra.mxu0 0.0
    %2931 = vmatprep.subr.mxu0 0.0
    %2932 = vmatpush1.msra.mxu0 0.0
    %2933 = vmatprep.subr.mxu0 0.0
    %2934 = vmatpush1.msra.mxu0 %v2898
    %2935 = vmatprep.subr.mxu0 0.0
    %2936 = vmatpush2.msra.mxu0 0.0
    %2937 = vmatprep.subr.mxu0 0.0
    %2938 = vmatpush2.msra.mxu0 0.0
    %2939 = vmatprep.subr.mxu0 0.0
    %2940 = vmatpush2.msra.mxu0 0.0
    %2941 = vmatprep.subr.mxu0 0.0
    %2942 = vmatpush2.msra.mxu0 0.0
    %2943 = vmatprep.subr.mxu0 0.0
    %2944 = vmatpush2.msra.mxu0 0.0
    %2945 = vmatprep.subr.mxu0 0.0
    %2946 = vmatpush2.msra.mxu0 0.0
    %2947 = vmatprep.subr.mxu0 0.0
    %2948 = vmatpush2.msra.mxu0 0.0
    %2949 = vmatprep.subr.mxu0 0.0
    %2950 = vmatpush2.msra.mxu0 0.0
    %2951 = vmatprep.subr.mxu0 0.0
    %2952 = vmatpush2.msra.mxu0 0.0
    %2953 = vmatprep.subr.mxu0 0.0
    %2954 = vmatpush2.msra.mxu0 0.0
    %2955 = vmatprep.subr.mxu0 0.0
    %2956 = vmatpush2.msra.mxu0 0.0
    %2957 = vmatprep.subr.mxu0 0.0
    %2958 = vmatpush2.msra.mxu0 0.0
    %2959 = vmatprep.subr.mxu0 0.0
    %2960 = vmatpush2.msra.mxu0 0.0
    %2961 = vmatprep.subr.mxu0 0.0
    %2962 = vmatpush2.msra.mxu0 0.0
    %2963 = vmatprep.subr.mxu0 0.0
    %2964 = vmatpush2.msra.mxu0 0.0
    %2965 = vmatprep.subr.mxu0 0.0
    %2966 = vmatpush2.msra.mxu0 0.0
    %2967 = vmatprep.mubr.f32.mxu0 0.0
    %2968 = vmatmul.mubr.f32.gmra.mxu0 %v2901
    %v2969 = vpop.f32.mrf.mxu0
    %v2970 = vadd.f32 0.0, %v2969
    %v2971 = vpop.f32.mrf.mxu0
    %2972 = vdwg.mxu0
    %2973 = vrot.lane.b32.xlu0 %v2044, 80
    %v2974 = vpop.permute.xlu0 %2973
    %v2977 = vsel %vm314, %v2896, 0
    %2979 = vmatprep.subr.mxu0 0.0
    %2980 = vmatpush1.msra.mxu0 0.0
    %2981 = vmatprep.subr.mxu0 0.0
    %2982 = vmatpush1.msra.mxu0 0.0
    %2983 = vmatprep.subr.mxu0 0.0
    %2984 = vmatpush1.msra.mxu0 0.0
    %2985 = vmatprep.subr.mxu0 0.0
    %2986 = vmatpush1.msra.mxu0 0.0
    %2987 = vmatprep.subr.mxu0 0.0
    %2988 = vmatpush1.msra.mxu0 0.0
    %2989 = vmatprep.subr.mxu0 0.0
    %2990 = vmatpush1.msra.mxu0 0.0
    %2991 = vmatprep.subr.mxu0 0.0
    %2992 = vmatpush1.msra.mxu0 0.0
    %2993 = vmatprep.subr.mxu0 0.0
    %2994 = vmatpush1.msra.mxu0 0.0
    %2995 = vmatprep.subr.mxu0 0.0
    %2996 = vmatpush1.msra.mxu0 0.0
    %2997 = vmatprep.subr.mxu0 0.0
    %2998 = vmatpush1.msra.mxu0 0.0
    %2999 = vmatprep.subr.mxu0 0.0
    %3000 = vmatpush1.msra.mxu0 0.0
    %3001 = vmatprep.subr.mxu0 0.0
    %3002 = vmatpush1.msra.mxu0 0.0
    %3003 = vmatprep.subr.mxu0 0.0
    %3004 = vmatpush1.msra.mxu0 0.0
    %3005 = vmatprep.subr.mxu0 0.0
    %3006 = vmatpush1.msra.mxu0 0.0
    %3007 = vmatprep.subr.mxu0 0.0
    %3008 = vmatpush1.msra.mxu0 0.0
    %3009 = vmatprep.subr.mxu0 0.0
    %3010 = vmatpush1.msra.mxu0 %v2974
    %3011 = vmatprep.subr.mxu0 0.0
    %3012 = vmatpush2.msra.mxu0 0.0
    %3013 = vmatprep.subr.mxu0 0.0
    %3014 = vmatpush2.msra.mxu0 0.0
    %3015 = vmatprep.subr.mxu0 0.0
    %3016 = vmatpush2.msra.mxu0 0.0
    %3017 = vmatprep.subr.mxu0 0.0
    %3018 = vmatpush2.msra.mxu0 0.0
    %3019 = vmatprep.subr.mxu0 0.0
    %3020 = vmatpush2.msra.mxu0 0.0
    %3021 = vmatprep.subr.mxu0 0.0
    %3022 = vmatpush2.msra.mxu0 0.0
    %3023 = vmatprep.subr.mxu0 0.0
    %3024 = vmatpush2.msra.mxu0 0.0
    %3025 = vmatprep.subr.mxu0 0.0
    %3026 = vmatpush2.msra.mxu0 0.0
    %3027 = vmatprep.subr.mxu0 0.0
    %3028 = vmatpush2.msra.mxu0 0.0
    %3029 = vmatprep.subr.mxu0 0.0
    %3030 = vmatpush2.msra.mxu0 0.0
    %3031 = vmatprep.subr.mxu0 0.0
    %3032 = vmatpush2.msra.mxu0 0.0
    %3033 = vmatprep.subr.mxu0 0.0
    %3034 = vmatpush2.msra.mxu0 0.0
    %3035 = vmatprep.subr.mxu0 0.0
    %3036 = vmatpush2.msra.mxu0 0.0
    %3037 = vmatprep.subr.mxu0 0.0
    %3038 = vmatpush2.msra.mxu0 0.0
    %3039 = vmatprep.subr.mxu0 0.0
    %3040 = vmatpush2.msra.mxu0 0.0
    %3041 = vmatprep.subr.mxu0 0.0
    %3042 = vmatpush2.msra.mxu0 0.0
    %3043 = vmatprep.mubr.f32.mxu0 0.0
    %3044 = vmatmul.mubr.f32.gmra.mxu0 %v2977
    %v3045 = vpop.f32.mrf.mxu0
    %v3046 = vadd.f32 0.0, %v3045
    %v3047 = vpop.f32.mrf.mxu0
    %3048 = vdwg.mxu0
    %3049 = vrot.lane.b32.xlu0 %v1947, 104
    %v3050 = vpop.permute.xlu0 %3049
    %3051 = vrot.lane.b32.xlu0 %v2039, 104
    %v3052 = vpop.permute.xlu0 %3051
    %v3053 = vsel %vm314, %v3050, 0
    %v3055 = vsel %vm314, %v3052, 0
    %3057 = vmatprep.subr.mxu0 0.0
    %3058 = vmatpush1.xpose.msra.mxu0 0.0
    %3059 = vmatprep.subr.mxu0 0.0
    %3060 = vmatpush1.xpose.msra.mxu0 0.0
    %3061 = vmatprep.subr.mxu0 0.0
    %3062 = vmatpush1.xpose.msra.mxu0 0.0
    %3063 = vmatprep.subr.mxu0 0.0
    %3064 = vmatpush1.xpose.msra.mxu0 0.0
    %3065 = vmatprep.subr.mxu0 0.0
    %3066 = vmatpush1.xpose.msra.mxu0 0.0
    %3067 = vmatprep.subr.mxu0 0.0
    %3068 = vmatpush1.xpose.msra.mxu0 0.0
    %3069 = vmatprep.subr.mxu0 0.0
    %3070 = vmatpush1.xpose.msra.mxu0 0.0
    %3071 = vmatprep.subr.mxu0 0.0
    %3072 = vmatpush1.xpose.msra.mxu0 0.0
    %3073 = vmatprep.subr.mxu0 0.0
    %3074 = vmatpush1.xpose.msra.mxu0 0.0
    %3075 = vmatprep.subr.mxu0 0.0
    %3076 = vmatpush1.xpose.msra.mxu0 0.0
    %3077 = vmatprep.subr.mxu0 0.0
    %3078 = vmatpush1.xpose.msra.mxu0 0.0
    %3079 = vmatprep.subr.mxu0 0.0
    %3080 = vmatpush1.xpose.msra.mxu0 0.0
    %3081 = vmatprep.subr.mxu0 0.0
    %3082 = vmatpush1.xpose.msra.mxu0 0.0
    %3083 = vmatprep.subr.mxu0 0.0
    %3084 = vmatpush1.xpose.msra.mxu0 0.0
    %3085 = vmatprep.subr.mxu0 0.0
    %3086 = vmatpush1.xpose.msra.mxu0 0.0
    %3087 = vmatprep.subr.mxu0 0.0
    %3088 = vmatpush1.xpose.msra.mxu0 %v3055
    %3089 = vmatprep.subr.mxu0 0.0
    %3090 = vmatpush2.xpose.msra.mxu0 0.0
    %3091 = vmatprep.subr.mxu0 0.0
    %3092 = vmatpush2.xpose.msra.mxu0 0.0
    %3093 = vmatprep.subr.mxu0 0.0
    %3094 = vmatpush2.xpose.msra.mxu0 0.0
    %3095 = vmatprep.subr.mxu0 0.0
    %3096 = vmatpush2.xpose.msra.mxu0 0.0
    %3097 = vmatprep.subr.mxu0 0.0
    %3098 = vmatpush2.xpose.msra.mxu0 0.0
    %3099 = vmatprep.subr.mxu0 0.0
    %3100 = vmatpush2.xpose.msra.mxu0 0.0
    %3101 = vmatprep.subr.mxu0 0.0
    %3102 = vmatpush2.xpose.msra.mxu0 0.0
    %3103 = vmatprep.subr.mxu0 0.0
    %3104 = vmatpush2.xpose.msra.mxu0 0.0
    %3105 = vmatprep.subr.mxu0 0.0
    %3106 = vmatpush2.xpose.msra.mxu0 0.0
    %3107 = vmatprep.subr.mxu0 0.0
    %3108 = vmatpush2.xpose.msra.mxu0 0.0
    %3109 = vmatprep.subr.mxu0 0.0
    %3110 = vmatpush2.xpose.msra.mxu0 0.0
    %3111 = vmatprep.subr.mxu0 0.0
    %3112 = vmatpush2.xpose.msra.mxu0 0.0
    %3113 = vmatprep.subr.mxu0 0.0
    %3114 = vmatpush2.xpose.msra.mxu0 0.0
    %3115 = vmatprep.subr.mxu0 0.0
    %3116 = vmatpush2.xpose.msra.mxu0 0.0
    %3117 = vmatprep.subr.mxu0 0.0
    %3118 = vmatpush2.xpose.msra.mxu0 0.0
    %3119 = vmatprep.subr.mxu0 0.0
    %3120 = vmatpush2.xpose.msra.mxu0 0.0
    %3121 = vmatprep.mubr.f32.mxu0 0.0
    %3122 = vmatmul.mubr.f32.gmra.mxu0 %v3053
    %v3123 = vpop.f32.mrf.mxu0
    %v3124 = vadd.f32 0.0, %v3123
    %v3125 = vpop.f32.mrf.mxu0
    %3126 = vdwg.mxu0
    %3127 = vrot.lane.b32.xlu0 %v1952, 104
    %v3128 = vpop.permute.xlu0 %3127
    %3129 = vrot.lane.b32.xlu0 %v2044, 104
    %v3130 = vpop.permute.xlu0 %3129
    %v3131 = vsel %vm314, %v3128, 0
    %v3133 = vsel %vm314, %v3130, 0
    %3135 = vmatprep.subr.mxu0 0.0
    %3136 = vmatpush1.xpose.msra.mxu0 0.0
    %3137 = vmatprep.subr.mxu0 0.0
    %3138 = vmatpush1.xpose.msra.mxu0 0.0
    %3139 = vmatprep.subr.mxu0 0.0
    %3140 = vmatpush1.xpose.msra.mxu0 0.0
    %3141 = vmatprep.subr.mxu0 0.0
    %3142 = vmatpush1.xpose.msra.mxu0 0.0
    %3143 = vmatprep.subr.mxu0 0.0
    %3144 = vmatpush1.xpose.msra.mxu0 0.0
    %3145 = vmatprep.subr.mxu0 0.0
    %3146 = vmatpush1.xpose.msra.mxu0 0.0
    %3147 = vmatprep.subr.mxu0 0.0
    %3148 = vmatpush1.xpose.msra.mxu0 0.0
    %3149 = vmatprep.subr.mxu0 0.0
    %3150 = vmatpush1.xpose.msra.mxu0 0.0
    %3151 = vmatprep.subr.mxu0 0.0
    %3152 = vmatpush1.xpose.msra.mxu0 0.0
    %3153 = vmatprep.subr.mxu0 0.0
    %3154 = vmatpush1.xpose.msra.mxu0 0.0
    %3155 = vmatprep.subr.mxu0 0.0
    %3156 = vmatpush1.xpose.msra.mxu0 0.0
    %3157 = vmatprep.subr.mxu0 0.0
    %3158 = vmatpush1.xpose.msra.mxu0 0.0
    %3159 = vmatprep.subr.mxu0 0.0
    %3160 = vmatpush1.xpose.msra.mxu0 0.0
    %3161 = vmatprep.subr.mxu0 0.0
    %3162 = vmatpush1.xpose.msra.mxu0 0.0
    %3163 = vmatprep.subr.mxu0 0.0
    %3164 = vmatpush1.xpose.msra.mxu0 0.0
    %3165 = vmatprep.subr.mxu0 0.0
    %3166 = vmatpush1.xpose.msra.mxu0 %v3133
    %3167 = vmatprep.subr.mxu0 0.0
    %3168 = vmatpush2.xpose.msra.mxu0 0.0
    %3169 = vmatprep.subr.mxu0 0.0
    %3170 = vmatpush2.xpose.msra.mxu0 0.0
    %3171 = vmatprep.subr.mxu0 0.0
    %3172 = vmatpush2.xpose.msra.mxu0 0.0
    %3173 = vmatprep.subr.mxu0 0.0
    %3174 = vmatpush2.xpose.msra.mxu0 0.0
    %3175 = vmatprep.subr.mxu0 0.0
    %3176 = vmatpush2.xpose.msra.mxu0 0.0
    %3177 = vmatprep.subr.mxu0 0.0
    %3178 = vmatpush2.xpose.msra.mxu0 0.0
    %3179 = vmatprep.subr.mxu0 0.0
    %3180 = vmatpush2.xpose.msra.mxu0 0.0
    %3181 = vmatprep.subr.mxu0 0.0
    %3182 = vmatpush2.xpose.msra.mxu0 0.0
    %3183 = vmatprep.subr.mxu0 0.0
    %3184 = vmatpush2.xpose.msra.mxu0 0.0
    %3185 = vmatprep.subr.mxu0 0.0
    %3186 = vmatpush2.xpose.msra.mxu0 0.0
    %3187 = vmatprep.subr.mxu0 0.0
    %3188 = vmatpush2.xpose.msra.mxu0 0.0
    %3189 = vmatprep.subr.mxu0 0.0
    %3190 = vmatpush2.xpose.msra.mxu0 0.0
    %3191 = vmatprep.subr.mxu0 0.0
    %3192 = vmatpush2.xpose.msra.mxu0 0.0
    %3193 = vmatprep.subr.mxu0 0.0
    %3194 = vmatpush2.xpose.msra.mxu0 0.0
    %3195 = vmatprep.subr.mxu0 0.0
    %3196 = vmatpush2.xpose.msra.mxu0 0.0
    %3197 = vmatprep.subr.mxu0 0.0
    %3198 = vmatpush2.xpose.msra.mxu0 0.0
    %3199 = vmatprep.mubr.f32.mxu0 0.0
    %3200 = vmatmul.mubr.f32.gmra.mxu0 %v3131
    %v3201 = vpop.f32.mrf.mxu0
    %v3202 = vadd.f32 0.0, %v3201
    %v3203 = vpop.f32.mrf.mxu0
    %3204 = vdwg.mxu0
    %v3205 = vmul.f32 %v3124, 0.35355338
    %v3206 = vmul.f32 %v3202, 0.35355338
    %v3207 = vsel %vm2203, -1e+30, %v3205
    %v3208 = vsel %vm2204, -1e+30, %v3206
    %v3209 = vsel %vm314, %v3207, -inf
    %3210 = vmax.xlane.f32.xlu0 %v3209
    %v3211 = vpop.xlane.xlu0 %3210
    %v3212 = vsel %vm314, %v3208, -inf
    %3213 = vmax.xlane.f32.xlu0 %v3212
    %v3214 = vpop.xlane.xlu0 %3213
    %v3215 = vsub.f32 %v3207, %v3211
    %v3216 = vsub.f32 %v3208, %v3214
    %v3217 = vmul.f32 %v3215, 1.442695
    %v3218 = vpow.pop %v3217
    %v3219 = vmul.f32 %v3216, 1.442695
    %v3220 = vpow.pop %v3219
    %v3221 = vsel %vm314, %v3218, 0.0
    %3222 = vadd.xlane.f32.xlu0 %v3221
    %v3223 = vpop.xlane.xlu0 %3222
    %v3224 = vsel %vm314, %v3220, 0.0
    %3225 = vadd.xlane.f32.xlu0 %v3224
    %v3226 = vpop.xlane.xlu0 %3225
    %v3227 = vrcp.pop %v3223
    %v3228 = vrcp.pop %v3226
    %v3229 = vmul.f32 %v3218, %v3227
    %v3230 = vmul.f32 %v3220, %v3228
    %3231 = vrot.lane.b32.xlu0 %v2039, 72
    %v3232 = vpop.permute.xlu0 %3231
    %v3235 = vsel %vm314, %v3229, 0
    %3237 = vmatprep.subr.mxu0 0.0
    %3238 = vmatpush1.msra.mxu0 0.0
    %3239 = vmatprep.subr.mxu0 0.0
    %3240 = vmatpush1.msra.mxu0 0.0
    %3241 = vmatprep.subr.mxu0 0.0
    %3242 = vmatpush1.msra.mxu0 0.0
    %3243 = vmatprep.subr.mxu0 0.0
    %3244 = vmatpush1.msra.mxu0 0.0
    %3245 = vmatprep.subr.mxu0 0.0
    %3246 = vmatpush1.msra.mxu0 0.0
    %3247 = vmatprep.subr.mxu0 0.0
    %3248 = vmatpush1.msra.mxu0 0.0
    %3249 = vmatprep.subr.mxu0 0.0
    %3250 = vmatpush1.msra.mxu0 0.0
    %3251 = vmatprep.subr.mxu0 0.0
    %3252 = vmatpush1.msra.mxu0 0.0
    %3253 = vmatprep.subr.mxu0 0.0
    %3254 = vmatpush1.msra.mxu0 0.0
    %3255 = vmatprep.subr.mxu0 0.0
    %3256 = vmatpush1.msra.mxu0 0.0
    %3257 = vmatprep.subr.mxu0 0.0
    %3258 = vmatpush1.msra.mxu0 0.0
    %3259 = vmatprep.subr.mxu0 0.0
    %3260 = vmatpush1.msra.mxu0 0.0
    %3261 = vmatprep.subr.mxu0 0.0
    %3262 = vmatpush1.msra.mxu0 0.0
    %3263 = vmatprep.subr.mxu0 0.0
    %3264 = vmatpush1.msra.mxu0 0.0
    %3265 = vmatprep.subr.mxu0 0.0
    %3266 = vmatpush1.msra.mxu0 0.0
    %3267 = vmatprep.subr.mxu0 0.0
    %3268 = vmatpush1.msra.mxu0 %v3232
    %3269 = vmatprep.subr.mxu0 0.0
    %3270 = vmatpush2.msra.mxu0 0.0
    %3271 = vmatprep.subr.mxu0 0.0
    %3272 = vmatpush2.msra.mxu0 0.0
    %3273 = vmatprep.subr.mxu0 0.0
    %3274 = vmatpush2.msra.mxu0 0.0
    %3275 = vmatprep.subr.mxu0 0.0
    %3276 = vmatpush2.msra.mxu0 0.0
    %3277 = vmatprep.subr.mxu0 0.0
    %3278 = vmatpush2.msra.mxu0 0.0
    %3279 = vmatprep.subr.mxu0 0.0
    %3280 = vmatpush2.msra.mxu0 0.0
    %3281 = vmatprep.subr.mxu0 0.0
    %3282 = vmatpush2.msra.mxu0 0.0
    %3283 = vmatprep.subr.mxu0 0.0
    %3284 = vmatpush2.msra.mxu0 0.0
    %3285 = vmatprep.subr.mxu0 0.0
    %3286 = vmatpush2.msra.mxu0 0.0
    %3287 = vmatprep.subr.mxu0 0.0
    %3288 = vmatpush2.msra.mxu0 0.0
    %3289 = vmatprep.subr.mxu0 0.0
    %3290 = vmatpush2.msra.mxu0 0.0
    %3291 = vmatprep.subr.mxu0 0.0
    %3292 = vmatpush2.msra.mxu0 0.0
    %3293 = vmatprep.subr.mxu0 0.0
    %3294 = vmatpush2.msra.mxu0 0.0
    %3295 = vmatprep.subr.mxu0 0.0
    %3296 = vmatpush2.msra.mxu0 0.0
    %3297 = vmatprep.subr.mxu0 0.0
    %3298 = vmatpush2.msra.mxu0 0.0
    %3299 = vmatprep.subr.mxu0 0.0
    %3300 = vmatpush2.msra.mxu0 0.0
    %3301 = vmatprep.mubr.f32.mxu0 0.0
    %3302 = vmatmul.mubr.f32.gmra.mxu0 %v3235
    %v3303 = vpop.f32.mrf.mxu0
    %v3304 = vadd.f32 0.0, %v3303
    %v3305 = vpop.f32.mrf.mxu0
    %3306 = vdwg.mxu0
    %3307 = vrot.lane.b32.xlu0 %v2044, 72
    %v3308 = vpop.permute.xlu0 %3307
    %v3311 = vsel %vm314, %v3230, 0
    %3313 = vmatprep.subr.mxu0 0.0
    %3314 = vmatpush1.msra.mxu0 0.0
    %3315 = vmatprep.subr.mxu0 0.0
    %3316 = vmatpush1.msra.mxu0 0.0
    %3317 = vmatprep.subr.mxu0 0.0
    %3318 = vmatpush1.msra.mxu0 0.0
    %3319 = vmatprep.subr.mxu0 0.0
    %3320 = vmatpush1.msra.mxu0 0.0
    %3321 = vmatprep.subr.mxu0 0.0
    %3322 = vmatpush1.msra.mxu0 0.0
    %3323 = vmatprep.subr.mxu0 0.0
    %3324 = vmatpush1.msra.mxu0 0.0
    %3325 = vmatprep.subr.mxu0 0.0
    %3326 = vmatpush1.msra.mxu0 0.0
    %3327 = vmatprep.subr.mxu0 0.0
    %3328 = vmatpush1.msra.mxu0 0.0
    %3329 = vmatprep.subr.mxu0 0.0
    %3330 = vmatpush1.msra.mxu0 0.0
    %3331 = vmatprep.subr.mxu0 0.0
    %3332 = vmatpush1.msra.mxu0 0.0
    %3333 = vmatprep.subr.mxu0 0.0
    %3334 = vmatpush1.msra.mxu0 0.0
    %3335 = vmatprep.subr.mxu0 0.0
    %3336 = vmatpush1.msra.mxu0 0.0
    %3337 = vmatprep.subr.mxu0 0.0
    %3338 = vmatpush1.msra.mxu0 0.0
    %3339 = vmatprep.subr.mxu0 0.0
    %3340 = vmatpush1.msra.mxu0 0.0
    %3341 = vmatprep.subr.mxu0 0.0
    %3342 = vmatpush1.msra.mxu0 0.0
    %3343 = vmatprep.subr.mxu0 0.0
    %3344 = vmatpush1.msra.mxu0 %v3308
    %3345 = vmatprep.subr.mxu0 0.0
    %3346 = vmatpush2.msra.mxu0 0.0
    %3347 = vmatprep.subr.mxu0 0.0
    %3348 = vmatpush2.msra.mxu0 0.0
    %3349 = vmatprep.subr.mxu0 0.0
    %3350 = vmatpush2.msra.mxu0 0.0
    %3351 = vmatprep.subr.mxu0 0.0
    %3352 = vmatpush2.msra.mxu0 0.0
    %3353 = vmatprep.subr.mxu0 0.0
    %3354 = vmatpush2.msra.mxu0 0.0
    %3355 = vmatprep.subr.mxu0 0.0
    %3356 = vmatpush2.msra.mxu0 0.0
    %3357 = vmatprep.subr.mxu0 0.0
    %3358 = vmatpush2.msra.mxu0 0.0
    %3359 = vmatprep.subr.mxu0 0.0
    %3360 = vmatpush2.msra.mxu0 0.0
    %3361 = vmatprep.subr.mxu0 0.0
    %3362 = vmatpush2.msra.mxu0 0.0
    %3363 = vmatprep.subr.mxu0 0.0
    %3364 = vmatpush2.msra.mxu0 0.0
    %3365 = vmatprep.subr.mxu0 0.0
    %3366 = vmatpush2.msra.mxu0 0.0
    %3367 = vmatprep.subr.mxu0 0.0
    %3368 = vmatpush2.msra.mxu0 0.0
    %3369 = vmatprep.subr.mxu0 0.0
    %3370 = vmatpush2.msra.mxu0 0.0
    %3371 = vmatprep.subr.mxu0 0.0
    %3372 = vmatpush2.msra.mxu0 0.0
    %3373 = vmatprep.subr.mxu0 0.0
    %3374 = vmatpush2.msra.mxu0 0.0
    %3375 = vmatprep.subr.mxu0 0.0
    %3376 = vmatpush2.msra.mxu0 0.0
    %3377 = vmatprep.mubr.f32.mxu0 0.0
    %3378 = vmatmul.mubr.f32.gmra.mxu0 %v3311
    %v3379 = vpop.f32.mrf.mxu0
    %v3380 = vadd.f32 0.0, %v3379
    %v3381 = vpop.f32.mrf.mxu0
    %3382 = vdwg.mxu0
    %3383 = vrot.lane.b32.xlu0 %v2561, 8
    %v3384 = vpop.permute.xlu0 %3383
    %3385 = vrot.lane.b32.xlu0 %v2562, 8
    %v3386 = vpop.permute.xlu0 %3385
    %3389 = vrot.lane.b32.xlu0 %v2895, 16
    %v3390 = vpop.permute.xlu0 %3389
    %3391 = vrot.lane.b32.xlu0 %v2896, 16
    %v3392 = vpop.permute.xlu0 %3391
    %3395 = vrot.lane.b32.xlu0 %v3229, 24
    %v3396 = vpop.permute.xlu0 %3395
    %3397 = vrot.lane.b32.xlu0 %v3230, 24
    %v3398 = vpop.permute.xlu0 %3397
    %v3401 = vsel %vm314, %v2227, %v3384
    %v3402 = vsel %vm314, %v2228, %v3386
    %v3403 = vsel %vm1668, %v3401, %v3390
    %v3404 = vsel %vm1668, %v3402, %v3392
    %v3405 = vsel %vm1671, %v3403, %v3396
    %v3406 = vsel %vm1671, %v3404, %v3398
    %3407 = vst.msk [vmem:[#allocation22] sm:$0xff] %vm227, %v3405
    %3408 = vst.msk [vmem:[#allocation22 + $0x8] sm:$0xff] %vm227, %v3406
    %3411 = vrot.lane.b32.xlu0 %v2636, 8
    %v3412 = vpop.permute.xlu0 %3411
    %3413 = vrot.lane.b32.xlu0 %v2712, 8
    %v3414 = vpop.permute.xlu0 %3413
    %3419 = vrot.lane.b32.xlu0 %v2970, 16
    %v3420 = vpop.permute.xlu0 %3419
    %3421 = vrot.lane.b32.xlu0 %v3046, 16
    %v3422 = vpop.permute.xlu0 %3421
    %3427 = vrot.lane.b32.xlu0 %v3304, 24
    %v3428 = vpop.permute.xlu0 %3427
    %3429 = vrot.lane.b32.xlu0 %v3380, 24
    %v3430 = vpop.permute.xlu0 %3429
    %v3433 = vsel %vm314, %v2302, %v3412
    %v3434 = vsel %vm314, %v2378, %v3414
    %v3435 = vsel %vm1668, %v3433, %v3420
    %v3436 = vsel %vm1668, %v3434, %v3422
    %v3437 = vsel %vm1671, %v3435, %v3428
    %v3438 = vsel %vm1671, %v3436, %v3430
    %v3439 = vld [vmem:[%s16] sm:$0xff]
    %v3440 = vld [vmem:[%s16 + $0x8] sm:$0xff]
    %v3441 = vld [vmem:[%s16 + $0x10] sm:$0xff]
    %v3442 = vld [vmem:[%s16 + $0x18] sm:$0xff]
    %v3443 = vld [vmem:[%s17] sm:$0x1]
    %v3445 = vlaneseq
    %v3446 = vshrl.u32 %v3445, 7
    %v3447 = vsub.s32 0, %v3446
    %v3448 = vrot.slane %v3443, %v3447
    %v3451 = vsel %vm227, %v3437, 0
    %v3454 = vsel %vm227, %v3438, 0
    %3456 = vmatprep.subr.mxu0 0.0
    %3457 = vmatpush1.msra.mxu0 0.0
    %3458 = vmatprep.subr.mxu0 0.0
    %3459 = vmatpush1.msra.mxu0 0.0
    %3460 = vmatprep.subr.mxu0 0.0
    %3461 = vmatpush1.msra.mxu0 0.0
    %3462 = vmatprep.subr.mxu0 0.0
    %3463 = vmatpush1.msra.mxu0 0.0
    %3464 = vmatprep.subr.mxu0 0.0
    %3465 = vmatpush1.msra.mxu0 0.0
    %3466 = vmatprep.subr.mxu0 0.0
    %3467 = vmatpush1.msra.mxu0 0.0
    %3468 = vmatprep.subr.mxu0 0.0
    %3469 = vmatpush1.msra.mxu0 0.0
    %3470 = vmatprep.subr.mxu0 0.0
    %3471 = vmatpush1.msra.mxu0 0.0
    %3472 = vmatprep.subr.mxu0 0.0
    %3473 = vmatpush1.msra.mxu0 0.0
    %3474 = vmatprep.subr.mxu0 0.0
    %3475 = vmatpush1.msra.mxu0 0.0
    %3476 = vmatprep.subr.mxu0 0.0
    %3477 = vmatpush1.msra.mxu0 0.0
    %3478 = vmatprep.subr.mxu0 0.0
    %3479 = vmatpush1.msra.mxu0 0.0
    %3480 = vmatprep.subr.mxu0 0.0
    %3481 = vmatpush1.msra.mxu0 %v3442
    %3482 = vmatprep.subr.mxu0 0.0
    %3483 = vmatpush1.msra.mxu0 %v3441
    %3484 = vmatprep.subr.mxu0 0.0
    %3485 = vmatpush1.msra.mxu0 %v3440
    %3486 = vmatprep.subr.mxu0 0.0
    %3487 = vmatpush1.msra.mxu0 %v3439
    %3488 = vmatprep.subr.mxu0 0.0
    %3489 = vmatpush2.msra.mxu0 0.0
    %3490 = vmatprep.subr.mxu0 0.0
    %3491 = vmatpush2.msra.mxu0 0.0
    %3492 = vmatprep.subr.mxu0 0.0
    %3493 = vmatpush2.msra.mxu0 0.0
    %3494 = vmatprep.subr.mxu0 0.0
    %3495 = vmatpush2.msra.mxu0 0.0
    %3496 = vmatprep.subr.mxu0 0.0
    %3497 = vmatpush2.msra.mxu0 0.0
    %3498 = vmatprep.subr.mxu0 0.0
    %3499 = vmatpush2.msra.mxu0 0.0
    %3500 = vmatprep.subr.mxu0 0.0
    %3501 = vmatpush2.msra.mxu0 0.0
    %3502 = vmatprep.subr.mxu0 0.0
    %3503 = vmatpush2.msra.mxu0 0.0
    %3504 = vmatprep.subr.mxu0 0.0
    %3505 = vmatpush2.msra.mxu0 0.0
    %3506 = vmatprep.subr.mxu0 0.0
    %3507 = vmatpush2.msra.mxu0 0.0
    %3508 = vmatprep.subr.mxu0 0.0
    %3509 = vmatpush2.msra.mxu0 0.0
    %3510 = vmatprep.subr.mxu0 0.0
    %3511 = vmatpush2.msra.mxu0 0.0
    %3512 = vmatprep.subr.mxu0 0.0
    %3513 = vmatpush2.msra.mxu0 0.0
    %3514 = vmatprep.subr.mxu0 0.0
    %3515 = vmatpush2.msra.mxu0 0.0
    %3516 = vmatprep.subr.mxu0 0.0
    %3517 = vmatpush2.msra.mxu0 0.0
    %3518 = vmatprep.subr.mxu0 0.0
    %3519 = vmatpush2.msra.mxu0 0.0
    %3520 = vmatprep.mubr.f32.mxu0 0.0
    %3521 = vmatmul.mubr.f32.gmra.mxu0 %v3451
    %v3522 = vpop.f32.mrf.mxu0
    %v3523 = vadd.f32 %v3448, %v3522
    %v3524 = vpop.f32.mrf.mxu0
    %3525 = vmatprep.mubr.f32.mxu0 0.0
    %3526 = vmatmul.mubr.f32.gmra.mxu0 %v3454
    %v3527 = vpop.f32.mrf.mxu0
    %v3528 = vadd.f32 %v3448, %v3527
    %v3529 = vpop.f32.mrf.mxu0
    %3530 = vdwg.mxu0
    %v3531 = vld [vmem:[#allocation5] sm:$0xff]
    %v3532 = vld [vmem:[#allocation5 + $0x8] sm:$0xff]
    %v3533 = vadd.f32 %v3523, %v3531
    %v3534 = vadd.f32 %v3528, %v3532
    %v3535 = vld [vmem:[%s18] sm:$0x1]
    %v3536 = vld [vmem:[%s19] sm:$0x1]
    %v3537 = vsel %vm227, %v3533, 0.0
    %3538 = vadd.xlane.f32.xlu0 %v3537
    %v3539 = vpop.xlane.xlu0 %3538
    %v3540 = vsel %vm227, %v3534, 0.0
    %3541 = vadd.xlane.f32.xlu0 %v3540
    %v3542 = vpop.xlane.xlu0 %3541
    %v3543 = vmul.f32 %v3539, %v1810
    %v3544 = vmul.f32 %v3542, %v1810
    %v3545 = vsub.f32 %v3533, %v3543
    %v3546 = vsub.f32 %v3534, %v3544
    %v3547 = vmul.f32 %v3545, %v3545
    %v3548 = vmul.f32 %v3546, %v3546
    %v3549 = vsel %vm227, %v3547, 0.0
    %3550 = vadd.xlane.f32.xlu0 %v3549
    %v3551 = vpop.xlane.xlu0 %3550
    %v3552 = vsel %vm227, %v3548, 0.0
    %3553 = vadd.xlane.f32.xlu0 %v3552
    %v3554 = vpop.xlane.xlu0 %3553
    %v3555 = vmul.f32 %v3551, %v1810
    %v3556 = vmul.f32 %v3554, %v1810
    %v3557 = vadd.f32 %v3555, 1e-05
    %v3558 = vadd.f32 %v3556, 1e-05
    %v3559 = vrsqrt.pop %v3557
    %v3560 = vrsqrt.pop %v3558
    %v3561 = vmul.f32 %v3545, %v3559
    %v3562 = vmul.f32 %v3546, %v3560
    %v3564 = vlaneseq
    %v3565 = vshrl.u32 %v3564, 7
    %v3566 = vsub.s32 0, %v3565
    %v3567 = vrot.slane %v3535, %v3566
    %v3569 = vmul.f32 %v3561, %v3567
    %v3570 = vmul.f32 %v3562, %v3567
    %v3572 = vlaneseq
    %v3573 = vshrl.u32 %v3572, 7
    %v3574 = vsub.s32 0, %v3573
    %v3575 = vrot.slane %v3536, %v3574
    %v3577 = vadd.f32 %v3569, %v3575
    %v3578 = vadd.f32 %v3570, %v3575
    %v3579 = vld [vmem:[%s3] sm:$0xff]
    %v3580 = vld [vmem:[%s3 + $0x8] sm:$0xff]
    %3582 = vset.pattern.permute.xlu0 0
    %3583 = vperm.xlu0 %3582, %v3579
    %v3584 = vpop.permute.xlu0 %3583
    %3587 = vset.pattern.permute.xlu0 0
    %3588 = vperm.xlu0 %3587, %v3580
    %v3589 = vpop.permute.xlu0 %3588
    %v3591 = vmul.f32 %v3577, %v3584
    %v3592 = vmul.f32 %v3578, %v3589
    %v3593 = vld [vmem:[#allocation17] sm:$0xff]
    %v3594 = vld [vmem:[#allocation17 + $0x8] sm:$0xff]
    %v3595 = vld [vmem:[#allocation17 + $0x10] sm:$0xff]
    %v3596 = vld [vmem:[#allocation17 + $0x18] sm:$0xff]
    %v3597 = vld [vmem:[%s21] sm:$0x1]
    %v3599 = vlaneseq
    %v3600 = vshrl.u32 %v3599, 7
    %v3601 = vsub.s32 0, %v3600
    %v3602 = vrot.slane %v3597, %v3601
    %v3605 = vsel %vm227, %v3591, 0
    %v3608 = vsel %vm227, %v3592, 0
    %3610 = vmatprep.subr.mxu0 0.0
    %3611 = vmatpush1.msra.mxu0 0.0
    %3612 = vmatprep.subr.mxu0 0.0
    %3613 = vmatpush1.msra.mxu0 0.0
    %3614 = vmatprep.subr.mxu0 0.0
    %3615 = vmatpush1.msra.mxu0 0.0
    %3616 = vmatprep.subr.mxu0 0.0
    %3617 = vmatpush1.msra.mxu0 0.0
    %3618 = vmatprep.subr.mxu0 0.0
    %3619 = vmatpush1.msra.mxu0 0.0
    %3620 = vmatprep.subr.mxu0 0.0
    %3621 = vmatpush1.msra.mxu0 0.0
    %3622 = vmatprep.subr.mxu0 0.0
    %3623 = vmatpush1.msra.mxu0 0.0
    %3624 = vmatprep.subr.mxu0 0.0
    %3625 = vmatpush1.msra.mxu0 0.0
    %3626 = vmatprep.subr.mxu0 0.0
    %3627 = vmatpush1.msra.mxu0 0.0
    %3628 = vmatprep.subr.mxu0 0.0
    %3629 = vmatpush1.msra.mxu0 0.0
    %3630 = vmatprep.subr.mxu0 0.0
    %3631 = vmatpush1.msra.mxu0 0.0
    %3632 = vmatprep.subr.mxu0 0.0
    %3633 = vmatpush1.msra.mxu0 0.0
    %3634 = vmatprep.subr.mxu0 0.0
    %3635 = vmatpush1.msra.mxu0 %v3596
    %3636 = vmatprep.subr.mxu0 0.0
    %3637 = vmatpush1.msra.mxu0 %v3595
    %3638 = vmatprep.subr.mxu0 0.0
    %3639 = vmatpush1.msra.mxu0 %v3594
    %3640 = vmatprep.subr.mxu0 0.0
    %3641 = vmatpush1.msra.mxu0 %v3593
    %3642 = vmatprep.subr.mxu0 0.0
    %3643 = vmatpush2.msra.mxu0 0.0
    %3644 = vmatprep.subr.mxu0 0.0
    %3645 = vmatpush2.msra.mxu0 0.0
    %3646 = vmatprep.subr.mxu0 0.0
    %3647 = vmatpush2.msra.mxu0 0.0
    %3648 = vmatprep.subr.mxu0 0.0
    %3649 = vmatpush2.msra.mxu0 0.0
    %3650 = vmatprep.subr.mxu0 0.0
    %3651 = vmatpush2.msra.mxu0 0.0
    %3652 = vmatprep.subr.mxu0 0.0
    %3653 = vmatpush2.msra.mxu0 0.0
    %3654 = vmatprep.subr.mxu0 0.0
    %3655 = vmatpush2.msra.mxu0 0.0
    %3656 = vmatprep.subr.mxu0 0.0
    %3657 = vmatpush2.msra.mxu0 0.0
    %3658 = vmatprep.subr.mxu0 0.0
    %3659 = vmatpush2.msra.mxu0 0.0
    %3660 = vmatprep.subr.mxu0 0.0
    %3661 = vmatpush2.msra.mxu0 0.0
    %3662 = vmatprep.subr.mxu0 0.0
    %3663 = vmatpush2.msra.mxu0 0.0
    %3664 = vmatprep.subr.mxu0 0.0
    %3665 = vmatpush2.msra.mxu0 0.0
    %3666 = vmatprep.subr.mxu0 0.0
    %3667 = vmatpush2.msra.mxu0 0.0
    %3668 = vmatprep.subr.mxu0 0.0
    %3669 = vmatpush2.msra.mxu0 0.0
    %3670 = vmatprep.subr.mxu0 0.0
    %3671 = vmatpush2.msra.mxu0 0.0
    %3672 = vmatprep.subr.mxu0 0.0
    %3673 = vmatpush2.msra.mxu0 0.0
    %3674 = vmatprep.mubr.f32.mxu0 0.0
    %3675 = vmatmul.mubr.f32.gmra.mxu0 %v3605
    %v3676 = vpop.f32.mrf.mxu0
    %v3677 = vadd.f32 %v3602, %v3676
    %v3678 = vpop.f32.mrf.mxu0
    %3679 = vmatprep.mubr.f32.mxu0 0.0
    %3680 = vmatmul.mubr.f32.gmra.mxu0 %v3608
    %v3681 = vpop.f32.mrf.mxu0
    %v3682 = vadd.f32 %v3602, %v3681
    %v3683 = vpop.f32.mrf.mxu0
    %3684 = vdwg.mxu0
    %v3685 = vmax.f32 %v3677, 0.0
    %v3686 = vmax.f32 %v3682, 0.0
    %v3687 = vld [vmem:[%s22] sm:$0xff]
    %v3688 = vld [vmem:[%s22 + $0x8] sm:$0xff]
    %v3689 = vld [vmem:[%s22 + $0x10] sm:$0xff]
    %v3690 = vld [vmem:[%s22 + $0x18] sm:$0xff]
    %v3691 = vld [vmem:[%s22 + $0x20] sm:$0xff]
    %v3692 = vld [vmem:[%s22 + $0x28] sm:$0xff]
    %v3693 = vld [vmem:[%s22 + $0x30] sm:$0xff]
    %v3694 = vld [vmem:[%s22 + $0x38] sm:$0xff]
    %v3695 = vld [vmem:[%s23] sm:$0x1]
    %v3697 = vlaneseq
    %v3698 = vshrl.u32 %v3697, 7
    %v3699 = vsub.s32 0, %v3698
    %v3700 = vrot.slane %v3695, %v3699
    %vm3702 = vcmask 523264
    %v3704 = vsel %vm3702, %v3685, 0
    %v3707 = vsel %vm3702, %v3686, 0
    %3709 = vmatprep.subr.mxu0 0.0
    %3710 = vmatpush1.msra.mxu0 0.0
    %3711 = vmatprep.subr.mxu0 0.0
    %3712 = vmatpush1.msra.mxu0 0.0
    %3713 = vmatprep.subr.mxu0 0.0
    %3714 = vmatpush1.msra.mxu0 0.0
    %3715 = vmatprep.subr.mxu0 0.0
    %3716 = vmatpush1.msra.mxu0 0.0
    %3717 = vmatprep.subr.mxu0 0.0
    %3718 = vmatpush1.msra.mxu0 0.0
    %3719 = vmatprep.subr.mxu0 0.0
    %3720 = vmatpush1.msra.mxu0 0.0
    %3721 = vmatprep.subr.mxu0 0.0
    %3722 = vmatpush1.msra.mxu0 0.0
    %3723 = vmatprep.subr.mxu0 0.0
    %3724 = vmatpush1.msra.mxu0 0.0
    %3725 = vmatprep.subr.mxu0 0.0
    %3726 = vmatpush1.msra.mxu0 %v3694
    %3727 = vmatprep.subr.mxu0 0.0
    %3728 = vmatpush1.msra.mxu0 %v3693
    %3729 = vmatprep.subr.mxu0 0.0
    %3730 = vmatpush1.msra.mxu0 %v3692
    %3731 = vmatprep.subr.mxu0 0.0
    %3732 = vmatpush1.msra.mxu0 %v3691
    %3733 = vmatprep.subr.mxu0 0.0
    %3734 = vmatpush1.msra.mxu0 %v3690
    %3735 = vmatprep.subr.mxu0 0.0
    %3736 = vmatpush1.msra.mxu0 %v3689
    %3737 = vmatprep.subr.mxu0 0.0
    %3738 = vmatpush1.msra.mxu0 %v3688
    %3739 = vmatprep.subr.mxu0 0.0
    %3740 = vmatpush1.msra.mxu0 %v3687
    %3741 = vmatprep.subr.mxu0 0.0
    %3742 = vmatpush2.msra.mxu0 0.0
    %3743 = vmatprep.subr.mxu0 0.0
    %3744 = vmatpush2.msra.mxu0 0.0
    %3745 = vmatprep.subr.mxu0 0.0
    %3746 = vmatpush2.msra.mxu0 0.0
    %3747 = vmatprep.subr.mxu0 0.0
    %3748 = vmatpush2.msra.mxu0 0.0
    %3749 = vmatprep.subr.mxu0 0.0
    %3750 = vmatpush2.msra.mxu0 0.0
    %3751 = vmatprep.subr.mxu0 0.0
    %3752 = vmatpush2.msra.mxu0 0.0
    %3753 = vmatprep.subr.mxu0 0.0
    %3754 = vmatpush2.msra.mxu0 0.0
    %3755 = vmatprep.subr.mxu0 0.0
    %3756 = vmatpush2.msra.mxu0 0.0
    %3757 = vmatprep.subr.mxu0 0.0
    %3758 = vmatpush2.msra.mxu0 0.0
    %3759 = vmatprep.subr.mxu0 0.0
    %3760 = vmatpush2.msra.mxu0 0.0
    %3761 = vmatprep.subr.mxu0 0.0
    %3762 = vmatpush2.msra.mxu0 0.0
    %3763 = vmatprep.subr.mxu0 0.0
    %3764 = vmatpush2.msra.mxu0 0.0
    %3765 = vmatprep.subr.mxu0 0.0
    %3766 = vmatpush2.msra.mxu0 0.0
    %3767 = vmatprep.subr.mxu0 0.0
    %3768 = vmatpush2.msra.mxu0 0.0
    %3769 = vmatprep.subr.mxu0 0.0
    %3770 = vmatpush2.msra.mxu0 0.0
    %3771 = vmatprep.subr.mxu0 0.0
    %3772 = vmatpush2.msra.mxu0 0.0
    %3773 = vmatprep.mubr.f32.mxu0 0.0
    %3774 = vmatmul.mubr.f32.gmra.mxu0 %v3704
    %v3775 = vpop.f32.mrf.mxu0
    %v3776 = vadd.f32 %v3700, %v3775
    %v3777 = vpop.f32.mrf.mxu0
    %3778 = vmatprep.mubr.f32.mxu0 0.0
    %3779 = vmatmul.mubr.f32.gmra.mxu0 %v3707
    %v3780 = vpop.f32.mrf.mxu0
    %v3781 = vadd.f32 %v3700, %v3780
    %v3782 = vpop.f32.mrf.mxu0
    %3783 = vdwg.mxu0
    %v3784 = vadd.f32 %v3776, %v3591
    %v3785 = vadd.f32 %v3781, %v3592
    %v3786 = vld [vmem:[%s24] sm:$0x1]
    %v3787 = vld [vmem:[%s25] sm:$0x1]
    %v3788 = vsel %vm227, %v3784, 0.0
    %3789 = vadd.xlane.f32.xlu0 %v3788
    %v3790 = vpop.xlane.xlu0 %3789
    %v3791 = vsel %vm227, %v3785, 0.0
    %3792 = vadd.xlane.f32.xlu0 %v3791
    %v3793 = vpop.xlane.xlu0 %3792
    %v3794 = vmul.f32 %v3790, %v1810
    %v3795 = vmul.f32 %v3793, %v1810
    %v3796 = vsub.f32 %v3784, %v3794
    %v3797 = vsub.f32 %v3785, %v3795
    %v3798 = vmul.f32 %v3796, %v3796
    %v3799 = vmul.f32 %v3797, %v3797
    %v3800 = vsel %vm227, %v3798, 0.0
    %3801 = vadd.xlane.f32.xlu0 %v3800
    %v3802 = vpop.xlane.xlu0 %3801
    %v3803 = vsel %vm227, %v3799, 0.0
    %3804 = vadd.xlane.f32.xlu0 %v3803
    %v3805 = vpop.xlane.xlu0 %3804
    %v3806 = vmul.f32 %v3802, %v1810
    %v3807 = vmul.f32 %v3805, %v1810
    %v3808 = vadd.f32 %v3806, 1e-05
    %v3809 = vadd.f32 %v3807, 1e-05
    %v3810 = vrsqrt.pop %v3808
    %v3811 = vrsqrt.pop %v3809
    %v3812 = vmul.f32 %v3796, %v3810
    %v3813 = vmul.f32 %v3797, %v3811
    %v3815 = vlaneseq
    %v3816 = vshrl.u32 %v3815, 7
    %v3817 = vsub.s32 0, %v3816
    %v3818 = vrot.slane %v3786, %v3817
    %v3820 = vmul.f32 %v3812, %v3818
    %v3821 = vmul.f32 %v3813, %v3818
    %v3823 = vlaneseq
    %v3824 = vshrl.u32 %v3823, 7
    %v3825 = vsub.s32 0, %v3824
    %v3826 = vrot.slane %v3787, %v3825
    %v3828 = vadd.f32 %v3820, %v3826
    %v3829 = vadd.f32 %v3821, %v3826
    %v3830 = vmul.f32 %v3828, %v3584
    %v3831 = vmul.f32 %v3829, %v3589
    %3832 = vst.msk [vmem:[#allocation19] sm:$0xff] %vm227, %v3830
    %3833 = vst.msk [vmem:[#allocation19 + $0x8] sm:$0xff] %vm227, %v3831
    // Predicated region
    $region146: #{tpu_custom_call.1} parent=1 // pred_check
      _
    $region147: #{tpu_custom_call.1} parent=1 // pred_check_branch
      %3835 = sbr.rel (0) target = $region149
    $region148: #{tpu_custom_call.1} parent=1 // pred_region
      %s3837 = ssub.s32 256, 256
      %3838 = vsyncadd [#allocation4], %s3837
      %s3839 = sshll.u32 [#allocation19], 4
      %s3840 = int_to_ptr.vmem [resolvable:$true] %s3839
      %3845 = dma.vmem_to_hbm [thread:$0]  %s3840, 256, %s26, [#allocation4], 128, 128, 8
    $region149: #{tpu_custom_call.1} parent=1 // pred_fallthru
      _
    // Predicated region
    $region150: #{tpu_custom_call.1} parent=1 // pred_check
      _
    $region151: #{tpu_custom_call.1} parent=1 // pred_check_branch
      %3847 = sbr.rel (0) target = $region153
    $region152: #{tpu_custom_call.1} parent=1 // pred_region
      %s3849 = ssub.s32 256, 256
      %3850 = vsyncadd [#allocation21], %s3849
      %s3851 = sshll.u32 [#allocation20], 4
      %s3852 = int_to_ptr.vmem [resolvable:$true] %s3851
      %3857 = dma.vmem_to_hbm [thread:$0]  %s3852, 256, %s27, [#allocation21], 128, 128, 8
    $region153: #{tpu_custom_call.1} parent=1 // pred_fallthru
      _
    // Predicated region
    $region154: #{tpu_custom_call.1} parent=1 // pred_check
      _
    $region155: #{tpu_custom_call.1} parent=1 // pred_check_branch
      %3859 = sbr.rel (0) target = $region157
    $region156: #{tpu_custom_call.1} parent=1 // pred_region
      %s3861 = ssub.s32 256, 256
      %3862 = vsyncadd [#allocation21], %s3861
      %s3863 = sshll.u32 [#allocation22], 4
      %s3864 = int_to_ptr.vmem [resolvable:$true] %s3863
      %3869 = dma.vmem_to_hbm [thread:$0]  %s3864, 256, %s28, [#allocation21], 128, 128, 8
    $region157: #{tpu_custom_call.1} parent=1 // pred_fallthru
      _
    // Predicated region
    $region158: #{tpu_custom_call.1} parent=1 // pred_check
      _
    $region159: #{tpu_custom_call.1} parent=1 // pred_check_branch
      %3871 = sbr.rel (0) target = $region161
    $region160: #{tpu_custom_call.1} parent=1 // pred_region
      %3872 = dma.done [#allocation4], 256
    $region161: #{tpu_custom_call.1} parent=1 // pred_fallthru
      _
    // Predicated region
    $region162: #{tpu_custom_call.1} parent=1 // pred_check
      _
    $region163: #{tpu_custom_call.1} parent=1 // pred_check_branch
      %3874 = sbr.rel (0) target = $region165
    $region164: #{tpu_custom_call.1} parent=1 // pred_region
      %3875 = dma.done [#allocation21], 256
    $region165: #{tpu_custom_call.1} parent=1 // pred_fallthru
      _
    // Predicated region
    $region166: #{tpu_custom_call.1} parent=1 // pred_check
      _
    $region167: #{tpu_custom_call.1} parent=1 // pred_check_branch
      %3877 = sbr.rel (0) target = $region169
    $region168: #{tpu_custom_call.1} parent=1 // pred_region
      %3878 = dma.done [#allocation21], 256
    $region169: #{tpu_custom_call.1} parent=1 // pred_fallthru
      _
    %3879 = vsyncpa [#allocation3], 1
    %3880 = vsyncpa [#allocation6], 1
    %3881 = vsyncpa [#allocation9], 1
    %3882 = vsyncpa [#allocation12], 1
    %3883 = vsyncpa [#allocation15], 1
    %3884 = vsyncpa [#allocation18], 1
    %3885 = vsyncpa [#allocation4], 1
    %3886 = vsyncpa [#allocation21], 1

</llo_original>
